<compile_context>
chip_gen: v5e
topology: v5e:2x2
jax: 0.10.0
libtpu: 0.0.40
codegen_flags: <defaults>
</compile_context>

<pallas_src>
import functools

import jax
import jax.numpy as jnp
from jax import lax
from jax.experimental import pallas as pl
from jax.experimental.pallas import tpu as pltpu


def _round_up(x, m):
    return (x + m - 1) // m * m


# ----------------------------- fused Pallas kernel -----------------------------

def _make_fused_kernel(B, HW, hidden, CB, A_pad, n_chunks):
    """Build the fused conv + policy/value-heads kernel (sizes are Python constants)."""

    def kernel(pT_ref, wc_ref, bc_ref, r_ref, bp_ref, wv_ref, bv_ref,
               pol_ref, val_ref, l_ref):
        g = pl.program_id(0)

        @pl.when(g == 0)
        def _init():
            # ---- conv as a matmul: (hidden, Kp) @ (Kp, B*HW) -> (hidden, B*HW), f32 acc
            acc = jnp.dot(wc_ref[...], pT_ref[...],
                          preferred_element_type=jnp.float32)
            acc = jnp.maximum(acc + bc_ref[...], 0.0)            # bias + ReLU (f32)
            conv_bf = acc.astype(jnp.bfloat16)                   # autocast-internal bf16

            # ---- regroup the conv activation into per-channel-chunk tiles (VMEM only):
            #      l_ref[gc, b*CB + c, hw] = conv_bf[gc*CB + c, b*HW + hw]
            for gc in range(n_chunks):
                for b in range(B):
                    l_ref[gc, b * CB:(b + 1) * CB, :] = (
                        conv_bf[gc * CB:(gc + 1) * CB, b * HW:(b + 1) * HW])

            # ---- value head (tiny): value[b] = tanh(sum_{c,hw} feat * wv + bv), VPU only
            wv = wv_ref[...].astype(jnp.float32)                 # (hidden, HW)
            for b in range(B):
                prod = conv_bf[:, b * HW:(b + 1) * HW].astype(jnp.float32) * wv
                s = jnp.sum(prod, axis=1, keepdims=True)         # (hidden, 1)
                s = jnp.sum(s, axis=0, keepdims=True)            # (1, 1)
                val_ref[b:b + 1, :] = jnp.tanh(s + bv_ref[...])

            # ---- init policy accumulator (kept in the resident f32 output ref) with bias
            pol_ref[...] = jnp.zeros((B, A_pad), jnp.float32) + bp_ref[...]

        # ---- policy, channel chunk g of the flattened-feature contraction:
        # m[b*CB + c, c'*A_pad + a] = sum_hw conv[b, g*CB+c, hw] * Wp[(g*CB+c')*HW + hw, a]
        # Wanted terms are the block diagonal (c == c'); the extra columns are free on the
        # MXU (same weight stream, M = B*CB << 256 rows).
        m = jnp.dot(l_ref[g], r_ref[...], preferred_element_type=jnp.float32)

        rows = []
        for b in range(B):
            # static, lane-aligned (1, A_pad) diagonal pieces; balanced pairwise tree-sum
            pieces = [m[b * CB + c:b * CB + c + 1, c * A_pad:(c + 1) * A_pad]
                      for c in range(CB)]
            while len(pieces) > 1:
                nxt = [pieces[i] + pieces[i + 1] for i in range(0, len(pieces) - 1, 2)]
                if len(pieces) % 2:
                    nxt.append(pieces[-1])
                pieces = nxt
            rows.append(pieces[0])
        contrib = jnp.concatenate(rows, axis=0) if B > 1 else rows[0]   # (B, A_pad)
        pol_ref[...] = pol_ref[...] + contrib

    return kernel


# ----------------------------- parameter preparation -----------------------------

def prepare_params(params):
    """One-time re-layout of PyTorch-convention parameters for the fused kernel
    (run once, outside the jit hot path)."""
    hidden, C = params["w_conv"].shape[0], params["w_conv"].shape[1]
    F, A = params["w_pol"].shape
    HW = F // hidden
    A_pad = _round_up(A, 128)
    Kp = _round_up(C * 9, 128)

    # conv weight: (hidden, C, 3, 3) -> (hidden, C*9) -> zero-pad K to Kp, bf16
    wc = params["w_conv"].reshape(hidden, C * 9)
    wc = jnp.pad(wc, ((0, 0), (0, Kp - C * 9))).astype(jnp.bfloat16)
    bc = params["b_conv"].reshape(hidden, 1).astype(jnp.float32)

    # policy weight: rows in PyTorch (c, h, w) order -> R[hw, c*A_pad + a]
    wp = jnp.pad(params["w_pol"], ((0, 0), (0, A_pad - A)))                  # (F, A_pad)
    r_pol = (wp.reshape(hidden, HW, A_pad)
               .transpose(1, 0, 2)
               .reshape(HW, hidden * A_pad)).astype(jnp.bfloat16)
    bp = jnp.pad(params["b_pol"], (0, A_pad - A)).reshape(1, A_pad).astype(jnp.float32)

    # value weight: rows in (c, h, w) order -> (hidden, HW)
    wv = params["w_val"].reshape(hidden, HW).astype(jnp.bfloat16)
    bv = params["b_val"].reshape(1, 1).astype(jnp.float32)

    return {"wc": wc, "bc": bc, "r_pol": r_pol, "bp": bp, "wv": wv, "bv": bv}


# ----------------------------- forward pass -----------------------------

def _im2col_T(x):
    """(B, C, H, W) -> (C*9, B*H*W); rows ordered (c, kh, kw), cols ordered (b, h, w)."""
    B, C, H, W = x.shape
    xp = jnp.pad(x, ((0, 0), (0, 0), (1, 1), (1, 1)))
    taps = [xp[:, :, i:i + H, j:j + W] for i in range(3) for j in range(3)]
    p = jnp.stack(taps, axis=2)                    # (B, C, 9, H, W)
    p = p.reshape(B, C * 9, H * W)                 # (B, C*9, HW)
    return p.transpose(1, 0, 2).reshape(C * 9, B * H * W)


@functools.partial(jax.jit, static_argnames=("num_actions",))
def mixed_precision_forward(x_nchw, prep, num_actions):
    """Forward of MixedPrecisionWrapper(base_model). Returns (policy_f32, value_f32)."""
    B, C, H, W = x_nchw.shape
    HW = H * W
    hidden, Kp = prep["wc"].shape
    A_pad = prep["bp"].shape[1]
    CB = 16 if hidden % 16 == 0 else hidden        # channel-chunk size (bf16 sublane aligned)
    n_chunks = hidden // CB

    # autocast: im2col patches cast to bf16; K padded to a lane multiple.
    patches = _im2col_T(x_nchw)
    patches = jnp.pad(patches, ((0, Kp - C * 9), (0, 0))).astype(jnp.bfloat16)  # (Kp, B*HW)

    kernel = _make_fused_kernel(B, HW, hidden, CB, A_pad, n_chunks)

    pol, val = pl.pallas_call(
        kernel,
        out_shape=(jax.ShapeDtypeStruct((B, A_pad), jnp.float32),
                   jax.ShapeDtypeStruct((B, 1), jnp.float32)),
        grid_spec=pltpu.PrefetchScalarGridSpec(
            num_scalar_prefetch=0,
            grid=(n_chunks,),
            in_specs=[
                pl.BlockSpec((Kp, B * HW), lambda g: (0, 0)),        # im2col patches (resident)
                pl.BlockSpec((hidden, Kp), lambda g: (0, 0)),        # conv weight
                pl.BlockSpec((hidden, 1), lambda g: (0, 0)),         # conv bias
                pl.BlockSpec((HW, CB * A_pad), lambda g: (0, g)),    # policy weight chunk (streamed)
                pl.BlockSpec((1, A_pad), lambda g: (0, 0)),          # policy bias
                pl.BlockSpec((hidden, HW), lambda g: (0, 0)),        # value weight
                pl.BlockSpec((1, 1), lambda g: (0, 0)),              # value bias
            ],
            out_specs=[
                pl.BlockSpec((B, A_pad), lambda g: (0, 0)),          # policy (f32 accumulator)
                pl.BlockSpec((B, 1), lambda g: (0, 0)),              # value
            ],
            scratch_shapes=[
                pltpu.VMEM((n_chunks, B * CB, HW), jnp.bfloat16),    # conv activation tiles
            ],
        ),
        compiler_params=pltpu.CompilerParams(
            dimension_semantics=("arbitrary",)),
    )(patches, prep["wc"], prep["bc"], prep["r_pol"], prep["bp"],
      prep["wv"], prep["bv"])

    return pol[:, :num_actions], val


# ----------------------------- reference + init -----------------------------

def reference_forward(x, params):
    """Pure-JAX f32 reference of the wrapped base model (for validation)."""
    y = lax.conv_general_dilated(
        x, params["w_conv"], window_strides=(1, 1), padding="SAME",
        dimension_numbers=("NCHW", "OIHW", "NCHW"))
    y = jnp.maximum(y + params["b_conv"][None, :, None, None], 0.0)
    feat = y.reshape(y.shape[0], -1)                               # PyTorch flatten (c, h, w)
    pol = feat @ params["w_pol"] + params["b_pol"]
    val = jnp.tanh(feat @ params["w_val"] + params["b_val"])
    return pol, val


def init_params(key, c_in, hidden, h, w, num_actions):
    k1, k2, k3 = jax.random.split(key, 3)
    F = hidden * h * w
    return {
        "w_conv": 0.05 * jax.random.normal(k1, (hidden, c_in, 3, 3), jnp.float32),
        "b_conv": jnp.zeros((hidden,), jnp.float32),
        "w_pol": 0.02 * jax.random.normal(k2, (F, num_actions), jnp.float32),
        "b_pol": jnp.zeros((num_actions,), jnp.float32),
        "w_val": 0.02 * jax.random.normal(k3, (F, 1), jnp.float32),
        "b_val": jnp.zeros((1,), jnp.float32),
    }


if __name__ == "__main__":
    B, C, H, W = 2, 4, 16, 16          # NCHW, like PyTorch
    HIDDEN = 32
    NUM_ACTIONS = H * W                # 256 actions (board squares)

    key = jax.random.PRNGKey(0)
    kx, kp = jax.random.split(key)
    x = jax.random.normal(kx, (B, C, H, W), jnp.float32)
    params = init_params(kp, C, HIDDEN, H, W, NUM_ACTIONS)

    prep = prepare_params(params)      # one-time weight re-layout, outside the jit hot path
    policy, value = mixed_precision_forward(x, prep, num_actions=NUM_ACTIONS)
    jax.block_until_ready((policy, value))

    assert policy.shape == (B, NUM_ACTIONS) and policy.dtype == jnp.float32
    assert value.shape == (B, 1) and value.dtype == jnp.float32

    # numerical check vs. f32 reference (loose tolerance: bf16 autocast internals)
    ref_p, ref_v = reference_forward(x, params)
    p_err = float(jnp.max(jnp.abs(policy - ref_p)))
    v_err = float(jnp.max(jnp.abs(value - ref_v)))
    assert p_err < 5e-2 and v_err < 5e-2, (p_err, v_err)

    print("KERNEL_OK")
</pallas_src>

<mosaic_0001>
module attributes {stable_mosaic.version = 11 : i64} {
  func.func @kernel(%arg0: i32, %arg1: memref<128x512xbf16, #tpu.memory_space<vmem>>, %arg2: memref<32x128xbf16, #tpu.memory_space<vmem>>, %arg3: memref<32x1xf32, #tpu.memory_space<vmem>>, %arg4: memref<256x4096xbf16, #tpu.memory_space<vmem>>, %arg5: memref<1x256xf32, #tpu.memory_space<vmem>>, %arg6: memref<32x256xbf16, #tpu.memory_space<vmem>>, %arg7: memref<1x1xf32, #tpu.memory_space<vmem>>, %arg8: memref<2x256xf32, #tpu.memory_space<vmem>>, %arg9: memref<2x1xf32, #tpu.memory_space<vmem>>, %arg10: memref<2x32x256xbf16, #tpu.memory_space<vmem>>) attributes {dimension_semantics = [#tpu.dimension_semantics<arbitrary>], iteration_bounds = array<i64: 2>, scalar_prefetch = 0 : i64, scratch_operands = 1 : i64, tpu.core_type = #tpu.core_type<tc>, window_params = [{pipeline_mode = #tpu.pipeline_mode<synchronous>, transform_indices = @transform_0, window_bounds = array<i64: 128, 512>}, {pipeline_mode = #tpu.pipeline_mode<synchronous>, transform_indices = @transform_1, window_bounds = array<i64: 32, 128>}, {pipeline_mode = #tpu.pipeline_mode<synchronous>, transform_indices = @transform_2, window_bounds = array<i64: 32, 1>}, {transform_indices = @transform_3, window_bounds = array<i64: 256, 4096>}, {pipeline_mode = #tpu.pipeline_mode<synchronous>, transform_indices = @transform_4, window_bounds = array<i64: 1, 256>}, {pipeline_mode = #tpu.pipeline_mode<synchronous>, transform_indices = @transform_5, window_bounds = array<i64: 32, 256>}, {pipeline_mode = #tpu.pipeline_mode<synchronous>, transform_indices = @transform_6, window_bounds = array<i64: 1, 1>}, {pipeline_mode = #tpu.pipeline_mode<synchronous>, transform_indices = @transform_7, window_bounds = array<i64: 2, 256>}, {pipeline_mode = #tpu.pipeline_mode<synchronous>, transform_indices = @transform_8, window_bounds = array<i64: 2, 1>}]} {
    %c0_i32 = arith.constant 0 : i32
    %0 = arith.cmpi eq, %arg0, %c0_i32 : i32
    %1 = arith.extui %0 : i1 to i32
    %c0_i32_0 = arith.constant 0 : i32
    %2 = arith.cmpi ne, %1, %c0_i32_0 : i32
    scf.if %2 {
      %c0_8 = arith.constant 0 : index
      %c0_9 = arith.constant 0 : index
      %74 = vector.load %arg2[%c0_8, %c0_9] : memref<32x128xbf16, #tpu.memory_space<vmem>>, vector<32x128xbf16>
      %c0_10 = arith.constant 0 : index
      %c0_11 = arith.constant 0 : index
      %75 = vector.load %arg1[%c0_10, %c0_11] : memref<128x512xbf16, #tpu.memory_space<vmem>>, vector<128x512xbf16>
      %cst_12 = arith.constant dense<0.000000e+00> : vector<32x512xf32>
      %76 = tpu.matmul %74, %75, %cst_12 {dimension_numbers = #tpu.dot_dimension_numbers<[1], [0], [0], [1], [0, 0, 1, 1], [], []>} : vector<32x128xbf16>, vector<128x512xbf16>, vector<32x512xf32> -> vector<32x512xf32>
      %c0_13 = arith.constant 0 : index
      %c0_14 = arith.constant 0 : index
      %77 = vector.load %arg3[%c0_13, %c0_14] : memref<32x1xf32, #tpu.memory_space<vmem>>, vector<32x1xf32>
      %78 = vector.broadcast %77 : vector<32x1xf32> to vector<32x512xf32>
      %79 = arith.addf %76, %78 : vector<32x512xf32>
      %cst_15 = arith.constant 0.000000e+00 : f32
      %80 = vector.broadcast %cst_15 : f32 to vector<32x512xf32>
      %81 = arith.maximumf %79, %80 : vector<32x512xf32>
      %82 = arith.truncf %81 : vector<32x512xf32> to vector<32x512xbf16>
      %83 = vector.extract_strided_slice %82 {offsets = [0, 0], sizes = [16, 256], strides = [1, 1]} : vector<32x512xbf16> to vector<16x256xbf16>
      %c0_16 = arith.constant 0 : index
      %c0_17 = arith.constant 0 : index
      %c0_18 = arith.constant 0 : index
      %84 = vector.load %arg10[%c0_16, %c0_17, %c0_18] : memref<2x32x256xbf16, #tpu.memory_space<vmem>>, vector<1x16x256xbf16>
      %85 = vector.shape_cast %84 : vector<1x16x256xbf16> to vector<16x256xbf16>
      %86 = vector.shape_cast %83 : vector<16x256xbf16> to vector<1x16x256xbf16>
      tpu.vector_store %arg10[%c0_16, %c0_17, %c0_18], %86 {strides = array<i32>} : memref<2x32x256xbf16, #tpu.memory_space<vmem>>, vector<1x16x256xbf16>,
      %87 = vector.extract_strided_slice %82 {offsets = [0, 256], sizes = [16, 256], strides = [1, 1]} : vector<32x512xbf16> to vector<16x256xbf16>
      %c0_19 = arith.constant 0 : index
      %c16 = arith.constant 16 : index
      %c0_20 = arith.constant 0 : index
      %88 = vector.load %arg10[%c0_19, %c16, %c0_20] : memref<2x32x256xbf16, #tpu.memory_space<vmem>>, vector<1x16x256xbf16>
      %89 = vector.shape_cast %88 : vector<1x16x256xbf16> to vector<16x256xbf16>
      %90 = vector.shape_cast %87 : vector<16x256xbf16> to vector<1x16x256xbf16>
      tpu.vector_store %arg10[%c0_19, %c16, %c0_20], %90 {strides = array<i32>} : memref<2x32x256xbf16, #tpu.memory_space<vmem>>, vector<1x16x256xbf16>,
      %91 = vector.extract_strided_slice %82 {offsets = [16, 0], sizes = [16, 256], strides = [1, 1]} : vector<32x512xbf16> to vector<16x256xbf16>
      %c1 = arith.constant 1 : index
      %c0_21 = arith.constant 0 : index
      %c0_22 = arith.constant 0 : index
      %92 = vector.load %arg10[%c1, %c0_21, %c0_22] : memref<2x32x256xbf16, #tpu.memory_space<vmem>>, vector<1x16x256xbf16>
      %93 = vector.shape_cast %92 : vector<1x16x256xbf16> to vector<16x256xbf16>
      %94 = vector.shape_cast %91 : vector<16x256xbf16> to vector<1x16x256xbf16>
      tpu.vector_store %arg10[%c1, %c0_21, %c0_22], %94 {strides = array<i32>} : memref<2x32x256xbf16, #tpu.memory_space<vmem>>, vector<1x16x256xbf16>,
      %95 = vector.extract_strided_slice %82 {offsets = [16, 256], sizes = [16, 256], strides = [1, 1]} : vector<32x512xbf16> to vector<16x256xbf16>
      %c1_23 = arith.constant 1 : index
      %c16_24 = arith.constant 16 : index
      %c0_25 = arith.constant 0 : index
      %96 = vector.load %arg10[%c1_23, %c16_24, %c0_25] : memref<2x32x256xbf16, #tpu.memory_space<vmem>>, vector<1x16x256xbf16>
      %97 = vector.shape_cast %96 : vector<1x16x256xbf16> to vector<16x256xbf16>
      %98 = vector.shape_cast %95 : vector<16x256xbf16> to vector<1x16x256xbf16>
      tpu.vector_store %arg10[%c1_23, %c16_24, %c0_25], %98 {strides = array<i32>} : memref<2x32x256xbf16, #tpu.memory_space<vmem>>, vector<1x16x256xbf16>,
      %c0_26 = arith.constant 0 : index
      %c0_27 = arith.constant 0 : index
      %99 = vector.load %arg6[%c0_26, %c0_27] : memref<32x256xbf16, #tpu.memory_space<vmem>>, vector<32x256xbf16>
      %100 = arith.extf %99 : vector<32x256xbf16> to vector<32x256xf32>
      %101 = vector.extract_strided_slice %82 {offsets = [0, 0], sizes = [32, 256], strides = [1, 1]} : vector<32x512xbf16> to vector<32x256xbf16>
      %102 = arith.extf %101 : vector<32x256xbf16> to vector<32x256xf32>
      %103 = arith.mulf %102, %100 : vector<32x256xf32>
      %cst_28 = arith.constant dense<0.000000e+00> : vector<32xf32>
      %104 = vector.multi_reduction <add>, %103, %cst_28 [1] : vector<32x256xf32> to vector<32xf32>
      %105 = vector.shape_cast %104 : vector<32xf32> to vector<32x1xf32>
      %cst_29 = arith.constant dense<0.000000e+00> : vector<1xf32>
      %106 = vector.multi_reduction <add>, %105, %cst_29 [0] : vector<32x1xf32> to vector<1xf32>
      %107 = vector.shape_cast %106 : vector<1xf32> to vector<1x1xf32>
      %c0_30 = arith.constant 0 : index
      %c0_31 = arith.constant 0 : index
      %108 = vector.load %arg7[%c0_30, %c0_31] : memref<1x1xf32, #tpu.memory_space<vmem>>, vector<1x1xf32>
      %109 = arith.addf %107, %108 : vector<1x1xf32>
      %110 = math.tanh %109 : vector<1x1xf32>
      %c0_32 = arith.constant 0 : index
      %c0_33 = arith.constant 0 : index
      %111 = vector.load %arg9[%c0_32, %c0_33] : memref<2x1xf32, #tpu.memory_space<vmem>>, vector<1x1xf32>
      tpu.vector_store %arg9[%c0_32, %c0_33], %110 {strides = array<i32>} : memref<2x1xf32, #tpu.memory_space<vmem>>, vector<1x1xf32>,
      %112 = vector.extract_strided_slice %82 {offsets = [0, 256], sizes = [32, 256], strides = [1, 1]} : vector<32x512xbf16> to vector<32x256xbf16>
      %113 = arith.extf %112 : vector<32x256xbf16> to vector<32x256xf32>
      %114 = arith.mulf %113, %100 : vector<32x256xf32>
      %cst_34 = arith.constant dense<0.000000e+00> : vector<32xf32>
      %115 = vector.multi_reduction <add>, %114, %cst_34 [1] : vector<32x256xf32> to vector<32xf32>
      %116 = vector.shape_cast %115 : vector<32xf32> to vector<32x1xf32>
      %cst_35 = arith.constant dense<0.000000e+00> : vector<1xf32>
      %117 = vector.multi_reduction <add>, %116, %cst_35 [0] : vector<32x1xf32> to vector<1xf32>
      %118 = vector.shape_cast %117 : vector<1xf32> to vector<1x1xf32>
      %c0_36 = arith.constant 0 : index
      %c0_37 = arith.constant 0 : index
      %119 = vector.load %arg7[%c0_36, %c0_37] : memref<1x1xf32, #tpu.memory_space<vmem>>, vector<1x1xf32>
      %120 = arith.addf %118, %119 : vector<1x1xf32>
      %121 = math.tanh %120 : vector<1x1xf32>
      %c1_38 = arith.constant 1 : index
      %c0_39 = arith.constant 0 : index
      %122 = vector.load %arg9[%c1_38, %c0_39] : memref<2x1xf32, #tpu.memory_space<vmem>>, vector<1x1xf32>
      tpu.vector_store %arg9[%c1_38, %c0_39], %121 {strides = array<i32>} : memref<2x1xf32, #tpu.memory_space<vmem>>, vector<1x1xf32>,
      %cst_40 = arith.constant 0.000000e+00 : f32
      %123 = vector.broadcast %cst_40 : f32 to vector<2x256xf32>
      %c0_41 = arith.constant 0 : index
      %c0_42 = arith.constant 0 : index
      %124 = vector.load %arg5[%c0_41, %c0_42] : memref<1x256xf32, #tpu.memory_space<vmem>>, vector<1x256xf32>
      %125 = vector.broadcast %124 : vector<1x256xf32> to vector<2x256xf32>
      %126 = arith.addf %123, %125 : vector<2x256xf32>
      %c0_43 = arith.constant 0 : index
      %c0_44 = arith.constant 0 : index
      %127 = vector.load %arg8[%c0_43, %c0_44] : memref<2x256xf32, #tpu.memory_space<vmem>>, vector<2x256xf32>
      tpu.vector_store %arg8[%c0_43, %c0_44], %126 {strides = array<i32>} : memref<2x256xf32, #tpu.memory_space<vmem>>, vector<2x256xf32>,
    } else {
    }
    %3 = arith.index_cast %arg0 : i32 to index
    %c0 = arith.constant 0 : index
    %c0_1 = arith.constant 0 : index
    %4 = vector.load %arg10[%3, %c0, %c0_1] : memref<2x32x256xbf16, #tpu.memory_space<vmem>>, vector<1x32x256xbf16>
    %5 = vector.shape_cast %4 : vector<1x32x256xbf16> to vector<32x256xbf16>
    %c0_2 = arith.constant 0 : index
    %c0_3 = arith.constant 0 : index
    %6 = vector.load %arg4[%c0_2, %c0_3] : memref<256x4096xbf16, #tpu.memory_space<vmem>>, vector<256x4096xbf16>
    %cst = arith.constant dense<0.000000e+00> : vector<32x4096xf32>
    %7 = tpu.matmul %5, %6, %cst {dimension_numbers = #tpu.dot_dimension_numbers<[1], [0], [0], [1], [0, 0, 1, 1], [], []>} : vector<32x256xbf16>, vector<256x4096xbf16>, vector<32x4096xf32> -> vector<32x4096xf32>
    %8 = vector.extract_strided_slice %7 {offsets = [0, 0], sizes = [1, 256], strides = [1, 1]} : vector<32x4096xf32> to vector<1x256xf32>
    %9 = vector.extract_strided_slice %7 {offsets = [1, 256], sizes = [1, 256], strides = [1, 1]} : vector<32x4096xf32> to vector<1x256xf32>
    %10 = vector.extract_strided_slice %7 {offsets = [2, 512], sizes = [1, 256], strides = [1, 1]} : vector<32x4096xf32> to vector<1x256xf32>
    %11 = vector.extract_strided_slice %7 {offsets = [3, 768], sizes = [1, 256], strides = [1, 1]} : vector<32x4096xf32> to vector<1x256xf32>
    %12 = vector.extract_strided_slice %7 {offsets = [4, 1024], sizes = [1, 256], strides = [1, 1]} : vector<32x4096xf32> to vector<1x256xf32>
    %13 = vector.extract_strided_slice %7 {offsets = [5, 1280], sizes = [1, 256], strides = [1, 1]} : vector<32x4096xf32> to vector<1x256xf32>
    %14 = vector.extract_strided_slice %7 {offsets = [6, 1536], sizes = [1, 256], strides = [1, 1]} : vector<32x4096xf32> to vector<1x256xf32>
    %15 = vector.extract_strided_slice %7 {offsets = [7, 1792], sizes = [1, 256], strides = [1, 1]} : vector<32x4096xf32> to vector<1x256xf32>
    %16 = vector.extract_strided_slice %7 {offsets = [8, 2048], sizes = [1, 256], strides = [1, 1]} : vector<32x4096xf32> to vector<1x256xf32>
    %17 = vector.extract_strided_slice %7 {offsets = [9, 2304], sizes = [1, 256], strides = [1, 1]} : vector<32x4096xf32> to vector<1x256xf32>
    %18 = vector.extract_strided_slice %7 {offsets = [10, 2560], sizes = [1, 256], strides = [1, 1]} : vector<32x4096xf32> to vector<1x256xf32>
    %19 = vector.extract_strided_slice %7 {offsets = [11, 2816], sizes = [1, 256], strides = [1, 1]} : vector<32x4096xf32> to vector<1x256xf32>
    %20 = vector.extract_strided_slice %7 {offsets = [12, 3072], sizes = [1, 256], strides = [1, 1]} : vector<32x4096xf32> to vector<1x256xf32>
    %21 = vector.extract_strided_slice %7 {offsets = [13, 3328], sizes = [1, 256], strides = [1, 1]} : vector<32x4096xf32> to vector<1x256xf32>
    %22 = vector.extract_strided_slice %7 {offsets = [14, 3584], sizes = [1, 256], strides = [1, 1]} : vector<32x4096xf32> to vector<1x256xf32>
    %23 = vector.extract_strided_slice %7 {offsets = [15, 3840], sizes = [1, 256], strides = [1, 1]} : vector<32x4096xf32> to vector<1x256xf32>
    %24 = arith.addf %8, %9 : vector<1x256xf32>
    %25 = arith.addf %10, %11 : vector<1x256xf32>
    %26 = arith.addf %12, %13 : vector<1x256xf32>
    %27 = arith.addf %14, %15 : vector<1x256xf32>
    %28 = arith.addf %16, %17 : vector<1x256xf32>
    %29 = arith.addf %18, %19 : vector<1x256xf32>
    %30 = arith.addf %20, %21 : vector<1x256xf32>
    %31 = arith.addf %22, %23 : vector<1x256xf32>
    %32 = arith.addf %24, %25 : vector<1x256xf32>
    %33 = arith.addf %26, %27 : vector<1x256xf32>
    %34 = arith.addf %28, %29 : vector<1x256xf32>
    %35 = arith.addf %30, %31 : vector<1x256xf32>
    %36 = arith.addf %32, %33 : vector<1x256xf32>
    %37 = arith.addf %34, %35 : vector<1x256xf32>
    %38 = arith.addf %36, %37 : vector<1x256xf32>
    %39 = vector.extract_strided_slice %7 {offsets = [16, 0], sizes = [1, 256], strides = [1, 1]} : vector<32x4096xf32> to vector<1x256xf32>
    %40 = vector.extract_strided_slice %7 {offsets = [17, 256], sizes = [1, 256], strides = [1, 1]} : vector<32x4096xf32> to vector<1x256xf32>
    %41 = vector.extract_strided_slice %7 {offsets = [18, 512], sizes = [1, 256], strides = [1, 1]} : vector<32x4096xf32> to vector<1x256xf32>
    %42 = vector.extract_strided_slice %7 {offsets = [19, 768], sizes = [1, 256], strides = [1, 1]} : vector<32x4096xf32> to vector<1x256xf32>
    %43 = vector.extract_strided_slice %7 {offsets = [20, 1024], sizes = [1, 256], strides = [1, 1]} : vector<32x4096xf32> to vector<1x256xf32>
    %44 = vector.extract_strided_slice %7 {offsets = [21, 1280], sizes = [1, 256], strides = [1, 1]} : vector<32x4096xf32> to vector<1x256xf32>
    %45 = vector.extract_strided_slice %7 {offsets = [22, 1536], sizes = [1, 256], strides = [1, 1]} : vector<32x4096xf32> to vector<1x256xf32>
    %46 = vector.extract_strided_slice %7 {offsets = [23, 1792], sizes = [1, 256], strides = [1, 1]} : vector<32x4096xf32> to vector<1x256xf32>
    %47 = vector.extract_strided_slice %7 {offsets = [24, 2048], sizes = [1, 256], strides = [1, 1]} : vector<32x4096xf32> to vector<1x256xf32>
    %48 = vector.extract_strided_slice %7 {offsets = [25, 2304], sizes = [1, 256], strides = [1, 1]} : vector<32x4096xf32> to vector<1x256xf32>
    %49 = vector.extract_strided_slice %7 {offsets = [26, 2560], sizes = [1, 256], strides = [1, 1]} : vector<32x4096xf32> to vector<1x256xf32>
    %50 = vector.extract_strided_slice %7 {offsets = [27, 2816], sizes = [1, 256], strides = [1, 1]} : vector<32x4096xf32> to vector<1x256xf32>
    %51 = vector.extract_strided_slice %7 {offsets = [28, 3072], sizes = [1, 256], strides = [1, 1]} : vector<32x4096xf32> to vector<1x256xf32>
    %52 = vector.extract_strided_slice %7 {offsets = [29, 3328], sizes = [1, 256], strides = [1, 1]} : vector<32x4096xf32> to vector<1x256xf32>
    %53 = vector.extract_strided_slice %7 {offsets = [30, 3584], sizes = [1, 256], strides = [1, 1]} : vector<32x4096xf32> to vector<1x256xf32>
    %54 = vector.extract_strided_slice %7 {offsets = [31, 3840], sizes = [1, 256], strides = [1, 1]} : vector<32x4096xf32> to vector<1x256xf32>
    %55 = arith.addf %39, %40 : vector<1x256xf32>
    %56 = arith.addf %41, %42 : vector<1x256xf32>
    %57 = arith.addf %43, %44 : vector<1x256xf32>
    %58 = arith.addf %45, %46 : vector<1x256xf32>
    %59 = arith.addf %47, %48 : vector<1x256xf32>
    %60 = arith.addf %49, %50 : vector<1x256xf32>
    %61 = arith.addf %51, %52 : vector<1x256xf32>
    %62 = arith.addf %53, %54 : vector<1x256xf32>
    %63 = arith.addf %55, %56 : vector<1x256xf32>
    %64 = arith.addf %57, %58 : vector<1x256xf32>
    %65 = arith.addf %59, %60 : vector<1x256xf32>
    %66 = arith.addf %61, %62 : vector<1x256xf32>
    %67 = arith.addf %63, %64 : vector<1x256xf32>
    %68 = arith.addf %65, %66 : vector<1x256xf32>
    %69 = arith.addf %67, %68 : vector<1x256xf32>
    %70 = tpu.concatenate %38, %69 in 0 : vector<1x256xf32>, vector<1x256xf32> -> vector<2x256xf32>
    %c0_4 = arith.constant 0 : index
    %c0_5 = arith.constant 0 : index
    %71 = vector.load %arg8[%c0_4, %c0_5] : memref<2x256xf32, #tpu.memory_space<vmem>>, vector<2x256xf32>
    %72 = arith.addf %71, %70 : vector<2x256xf32>
    %c0_6 = arith.constant 0 : index
    %c0_7 = arith.constant 0 : index
    %73 = vector.load %arg8[%c0_6, %c0_7] : memref<2x256xf32, #tpu.memory_space<vmem>>, vector<2x256xf32>
    tpu.vector_store %arg8[%c0_6, %c0_7], %72 {strides = array<i32>} : memref<2x256xf32, #tpu.memory_space<vmem>>, vector<2x256xf32>,
    return
  }
  func.func @transform_0(%arg0: i32) -> (i32, i32) {
    %c0_i32 = arith.constant 0 : i32
    %c0_i32_0 = arith.constant 0 : i32
    %c0_i32_1 = arith.constant 0 : i32
    return %c0_i32, %c0_i32_0 : i32, i32
  }
  func.func @transform_1(%arg0: i32) -> (i32, i32) {
    %c0_i32 = arith.constant 0 : i32
    %c0_i32_0 = arith.constant 0 : i32
    %c0_i32_1 = arith.constant 0 : i32
    return %c0_i32, %c0_i32_0 : i32, i32
  }
  func.func @transform_2(%arg0: i32) -> (i32, i32) {
    %c0_i32 = arith.constant 0 : i32
    %c0_i32_0 = arith.constant 0 : i32
    %c0_i32_1 = arith.constant 0 : i32
    return %c0_i32, %c0_i32_0 : i32, i32
  }
  func.func @transform_3(%arg0: i32) -> (i32, i32) {
    %c0_i32 = arith.constant 0 : i32
    %c0_i32_0 = arith.constant 0 : i32
    return %c0_i32, %arg0 : i32, i32
  }
  func.func @transform_4(%arg0: i32) -> (i32, i32) {
    %c0_i32 = arith.constant 0 : i32
    %c0_i32_0 = arith.constant 0 : i32
    %c0_i32_1 = arith.constant 0 : i32
    return %c0_i32, %c0_i32_0 : i32, i32
  }
  func.func @transform_5(%arg0: i32) -> (i32, i32) {
    %c0_i32 = arith.constant 0 : i32
    %c0_i32_0 = arith.constant 0 : i32
    %c0_i32_1 = arith.constant 0 : i32
    return %c0_i32, %c0_i32_0 : i32, i32
  }
  func.func @transform_6(%arg0: i32) -> (i32, i32) {
    %c0_i32 = arith.constant 0 : i32
    %c0_i32_0 = arith.constant 0 : i32
    %c0_i32_1 = arith.constant 0 : i32
    return %c0_i32, %c0_i32_0 : i32, i32
  }
  func.func @transform_7(%arg0: i32) -> (i32, i32) {
    %c0_i32 = arith.constant 0 : i32
    %c0_i32_0 = arith.constant 0 : i32
    %c0_i32_1 = arith.constant 0 : i32
    return %c0_i32, %c0_i32_0 : i32, i32
  }
  func.func @transform_8(%arg0: i32) -> (i32, i32) {
    %c0_i32 = arith.constant 0 : i32
    %c0_i32_0 = arith.constant 0 : i32
    %c0_i32_1 = arith.constant 0 : i32
    return %c0_i32, %c0_i32_0 : i32, i32
  }
}

</mosaic_0001>

<llo_original>
// kernel: mixed_precision_forward.1
$region0: #{mixed_precision_forward.1}
  #allocation0 [shape = 'u32[]', space=smem, size = 0x4, offset = 0x4, fixed_abs, tag = 'smem constant byte address 0x4 - core index']
  #allocation1 [shape = 'u32[72,128]{1,0:T(1,128)}', space=vmem, size = 0x9000, scoped, tag = 'internal scratch']
  #allocation2 [shape = 'bf16[2,32,256]{2,1,0:T(8,128)(2,1)}', space=vmem, size = 0x8000, scoped, tag = 'scratch operand']
  #allocation3 [shape = 'f32[1,1]{1,0:T(1,128)S(1)}', space=vmem, size = 0x200, scoped, tag = 'scoped memory for mixed_precision_forward.1']
  %s0 = inlined_call_operand.vmem [shape: bf16[128,512], index: 0, kind: input, shape index: {}]
  %s1 = inlined_call_operand.hbm [shape: bf16[32,128], index: 1, kind: input, shape index: {}]
  %s2 = inlined_call_operand.vmem [shape: f32[32,1], index: 2, kind: input, shape index: {}]
  %s3 = inlined_call_operand.hbm [shape: bf16[256,8192], index: 3, kind: input, shape index: {}]
  %s4 = inlined_call_operand.hbm [shape: f32[1,256], index: 4, kind: input, shape index: {}]
  %s5 = inlined_call_operand.hbm [shape: bf16[32,256], index: 5, kind: input, shape index: {}]
  %s6 = inlined_call_operand.<no memory space> [shape: f32[1,1], index: 6, kind: input, shape index: {}]
  %s7 = inlined_call_operand.hbm [shape: f32[2,256], index: 7, kind: output, shape index: {0}]
  %s8 = inlined_call_operand.vmem [shape: f32[2,1], index: 8, kind: output, shape index: {1}]
  %9 = xla_tuple %s7, %s8
  %s10 = sld [smem:[#allocation0]]
  $region89: #{mixed_precision_forward.1} parent=0
    _
  %s12 = ssub.s32 1, %s10
  %s13 = scalar_select 0, %s12, %s10
  %v14 = vstv %s6
  %15 = vst [vmem:[#allocation3] sm:$0x1] %v14
  $region1: #{mixed_precision_forward.1} parent=0
    #allocation4 [shape = 'u8[8192]{0}', space=vmem, size = 0x2000, scoped, tag = 'input window, operand 1, single buffered']
    #allocation5 [shape = 's32[2]{0}', space=sflag, size = 0x8, scoped, tag = 'scoped memory for mixed_precision_forward.1']
    #allocation6 [shape = 's32[2]{0}', space=sflag, size = 0x8, scoped, tag = 'scoped memory for mixed_precision_forward.1']
    #allocation7 [shape = 'u8[4194304]{0}', space=vmem, size = 0x400000, scoped, tag = 'input window, operand 3']
    #allocation8 [shape = 's32[2]{0}', space=sflag, size = 0x8, scoped, tag = 'scoped memory for mixed_precision_forward.1']
    #allocation9 [shape = 'u8[1024]{0}', space=vmem, size = 0x400, scoped, tag = 'input window, operand 4, single buffered']
    #allocation10 [shape = 'u8[16384]{0}', space=vmem, size = 0x4000, scoped, tag = 'input window, operand 5, single buffered']
    #allocation11 [shape = 's32[1]{0}', space=sflag, size = 0x4, scoped, tag = 'scoped memory for mixed_precision_forward.1']
    #allocation12 [shape = 'u8[2048]{0}', space=vmem, size = 0x800, scoped, tag = 'output window, operand 0, single buffered']
    %16 = vsyncpa [#allocation5], 0
    %17 = vsyncpa [#allocation8], 0
    %s18 = scalar_lea.sflag [#allocation8], 1
    %19 = vsyncpa %s18, 0
    %20 = vsyncpa [#allocation11], 0
    %21 = vsyncpa [#allocation6], 0
    loop: start=0, step=1, limit=4
    $region2: #{mixed_precision_forward.1} parent=1 // loop_pre_header
      _
    $region3: #{mixed_precision_forward.1} parent=1 // loop_header
      %s23 = sphi 0, %s27
      %p24 = scmp.ge.s32.totalorder %s23, 4
      %s31 = sphi 0, %s31
      %s33 = sphi 0, %s31
      %s34 = sphi 0, %s33
      %s48 = sphi 0, %s34
      %s52 = sphi 0, %s52
      %s54 = sphi 0, %s52
      %s55 = sphi 0, %s54
      %s69 = sphi 0, %s55
      %s73 = sphi 0, %s73
      %s75 = sphi 0, %s73
      %s76 = sphi 0, %s75
      %s90 = sphi 0, %s76
      %s96 = sphi 0, %s98
      %s99 = sphi 0, %s96
      %s100 = sphi 0, %s99
      %s116 = sphi 0, %s100
      %s120 = sphi 0, %s120
      %s122 = sphi 0, %s120
      %s123 = sphi 0, %s122
      %s137 = sphi 0, %s123
      %s141 = sphi 0, %s141
      %s143 = sphi 0, %s141
      %s144 = sphi 0, %s143
      %s158 = sphi 0, %s144
      %s162 = sphi 0, %s162
      %s164 = sphi 0, %s162
      %s165 = sphi 0, %s164
      %s179 = sphi 0, %s165
      %s183 = sphi 0, %s183
      %s185 = sphi 0, %s183
      %s186 = sphi 0, %s185
      %s200 = sphi 0, %s186
      %s204 = sphi 0, %s204
      %s206 = sphi 0, %s204
      %s207 = sphi 0, %s206
      %s221 = sphi 0, %s207
    $region4: #{mixed_precision_forward.1} parent=1 // loop_header_branch
      %26 = sbr.rel (%p24) target = $region8
    $region5: #{mixed_precision_forward.1} parent=1 // loop_body
      %s28 = ssub.s32 %s23, 1
      %s29 = ssub.s32 %s23, 2
      %s30 = sadd.s32 %s23, 1
      %s32 = sadd.s32 %s31, 1
      %p35 = scmp.eq.s32.totalorder %s23, 1
      %p36 = scmp.ne.s32.totalorder %s31, %s33
      %p37 = scmp.eq.s32.totalorder %s23, 0
      %p38 = por %p36, %p37
      %p39 = scmp.ne.s32.totalorder %s31, %s33
      %p40 = scmp.eq.s32.totalorder %s28, 1
      %p41 = por %p39, %p40
      %p42 = scmp.ne.s32.totalorder %s33, %s34
      %p43 = scmp.eq.s32.totalorder %s28, 0
      %p44 = por %p42, %p43
      %p45 = scmp.ne.s32.totalorder %s33, %s34
      %p46 = scmp.eq.s32.totalorder %s29, 1
      %p47 = por %p45, %p46
      %p49 = scmp.ne.s32.totalorder %s34, %s48
      %p50 = scmp.eq.s32.totalorder %s29, 0
      %p51 = por %p49, %p50
      %s53 = sadd.s32 %s52, 1
      %p56 = scmp.eq.s32.totalorder %s23, 1
      %p57 = scmp.ne.s32.totalorder %s52, %s54
      %p58 = scmp.eq.s32.totalorder %s23, 0
      %p59 = por %p57, %p58
      %p60 = scmp.ne.s32.totalorder %s52, %s54
      %p61 = scmp.eq.s32.totalorder %s28, 1
      %p62 = por %p60, %p61
      %p63 = scmp.ne.s32.totalorder %s54, %s55
      %p64 = scmp.eq.s32.totalorder %s28, 0
      %p65 = por %p63, %p64
      %p66 = scmp.ne.s32.totalorder %s54, %s55
      %p67 = scmp.eq.s32.totalorder %s29, 1
      %p68 = por %p66, %p67
      %p70 = scmp.ne.s32.totalorder %s55, %s69
      %p71 = scmp.eq.s32.totalorder %s29, 0
      %p72 = por %p70, %p71
      %s74 = sadd.s32 %s73, 1
      %p77 = scmp.eq.s32.totalorder %s23, 1
      %p78 = scmp.ne.s32.totalorder %s73, %s75
      %p79 = scmp.eq.s32.totalorder %s23, 0
      %p80 = por %p78, %p79
      %p81 = scmp.ne.s32.totalorder %s73, %s75
      %p82 = scmp.eq.s32.totalorder %s28, 1
      %p83 = por %p81, %p82
      %p84 = scmp.ne.s32.totalorder %s75, %s76
      %p85 = scmp.eq.s32.totalorder %s28, 0
      %p86 = por %p84, %p85
      %p87 = scmp.ne.s32.totalorder %s75, %s76
      %p88 = scmp.eq.s32.totalorder %s29, 1
      %p89 = por %p87, %p88
      %p91 = scmp.ne.s32.totalorder %s76, %s90
      %p92 = scmp.eq.s32.totalorder %s29, 0
      %p93 = por %p91, %p92
      %s94 = ssub.s32 %s23, %s30
      %p95 = scmp.eq.s32.totalorder %s94, 0
      %s97 = sadd.s32 %s96, 1
      %s98 = scalar_select %p95, %s96, %s97
      %p101 = pneg %p95
      %p102 = scmp.eq.s32.totalorder %s23, 1
      %p103 = por %p101, %p102
      %p104 = scmp.ne.s32.totalorder %s96, %s99
      %p105 = scmp.eq.s32.totalorder %s23, 0
      %p106 = por %p104, %p105
      %p107 = scmp.ne.s32.totalorder %s96, %s99
      %p108 = scmp.eq.s32.totalorder %s28, 1
      %p109 = por %p107, %p108
      %p110 = scmp.ne.s32.totalorder %s99, %s100
      %p111 = scmp.eq.s32.totalorder %s28, 0
      %p112 = por %p110, %p111
      %p113 = scmp.ne.s32.totalorder %s99, %s100
      %p114 = scmp.eq.s32.totalorder %s29, 1
      %p115 = por %p113, %p114
      %p117 = scmp.ne.s32.totalorder %s100, %s116
      %p118 = scmp.eq.s32.totalorder %s29, 0
      %p119 = por %p117, %p118
      %s121 = sadd.s32 %s120, 1
      %p124 = scmp.eq.s32.totalorder %s23, 1
      %p125 = scmp.ne.s32.totalorder %s120, %s122
      %p126 = scmp.eq.s32.totalorder %s23, 0
      %p127 = por %p125, %p126
      %p128 = scmp.ne.s32.totalorder %s120, %s122
      %p129 = scmp.eq.s32.totalorder %s28, 1
      %p130 = por %p128, %p129
      %p131 = scmp.ne.s32.totalorder %s122, %s123
      %p132 = scmp.eq.s32.totalorder %s28, 0
      %p133 = por %p131, %p132
      %p134 = scmp.ne.s32.totalorder %s122, %s123
      %p135 = scmp.eq.s32.totalorder %s29, 1
      %p136 = por %p134, %p135
      %p138 = scmp.ne.s32.totalorder %s123, %s137
      %p139 = scmp.eq.s32.totalorder %s29, 0
      %p140 = por %p138, %p139
      %s142 = sadd.s32 %s141, 1
      %p145 = scmp.eq.s32.totalorder %s23, 1
      %p146 = scmp.ne.s32.totalorder %s141, %s143
      %p147 = scmp.eq.s32.totalorder %s23, 0
      %p148 = por %p146, %p147
      %p149 = scmp.ne.s32.totalorder %s141, %s143
      %p150 = scmp.eq.s32.totalorder %s28, 1
      %p151 = por %p149, %p150
      %p152 = scmp.ne.s32.totalorder %s143, %s144
      %p153 = scmp.eq.s32.totalorder %s28, 0
      %p154 = por %p152, %p153
      %p155 = scmp.ne.s32.totalorder %s143, %s144
      %p156 = scmp.eq.s32.totalorder %s29, 1
      %p157 = por %p155, %p156
      %p159 = scmp.ne.s32.totalorder %s144, %s158
      %p160 = scmp.eq.s32.totalorder %s29, 0
      %p161 = por %p159, %p160
      %s163 = sadd.s32 %s162, 1
      %p166 = scmp.eq.s32.totalorder %s23, 1
      %p167 = scmp.ne.s32.totalorder %s162, %s164
      %p168 = scmp.eq.s32.totalorder %s23, 0
      %p169 = por %p167, %p168
      %p170 = scmp.ne.s32.totalorder %s162, %s164
      %p171 = scmp.eq.s32.totalorder %s28, 1
      %p172 = por %p170, %p171
      %p173 = scmp.ne.s32.totalorder %s164, %s165
      %p174 = scmp.eq.s32.totalorder %s28, 0
      %p175 = por %p173, %p174
      %p176 = scmp.ne.s32.totalorder %s164, %s165
      %p177 = scmp.eq.s32.totalorder %s29, 1
      %p178 = por %p176, %p177
      %p180 = scmp.ne.s32.totalorder %s165, %s179
      %p181 = scmp.eq.s32.totalorder %s29, 0
      %p182 = por %p180, %p181
      %s184 = sadd.s32 %s183, 1
      %p187 = scmp.eq.s32.totalorder %s23, 1
      %p188 = scmp.ne.s32.totalorder %s183, %s185
      %p189 = scmp.eq.s32.totalorder %s23, 0
      %p190 = por %p188, %p189
      %p191 = scmp.ne.s32.totalorder %s183, %s185
      %p192 = scmp.eq.s32.totalorder %s28, 1
      %p193 = por %p191, %p192
      %p194 = scmp.ne.s32.totalorder %s185, %s186
      %p195 = scmp.eq.s32.totalorder %s28, 0
      %p196 = por %p194, %p195
      %p197 = scmp.ne.s32.totalorder %s185, %s186
      %p198 = scmp.eq.s32.totalorder %s29, 1
      %p199 = por %p197, %p198
      %p201 = scmp.ne.s32.totalorder %s186, %s200
      %p202 = scmp.eq.s32.totalorder %s29, 0
      %p203 = por %p201, %p202
      %s205 = sadd.s32 %s204, 1
      %p208 = scmp.eq.s32.totalorder %s23, 1
      %p209 = scmp.ne.s32.totalorder %s204, %s206
      %p210 = scmp.eq.s32.totalorder %s23, 0
      %p211 = por %p209, %p210
      %p212 = scmp.ne.s32.totalorder %s204, %s206
      %p213 = scmp.eq.s32.totalorder %s28, 1
      %p214 = por %p212, %p213
      %p215 = scmp.ne.s32.totalorder %s206, %s207
      %p216 = scmp.eq.s32.totalorder %s28, 0
      %p217 = por %p215, %p216
      %p218 = scmp.ne.s32.totalorder %s206, %s207
      %p219 = scmp.eq.s32.totalorder %s29, 1
      %p220 = por %p218, %p219
      %p222 = scmp.ne.s32.totalorder %s207, %s221
      %p223 = scmp.eq.s32.totalorder %s29, 0
      %p224 = por %p222, %p223
      %p225 = scmp.le.s32.totalorder 1, %s23
      %p226 = scmp.lt.s32.totalorder %s23, 3
      %p227 = pnand %p225, %p226
      %p228 = pneg %p227
      // Predicated region
      $region9: #{mixed_precision_forward.1} parent=5 // pred_check
        _
      $region10: #{mixed_precision_forward.1} parent=5 // pred_check_branch
        %230 = sbr.rel (%p227) target = $region12
      $region11: #{mixed_precision_forward.1} parent=5 // pred_region
        %s231 = ssub.s32 %s23, 1
        // Predicated region
        $region13: #{mixed_precision_forward.1} parent=11 // pred_check
          %p232 = pneg %p44
        $region14: #{mixed_precision_forward.1} parent=11 // pred_check_branch
          %234 = sbr.rel (%p232) target = $region16
        $region15: #{mixed_precision_forward.1} parent=11 // pred_region
          _
        $region16: #{mixed_precision_forward.1} parent=11 // pred_fallthru
          _
        // Predicated region
        $region17: #{mixed_precision_forward.1} parent=11 // pred_check
          %p235 = pneg %p65
        $region18: #{mixed_precision_forward.1} parent=11 // pred_check_branch
          %237 = sbr.rel (%p235) target = $region20
        $region19: #{mixed_precision_forward.1} parent=11 // pred_region
          %239 = vsyncadd [#allocation5], 0
          %s240 = sshll.u32 %s1, 4
          %s241 = int_to_ptr.hbm [resolvable:$true] %s240
          %s242 = sshll.u32 [#allocation4], 4
          %s243 = int_to_ptr.vmem [resolvable:$true] %s242
          %248 = dma.hbm_to_vmem [thread:$0]  %s241, 256, %s243, [#allocation5], 64, 64, 4
        $region20: #{mixed_precision_forward.1} parent=11 // pred_fallthru
          _
        // Predicated region
        $region21: #{mixed_precision_forward.1} parent=11 // pred_check
          %p249 = pneg %p86
        $region22: #{mixed_precision_forward.1} parent=11 // pred_check_branch
          %251 = sbr.rel (%p249) target = $region24
        $region23: #{mixed_precision_forward.1} parent=11 // pred_region
          _
        $region24: #{mixed_precision_forward.1} parent=11 // pred_fallthru
          _
        // Predicated region
        $region25: #{mixed_precision_forward.1} parent=11 // pred_check
          %p252 = pneg %p133
        $region26: #{mixed_precision_forward.1} parent=11 // pred_check_branch
          %254 = sbr.rel (%p252) target = $region28
        $region27: #{mixed_precision_forward.1} parent=11 // pred_region
          %256 = vsyncadd [#allocation8], 0
          %s258 = sshll.u32 %s4, 4
          %s259 = int_to_ptr.hbm [resolvable:$true] %s258
          %s260 = sshll.u32 [#allocation9], 4
          %s261 = int_to_ptr.vmem [resolvable:$true] %s260
          %263 = dma.hbm_to_vmem [thread:$0]  %s259, 32, %s261, [#allocation8]
        $region28: #{mixed_precision_forward.1} parent=11 // pred_fallthru
          _
        // Predicated region
        $region29: #{mixed_precision_forward.1} parent=11 // pred_check
          %p264 = pneg %p154
        $region30: #{mixed_precision_forward.1} parent=11 // pred_check_branch
          %266 = sbr.rel (%p264) target = $region32
        $region31: #{mixed_precision_forward.1} parent=11 // pred_region
          %268 = vsyncadd [#allocation11], 0
          %s269 = sshll.u32 %s5, 4
          %s270 = int_to_ptr.hbm [resolvable:$true] %s269
          %s271 = sshll.u32 [#allocation10], 4
          %s272 = int_to_ptr.vmem [resolvable:$true] %s271
          %277 = dma.hbm_to_vmem [thread:$0]  %s270, 512, %s272, [#allocation11], 128, 128, 8
        $region32: #{mixed_precision_forward.1} parent=11 // pred_fallthru
          _
        // Predicated region
        $region33: #{mixed_precision_forward.1} parent=11 // pred_check
          %p278 = pneg %p175
        $region34: #{mixed_precision_forward.1} parent=11 // pred_check_branch
          %280 = sbr.rel (%p278) target = $region36
        $region35: #{mixed_precision_forward.1} parent=11 // pred_region
          _
        $region36: #{mixed_precision_forward.1} parent=11 // pred_fallthru
          _
      $region12: #{mixed_precision_forward.1} parent=5 // pred_fallthru
        _
      %p281 = scmp.lt.s32.totalorder %s23, 2
      // Predicated region
      $region37: #{mixed_precision_forward.1} parent=5 // pred_check
        %p282 = pneg %p281
      $region38: #{mixed_precision_forward.1} parent=5 // pred_check_branch
        %284 = sbr.rel (%p282) target = $region40
      $region39: #{mixed_precision_forward.1} parent=5 // pred_region
        // Predicated region
        $region41: #{mixed_precision_forward.1} parent=39 // pred_check
          %p285 = pneg %p106
        $region42: #{mixed_precision_forward.1} parent=39 // pred_check_branch
          %287 = sbr.rel (%p285) target = $region44
        $region43: #{mixed_precision_forward.1} parent=39 // pred_region
          %s288 = sand.u32 %s23, 1
          %s289 = scalar_lea.sflag [#allocation8], %s288
          %s290 = sand.u32 %s96, 1
          %s291 = smul.addr %s290, 4096
          %s292 = scalar_lea.vmem [#allocation7], %s291
          %s293 = smul.u32 32, %s23
          %295 = vsyncadd %s289, 0
          %s296 = smul.addr %s293, 4
          %s297 = scalar_lea.hbm %s3, %s296
          %s298 = sshll.u32 %s297, 4
          %s299 = int_to_ptr.hbm [resolvable:$true] %s298
          %s300 = sshll.u32 %s292, 4
          %s301 = int_to_ptr.vmem [resolvable:$true] %s300
          %306 = dma.hbm_to_vmem [thread:$0]  %s299, 65536, %s301, %s289, 4096, 2048, 128
        $region44: #{mixed_precision_forward.1} parent=39 // pred_fallthru
          _
      $region40: #{mixed_precision_forward.1} parent=5 // pred_fallthru
        _
      %p307 = scmp.le.s32.totalorder 1, %s23
      %p308 = scmp.lt.s32.totalorder %s23, 3
      %p309 = pnand %p307, %p308
      %p310 = pneg %p309
      // Predicated region
      $region45: #{mixed_precision_forward.1} parent=5 // pred_check
        _
      $region46: #{mixed_precision_forward.1} parent=5 // pred_check_branch
        %312 = sbr.rel (%p309) target = $region48
      $region47: #{mixed_precision_forward.1} parent=5 // pred_region
        %s313 = ssub.s32 %s23, 1
        // Predicated region
        $region49: #{mixed_precision_forward.1} parent=47 // pred_check
          %p314 = pneg %p65
        $region50: #{mixed_precision_forward.1} parent=47 // pred_check_branch
          %316 = sbr.rel (%p314) target = $region52
        $region51: #{mixed_precision_forward.1} parent=47 // pred_region
          %318 = dma.done [#allocation5], 256
        $region52: #{mixed_precision_forward.1} parent=47 // pred_fallthru
          _
        %s319 = sand.u32 %s28, 1
        %s320 = scalar_lea.sflag [#allocation8], %s319
        %s321 = sand.u32 %s99, 1
        %s322 = smul.addr %s321, 4096
        %s323 = scalar_lea.vmem [#allocation7], %s322
        // Predicated region
        $region53: #{mixed_precision_forward.1} parent=47 // pred_check
          %p324 = pneg %p112
        $region54: #{mixed_precision_forward.1} parent=47 // pred_check_branch
          %326 = sbr.rel (%p324) target = $region56
        $region55: #{mixed_precision_forward.1} parent=47 // pred_region
          %328 = dma.done %s320, 65536
        $region56: #{mixed_precision_forward.1} parent=47 // pred_fallthru
          _
        // Predicated region
        $region57: #{mixed_precision_forward.1} parent=47 // pred_check
          %p329 = pneg %p133
        $region58: #{mixed_precision_forward.1} parent=47 // pred_check_branch
          %331 = sbr.rel (%p329) target = $region60
        $region59: #{mixed_precision_forward.1} parent=47 // pred_region
          %333 = dma.done [#allocation8], 32
        $region60: #{mixed_precision_forward.1} parent=47 // pred_fallthru
          _
        // Predicated region
        $region61: #{mixed_precision_forward.1} parent=47 // pred_check
          %p334 = pneg %p154
        $region62: #{mixed_precision_forward.1} parent=47 // pred_check_branch
          %336 = sbr.rel (%p334) target = $region64
        $region63: #{mixed_precision_forward.1} parent=47 // pred_region
          %338 = dma.done [#allocation11], 512
        $region64: #{mixed_precision_forward.1} parent=47 // pred_fallthru
          _
        %p339 = pneg %p44
        %p340 = pneg %p41
        %p341 = pneg %p65
        %p342 = pneg %p62
        %p343 = pneg %p86
        %p344 = pneg %p83
        %s345 = sand.u32 %s28, 1
        %s346 = scalar_lea.sflag [#allocation8], %s345
        %s347 = sand.u32 %s99, 1
        %s348 = smul.addr %s347, 4096
        %s349 = scalar_lea.vmem [#allocation7], %s348
        %p350 = pneg %p112
        %p351 = pneg %p109
        %p352 = pneg %p133
        %p353 = pneg %p130
        %p354 = pneg %p154
        %p355 = pneg %p151
        %p356 = pneg %p175
        %p357 = pneg %p172
        %p358 = pneg %p196
        %p359 = pneg %p193
        %p360 = pneg %p217
        %p361 = pneg %p214
        %s362 = smul.u32 32, %s28
        %p363 = scmp.eq.s32.totalorder %s28, 0
        // Predicated region
        $region65: #{mixed_precision_forward.1} parent=47 // pred_check
          %p364 = pneg %p363
        $region66: #{mixed_precision_forward.1} parent=47 // pred_check_branch
          %366 = sbr.rel (%p364) target = $region68
        $region67: #{mixed_precision_forward.1} parent=47 // pred_region
          %v367 = vld [vmem:[#allocation4] sm:$0xf]
          %v368 = vld [vmem:[#allocation4 + $0x4] sm:$0xf]
          %v369 = vld [vmem:[#allocation4 + $0x8] sm:$0xf]
          %v370 = vld [vmem:[#allocation4 + $0xc] sm:$0xf]
          %v371 = vld [vmem:[%s0] sm:$0xff]
          %v372 = vld [vmem:[%s0 + $0x8] sm:$0xff]
          %v373 = vld [vmem:[%s0 + $0x10] sm:$0xff]
          %v374 = vld [vmem:[%s0 + $0x18] sm:$0xff]
          %v375 = vld [vmem:[%s0 + $0x20] sm:$0xff]
          %v376 = vld [vmem:[%s0 + $0x28] sm:$0xff]
          %v377 = vld [vmem:[%s0 + $0x30] sm:$0xff]
          %v378 = vld [vmem:[%s0 + $0x38] sm:$0xff]
          %v379 = vld [vmem:[%s0 + $0x40] sm:$0xff]
          %v380 = vld [vmem:[%s0 + $0x48] sm:$0xff]
          %v381 = vld [vmem:[%s0 + $0x50] sm:$0xff]
          %v382 = vld [vmem:[%s0 + $0x58] sm:$0xff]
          %v383 = vld [vmem:[%s0 + $0x60] sm:$0xff]
          %v384 = vld [vmem:[%s0 + $0x68] sm:$0xff]
          %v385 = vld [vmem:[%s0 + $0x70] sm:$0xff]
          %v386 = vld [vmem:[%s0 + $0x78] sm:$0xff]
          %v387 = vld [vmem:[%s0 + $0x80] sm:$0xff]
          %v388 = vld [vmem:[%s0 + $0x88] sm:$0xff]
          %v389 = vld [vmem:[%s0 + $0x90] sm:$0xff]
          %v390 = vld [vmem:[%s0 + $0x98] sm:$0xff]
          %v391 = vld [vmem:[%s0 + $0xa0] sm:$0xff]
          %v392 = vld [vmem:[%s0 + $0xa8] sm:$0xff]
          %v393 = vld [vmem:[%s0 + $0xb0] sm:$0xff]
          %v394 = vld [vmem:[%s0 + $0xb8] sm:$0xff]
          %v395 = vld [vmem:[%s0 + $0xc0] sm:$0xff]
          %v396 = vld [vmem:[%s0 + $0xc8] sm:$0xff]
          %v397 = vld [vmem:[%s0 + $0xd0] sm:$0xff]
          %v398 = vld [vmem:[%s0 + $0xd8] sm:$0xff]
          %v399 = vld [vmem:[%s0 + $0xe0] sm:$0xff]
          %v400 = vld [vmem:[%s0 + $0xe8] sm:$0xff]
          %v401 = vld [vmem:[%s0 + $0xf0] sm:$0xff]
          %v402 = vld [vmem:[%s0 + $0xf8] sm:$0xff]
          %v403 = vld [vmem:[%s2] sm:$0xff]
          %v404 = vld [vmem:[%s2 + $0x8] sm:$0xff]
          %v405 = vld [vmem:[%s2 + $0x10] sm:$0xff]
          %v406 = vld [vmem:[%s2 + $0x18] sm:$0xff]
          %408 = vset.pattern.permute.xlu0 0
          %409 = vperm.xlu0 %408, %v403
          %v410 = vpop.permute.xlu0 %409
          %413 = vset.pattern.permute.xlu0 0
          %414 = vperm.xlu0 %413, %v404
          %v415 = vpop.permute.xlu0 %414
          %418 = vset.pattern.permute.xlu0 0
          %419 = vperm.xlu0 %418, %v405
          %v420 = vpop.permute.xlu0 %419
          %423 = vset.pattern.permute.xlu0 0
          %424 = vperm.xlu0 %423, %v406
          %v425 = vpop.permute.xlu0 %424
          %v431 = vunpack.c.l.b16 %v367
          %v432 = vunpack.c.l.b16 %v368
          %v433 = vunpack.c.l.b16 %v369
          %v434 = vunpack.c.l.b16 %v370
          %v435 = vpack.c.b16 %v432, %v431
          %v436 = vpack.c.b16 %v434, %v433
          %v471 = vunpack.c.l.b16 %v371
          %v472 = vunpack.c.h.b16 %v371
          %v473 = vunpack.c.l.b16 %v372
          %v474 = vunpack.c.h.b16 %v372
          %v475 = vunpack.c.l.b16 %v373
          %v476 = vunpack.c.h.b16 %v373
          %v477 = vunpack.c.l.b16 %v374
          %v478 = vunpack.c.h.b16 %v374
          %v479 = vunpack.c.l.b16 %v375
          %v480 = vunpack.c.h.b16 %v375
          %v481 = vunpack.c.l.b16 %v376
          %v482 = vunpack.c.h.b16 %v376
          %v483 = vunpack.c.l.b16 %v377
          %v484 = vunpack.c.h.b16 %v377
          %v485 = vunpack.c.l.b16 %v378
          %v486 = vunpack.c.h.b16 %v378
          %v487 = vunpack.c.l.b16 %v379
          %v488 = vunpack.c.h.b16 %v379
          %v489 = vunpack.c.l.b16 %v380
          %v490 = vunpack.c.h.b16 %v380
          %v491 = vunpack.c.l.b16 %v381
          %v492 = vunpack.c.h.b16 %v381
          %v493 = vunpack.c.l.b16 %v382
          %v494 = vunpack.c.h.b16 %v382
          %v495 = vunpack.c.l.b16 %v383
          %v496 = vunpack.c.h.b16 %v383
          %v497 = vunpack.c.l.b16 %v384
          %v498 = vunpack.c.h.b16 %v384
          %v499 = vunpack.c.l.b16 %v385
          %v500 = vunpack.c.h.b16 %v385
          %v501 = vunpack.c.l.b16 %v386
          %v502 = vunpack.c.h.b16 %v386
          %v503 = vunpack.c.l.b16 %v387
          %v504 = vunpack.c.h.b16 %v387
          %v505 = vunpack.c.l.b16 %v388
          %v506 = vunpack.c.h.b16 %v388
          %v507 = vunpack.c.l.b16 %v389
          %v508 = vunpack.c.h.b16 %v389
          %v509 = vunpack.c.l.b16 %v390
          %v510 = vunpack.c.h.b16 %v390
          %v511 = vunpack.c.l.b16 %v391
          %v512 = vunpack.c.h.b16 %v391
          %v513 = vunpack.c.l.b16 %v392
          %v514 = vunpack.c.h.b16 %v392
          %v515 = vunpack.c.l.b16 %v393
          %v516 = vunpack.c.h.b16 %v393
          %v517 = vunpack.c.l.b16 %v394
          %v518 = vunpack.c.h.b16 %v394
          %v519 = vunpack.c.l.b16 %v395
          %v520 = vunpack.c.h.b16 %v395
          %v521 = vunpack.c.l.b16 %v396
          %v522 = vunpack.c.h.b16 %v396
          %v523 = vunpack.c.l.b16 %v397
          %v524 = vunpack.c.h.b16 %v397
          %v525 = vunpack.c.l.b16 %v398
          %v526 = vunpack.c.h.b16 %v398
          %v527 = vunpack.c.l.b16 %v399
          %v528 = vunpack.c.h.b16 %v399
          %v529 = vunpack.c.l.b16 %v400
          %v530 = vunpack.c.h.b16 %v400
          %v531 = vunpack.c.l.b16 %v401
          %v532 = vunpack.c.h.b16 %v401
          %v533 = vunpack.c.l.b16 %v402
          %v534 = vunpack.c.h.b16 %v402
          %v535 = vpack.c.b16 %v475, %v471
          %v536 = vpack.c.b16 %v476, %v472
          %v537 = vpack.c.b16 %v477, %v473
          %v538 = vpack.c.b16 %v478, %v474
          %v539 = vpack.c.b16 %v483, %v479
          %v540 = vpack.c.b16 %v484, %v480
          %v541 = vpack.c.b16 %v485, %v481
          %v542 = vpack.c.b16 %v486, %v482
          %v543 = vpack.c.b16 %v491, %v487
          %v544 = vpack.c.b16 %v492, %v488
          %v545 = vpack.c.b16 %v493, %v489
          %v546 = vpack.c.b16 %v494, %v490
          %v547 = vpack.c.b16 %v499, %v495
          %v548 = vpack.c.b16 %v500, %v496
          %v549 = vpack.c.b16 %v501, %v497
          %v550 = vpack.c.b16 %v502, %v498
          %v551 = vpack.c.b16 %v507, %v503
          %v552 = vpack.c.b16 %v508, %v504
          %v553 = vpack.c.b16 %v509, %v505
          %v554 = vpack.c.b16 %v510, %v506
          %v555 = vpack.c.b16 %v515, %v511
          %v556 = vpack.c.b16 %v516, %v512
          %v557 = vpack.c.b16 %v517, %v513
          %v558 = vpack.c.b16 %v518, %v514
          %v559 = vpack.c.b16 %v523, %v519
          %v560 = vpack.c.b16 %v524, %v520
          %v561 = vpack.c.b16 %v525, %v521
          %v562 = vpack.c.b16 %v526, %v522
          %v563 = vpack.c.b16 %v531, %v527
          %v564 = vpack.c.b16 %v532, %v528
          %v565 = vpack.c.b16 %v533, %v529
          %v566 = vpack.c.b16 %v534, %v530
          %599 = vmatpush.bf16.msra.mxu0 %v563
          %600 = vmatpush.bf16.msra.mxu0 %v559
          %601 = vmatpush.bf16.msra.mxu0 %v555
          %602 = vmatpush.bf16.msra.mxu0 %v551
          %603 = vmatpush.bf16.msra.mxu0 %v547
          %604 = vmatpush.bf16.msra.mxu0 %v543
          %605 = vmatpush.bf16.msra.mxu0 %v539
          %606 = vmatpush.bf16.msra.mxu0 %v535
          %607 = vmatmul.bf16.gmra.mxu0 %v435
          %v608 = vpop.f32.mrf.mxu0
          %v609 = vadd.f32 %v410, %v608
          %v610 = vpop.f32.mrf.mxu0
          %v611 = vadd.f32 %v415, %v610
          %612 = vmatmul.bf16.gmra.mxu0 %v436
          %v613 = vpop.f32.mrf.mxu0
          %v614 = vadd.f32 %v420, %v613
          %v615 = vpop.f32.mrf.mxu0
          %v616 = vadd.f32 %v425, %v615
          %617 = vdwg.mxu0
          %618 = vmatpush.bf16.msra.mxu0 %v564
          %619 = vmatpush.bf16.msra.mxu0 %v560
          %620 = vmatpush.bf16.msra.mxu0 %v556
          %621 = vmatpush.bf16.msra.mxu0 %v552
          %622 = vmatpush.bf16.msra.mxu0 %v548
          %623 = vmatpush.bf16.msra.mxu0 %v544
          %624 = vmatpush.bf16.msra.mxu0 %v540
          %625 = vmatpush.bf16.msra.mxu0 %v536
          %626 = vmatmul.bf16.gmra.mxu0 %v435
          %v627 = vpop.f32.mrf.mxu0
          %v628 = vadd.f32 %v410, %v627
          %v629 = vpop.f32.mrf.mxu0
          %v630 = vadd.f32 %v415, %v629
          %631 = vmatmul.bf16.gmra.mxu0 %v436
          %v632 = vpop.f32.mrf.mxu0
          %v633 = vadd.f32 %v420, %v632
          %v634 = vpop.f32.mrf.mxu0
          %v635 = vadd.f32 %v425, %v634
          %636 = vdwg.mxu0
          %637 = vmatpush.bf16.msra.mxu0 %v565
          %638 = vmatpush.bf16.msra.mxu0 %v561
          %639 = vmatpush.bf16.msra.mxu0 %v557
          %640 = vmatpush.bf16.msra.mxu0 %v553
          %641 = vmatpush.bf16.msra.mxu0 %v549
          %642 = vmatpush.bf16.msra.mxu0 %v545
          %643 = vmatpush.bf16.msra.mxu0 %v541
          %644 = vmatpush.bf16.msra.mxu0 %v537
          %645 = vmatmul.bf16.gmra.mxu0 %v435
          %v646 = vpop.f32.mrf.mxu0
          %v647 = vadd.f32 %v410, %v646
          %v648 = vpop.f32.mrf.mxu0
          %v649 = vadd.f32 %v415, %v648
          %650 = vmatmul.bf16.gmra.mxu0 %v436
          %v651 = vpop.f32.mrf.mxu0
          %v652 = vadd.f32 %v420, %v651
          %v653 = vpop.f32.mrf.mxu0
          %v654 = vadd.f32 %v425, %v653
          %655 = vdwg.mxu0
          %656 = vmatpush.bf16.msra.mxu0 %v566
          %657 = vmatpush.bf16.msra.mxu0 %v562
          %658 = vmatpush.bf16.msra.mxu0 %v558
          %659 = vmatpush.bf16.msra.mxu0 %v554
          %660 = vmatpush.bf16.msra.mxu0 %v550
          %661 = vmatpush.bf16.msra.mxu0 %v546
          %662 = vmatpush.bf16.msra.mxu0 %v542
          %663 = vmatpush.bf16.msra.mxu0 %v538
          %664 = vmatmul.bf16.gmra.mxu0 %v435
          %v665 = vpop.f32.mrf.mxu0
          %v666 = vadd.f32 %v410, %v665
          %v667 = vpop.f32.mrf.mxu0
          %v668 = vadd.f32 %v415, %v667
          %669 = vmatmul.bf16.gmra.mxu0 %v436
          %v670 = vpop.f32.mrf.mxu0
          %v671 = vadd.f32 %v420, %v670
          %v672 = vpop.f32.mrf.mxu0
          %v673 = vadd.f32 %v425, %v672
          %674 = vdwg.mxu0
          %v675 = vmax.f32 %v609, 0.0
          %v676 = vmax.f32 %v628, 0.0
          %v677 = vmax.f32 %v647, 0.0
          %v678 = vmax.f32 %v666, 0.0
          %v679 = vmax.f32 %v611, 0.0
          %v680 = vmax.f32 %v630, 0.0
          %v681 = vmax.f32 %v649, 0.0
          %v682 = vmax.f32 %v668, 0.0
          %v683 = vmax.f32 %v614, 0.0
          %v684 = vmax.f32 %v633, 0.0
          %v685 = vmax.f32 %v652, 0.0
          %v686 = vmax.f32 %v671, 0.0
          %v687 = vmax.f32 %v616, 0.0
          %v688 = vmax.f32 %v635, 0.0
          %v689 = vmax.f32 %v654, 0.0
          %v690 = vmax.f32 %v673, 0.0
          %v691 = vpack.c.bf16 %v676, %v675
          %v692 = vpack.c.bf16 %v678, %v677
          %v693 = vpack.c.bf16 %v680, %v679
          %v694 = vpack.c.bf16 %v682, %v681
          %v695 = vpack.c.bf16 %v684, %v683
          %v696 = vpack.c.bf16 %v686, %v685
          %v697 = vpack.c.bf16 %v688, %v687
          %v698 = vpack.c.bf16 %v690, %v689
          %699 = vst [vmem:[#allocation2] sm:$0xff] %v691
          %700 = vst [vmem:[#allocation2 + $0x8] sm:$0xff] %v693
          %701 = vst [vmem:[#allocation2 + $0x10] sm:$0xff] %v692
          %702 = vst [vmem:[#allocation2 + $0x18] sm:$0xff] %v694
          %s703 = scalar_lea.vmem [#allocation2], 32
          %704 = vst [vmem:[%s703] sm:$0xff] %v695
          %705 = vst [vmem:[%s703 + $0x8] sm:$0xff] %v697
          %706 = vst [vmem:[%s703 + $0x10] sm:$0xff] %v696
          %707 = vst [vmem:[%s703 + $0x18] sm:$0xff] %v698
          %v708 = vld [vmem:[#allocation10] sm:$0xff]
          %v709 = vld [vmem:[#allocation10 + $0x8] sm:$0xff]
          %v710 = vld [vmem:[#allocation10 + $0x10] sm:$0xff]
          %v711 = vld [vmem:[#allocation10 + $0x18] sm:$0xff]
          %v712 = vunpack.c.l.bf16 %v708
          %v713 = vunpack.c.h.bf16 %v708
          %v714 = vunpack.c.l.bf16 %v709
          %v715 = vunpack.c.h.bf16 %v709
          %v716 = vunpack.c.l.bf16 %v710
          %v717 = vunpack.c.h.bf16 %v710
          %v718 = vunpack.c.l.bf16 %v711
          %v719 = vunpack.c.h.bf16 %v711
          %v720 = vunpack.c.l.bf16 %v691
          %v721 = vunpack.c.h.bf16 %v691
          %v722 = vunpack.c.l.bf16 %v693
          %v723 = vunpack.c.h.bf16 %v693
          %v724 = vunpack.c.l.bf16 %v695
          %v725 = vunpack.c.h.bf16 %v695
          %v726 = vunpack.c.l.bf16 %v697
          %v727 = vunpack.c.h.bf16 %v697
          %v728 = vmul.f32 %v720, %v712
          %v729 = vmul.f32 %v721, %v713
          %v730 = vmul.f32 %v722, %v714
          %v731 = vmul.f32 %v723, %v715
          %v732 = vmul.f32 %v724, %v716
          %v733 = vmul.f32 %v725, %v717
          %v734 = vmul.f32 %v726, %v718
          %v735 = vmul.f32 %v727, %v719
          %v736 = vadd.f32 %v728, %v729
          %737 = vadd.xlane.f32.xlu0 %v736
          %v738 = vpop.xlane.xlu0 %737
          %v739 = vadd.f32 %v730, %v731
          %740 = vadd.xlane.f32.xlu0 %v739
          %v741 = vpop.xlane.xlu0 %740
          %v742 = vadd.f32 %v732, %v733
          %743 = vadd.xlane.f32.xlu0 %v742
          %v744 = vpop.xlane.xlu0 %743
          %v745 = vadd.f32 %v734, %v735
          %746 = vadd.xlane.f32.xlu0 %v745
          %v747 = vpop.xlane.xlu0 %746
          %v748 = vadd.f32 %v738, %v741
          %v749 = vadd.f32 %v748, %v744
          %v750 = vadd.f32 %v749, %v747
          %v751 = vrot.slane %v750, 4
          %v752 = vadd.f32 %v750, %v751
          %v753 = vrot.slane %v752, 2
          %v754 = vadd.f32 %v752, %v753
          %v755 = vrot.slane %v754, 1
          %v756 = vadd.f32 %v754, %v755
          %v757 = vld [vmem:[#allocation3] sm:$0x1]
          %v758 = vadd.f32 %v756, %v757
          %v759 = vtanh.pop %v758
          %vm760 = vcmask 0
          %761 = vst.msk [vmem:[%s8] sm:$0x1] %vm760, %v759
          %v762 = vunpack.c.l.bf16 %v692
          %v763 = vunpack.c.h.bf16 %v692
          %v764 = vunpack.c.l.bf16 %v694
          %v765 = vunpack.c.h.bf16 %v694
          %v766 = vunpack.c.l.bf16 %v696
          %v767 = vunpack.c.h.bf16 %v696
          %v768 = vunpack.c.l.bf16 %v698
          %v769 = vunpack.c.h.bf16 %v698
          %v770 = vmul.f32 %v762, %v712
          %v771 = vmul.f32 %v763, %v713
          %v772 = vmul.f32 %v764, %v714
          %v773 = vmul.f32 %v765, %v715
          %v774 = vmul.f32 %v766, %v716
          %v775 = vmul.f32 %v767, %v717
          %v776 = vmul.f32 %v768, %v718
          %v777 = vmul.f32 %v769, %v719
          %v778 = vadd.f32 %v770, %v771
          %779 = vadd.xlane.f32.xlu0 %v778
          %v780 = vpop.xlane.xlu0 %779
          %v781 = vadd.f32 %v772, %v773
          %782 = vadd.xlane.f32.xlu0 %v781
          %v783 = vpop.xlane.xlu0 %782
          %v784 = vadd.f32 %v774, %v775
          %785 = vadd.xlane.f32.xlu0 %v784
          %v786 = vpop.xlane.xlu0 %785
          %v787 = vadd.f32 %v776, %v777
          %788 = vadd.xlane.f32.xlu0 %v787
          %v789 = vpop.xlane.xlu0 %788
          %v790 = vadd.f32 %v780, %v783
          %v791 = vadd.f32 %v790, %v786
          %v792 = vadd.f32 %v791, %v789
          %v793 = vrot.slane %v792, 4
          %v794 = vadd.f32 %v792, %v793
          %v795 = vrot.slane %v794, 2
          %v796 = vadd.f32 %v794, %v795
          %v797 = vrot.slane %v796, 1
          %v798 = vadd.f32 %v796, %v797
          %v799 = vld [vmem:[#allocation3] sm:$0x1]
          %v800 = vadd.f32 %v798, %v799
          %v801 = vtanh.pop %v800
          %802 = vst.msk [vmem:[%s8 + $0x1] sm:$0x1] %vm760, %v801
          %v803 = vld [vmem:[#allocation9] sm:$0x3]
          %v805 = vperm.slane %v803, 0
          %v806 = vperm.slane %v803, 1
          %v809 = vadd.f32 %v805, 0.0
          %v810 = vadd.f32 %v806, 0.0
          %v813 = vrot.slane %v810, 6
          %vm814 = vcmask 1041408
          %v815 = vsel %vm814, %v809, %v813
          %817 = vst [vmem:[#allocation12] sm:$0xf] %v815
        $region68: #{mixed_precision_forward.1} parent=47 // pred_fallthru
          _
        %s818 = smul.u32 %s28, 8
        %s819 = smul.addr %s818, 4
        %s820 = scalar_lea.vmem [#allocation2], %s819
        %v821 = vld [vmem:[%s820] sm:$0xff]
        %v822 = vld [vmem:[%s820 + $0x8] sm:$0xff]
        %v823 = vld [vmem:[%s820 + $0x10] sm:$0xff]
        %v824 = vld [vmem:[%s820 + $0x18] sm:$0xff]
        %v825 = vld [vmem:[%s323] sm:$0xff]
        %v826 = vld [vmem:[%s323 + $0x8] sm:$0xff]
        %v827 = vld [vmem:[%s323 + $0x10] sm:$0xff]
        %v828 = vld [vmem:[%s323 + $0x18] sm:$0xff]
        %v829 = vld [vmem:[%s323 + $0x20] sm:$0xff]
        %v830 = vld [vmem:[%s323 + $0x28] sm:$0xff]
        %v831 = vld [vmem:[%s323 + $0x30] sm:$0xff]
        %v832 = vld [vmem:[%s323 + $0x38] sm:$0xff]
        %v833 = vld [vmem:[%s323 + $0x40] sm:$0xff]
        %v834 = vld [vmem:[%s323 + $0x48] sm:$0xff]
        %v835 = vld [vmem:[%s323 + $0x50] sm:$0xff]
        %v836 = vld [vmem:[%s323 + $0x58] sm:$0xff]
        %v837 = vld [vmem:[%s323 + $0x60] sm:$0xff]
        %v838 = vld [vmem:[%s323 + $0x68] sm:$0xff]
        %v839 = vld [vmem:[%s323 + $0x70] sm:$0xff]
        %v840 = vld [vmem:[%s323 + $0x78] sm:$0xff]
        %v841 = vld [vmem:[%s323 + $0x80] sm:$0xff]
        %v842 = vld [vmem:[%s323 + $0x88] sm:$0xff]
        %v843 = vld [vmem:[%s323 + $0x90] sm:$0xff]
        %v844 = vld [vmem:[%s323 + $0x98] sm:$0xff]
        %v845 = vld [vmem:[%s323 + $0xa0] sm:$0xff]
        %v846 = vld [vmem:[%s323 + $0xa8] sm:$0xff]
        %v847 = vld [vmem:[%s323 + $0xb0] sm:$0xff]
        %v848 = vld [vmem:[%s323 + $0xb8] sm:$0xff]
        %v849 = vld [vmem:[%s323 + $0xc0] sm:$0xff]
        %v850 = vld [vmem:[%s323 + $0xc8] sm:$0xff]
        %v851 = vld [vmem:[%s323 + $0xd0] sm:$0xff]
        %v852 = vld [vmem:[%s323 + $0xd8] sm:$0xff]
        %v853 = vld [vmem:[%s323 + $0xe0] sm:$0xff]
        %v854 = vld [vmem:[%s323 + $0xe8] sm:$0xff]
        %v855 = vld [vmem:[%s323 + $0xf0] sm:$0xff]
        %v856 = vld [vmem:[%s323 + $0xf8] sm:$0xff]
        %v857 = vld [vmem:[%s323 + $0x100] sm:$0xff]
        %v858 = vld [vmem:[%s323 + $0x108] sm:$0xff]
        %v859 = vld [vmem:[%s323 + $0x110] sm:$0xff]
        %v860 = vld [vmem:[%s323 + $0x118] sm:$0xff]
        %v861 = vld [vmem:[%s323 + $0x120] sm:$0xff]
        %v862 = vld [vmem:[%s323 + $0x128] sm:$0xff]
        %v863 = vld [vmem:[%s323 + $0x130] sm:$0xff]
        %v864 = vld [vmem:[%s323 + $0x138] sm:$0xff]
        %v865 = vld [vmem:[%s323 + $0x140] sm:$0xff]
        %v866 = vld [vmem:[%s323 + $0x148] sm:$0xff]
        %v867 = vld [vmem:[%s323 + $0x150] sm:$0xff]
        %v868 = vld [vmem:[%s323 + $0x158] sm:$0xff]
        %v869 = vld [vmem:[%s323 + $0x160] sm:$0xff]
        %v870 = vld [vmem:[%s323 + $0x168] sm:$0xff]
        %v871 = vld [vmem:[%s323 + $0x170] sm:$0xff]
        %v872 = vld [vmem:[%s323 + $0x178] sm:$0xff]
        %v873 = vld [vmem:[%s323 + $0x180] sm:$0xff]
        %v874 = vld [vmem:[%s323 + $0x188] sm:$0xff]
        %v875 = vld [vmem:[%s323 + $0x190] sm:$0xff]
        %v876 = vld [vmem:[%s323 + $0x198] sm:$0xff]
        %v877 = vld [vmem:[%s323 + $0x1a0] sm:$0xff]
        %v878 = vld [vmem:[%s323 + $0x1a8] sm:$0xff]
        %v879 = vld [vmem:[%s323 + $0x1b0] sm:$0xff]
        %v880 = vld [vmem:[%s323 + $0x1b8] sm:$0xff]
        %v881 = vld [vmem:[%s323 + $0x1c0] sm:$0xff]
        %v882 = vld [vmem:[%s323 + $0x1c8] sm:$0xff]
        %v883 = vld [vmem:[%s323 + $0x1d0] sm:$0xff]
        %v884 = vld [vmem:[%s323 + $0x1d8] sm:$0xff]
        %v885 = vld [vmem:[%s323 + $0x1e0] sm:$0xff]
        %v886 = vld [vmem:[%s323 + $0x1e8] sm:$0xff]
        %v887 = vld [vmem:[%s323 + $0x1f0] sm:$0xff]
        %v888 = vld [vmem:[%s323 + $0x1f8] sm:$0xff]
        %v889 = vld [vmem:[%s323 + $0x200] sm:$0xff]
        %v890 = vld [vmem:[%s323 + $0x208] sm:$0xff]
        %v891 = vld [vmem:[%s323 + $0x210] sm:$0xff]
        %v892 = vld [vmem:[%s323 + $0x218] sm:$0xff]
        %v893 = vld [vmem:[%s323 + $0x220] sm:$0xff]
        %v894 = vld [vmem:[%s323 + $0x228] sm:$0xff]
        %v895 = vld [vmem:[%s323 + $0x230] sm:$0xff]
        %v896 = vld [vmem:[%s323 + $0x238] sm:$0xff]
        %v897 = vld [vmem:[%s323 + $0x240] sm:$0xff]
        %v898 = vld [vmem:[%s323 + $0x248] sm:$0xff]
        %v899 = vld [vmem:[%s323 + $0x250] sm:$0xff]
        %v900 = vld [vmem:[%s323 + $0x258] sm:$0xff]
        %v901 = vld [vmem:[%s323 + $0x260] sm:$0xff]
        %v902 = vld [vmem:[%s323 + $0x268] sm:$0xff]
        %v903 = vld [vmem:[%s323 + $0x270] sm:$0xff]
        %v904 = vld [vmem:[%s323 + $0x278] sm:$0xff]
        %v905 = vld [vmem:[%s323 + $0x280] sm:$0xff]
        %v906 = vld [vmem:[%s323 + $0x288] sm:$0xff]
        %v907 = vld [vmem:[%s323 + $0x290] sm:$0xff]
        %v908 = vld [vmem:[%s323 + $0x298] sm:$0xff]
        %v909 = vld [vmem:[%s323 + $0x2a0] sm:$0xff]
        %v910 = vld [vmem:[%s323 + $0x2a8] sm:$0xff]
        %v911 = vld [vmem:[%s323 + $0x2b0] sm:$0xff]
        %v912 = vld [vmem:[%s323 + $0x2b8] sm:$0xff]
        %v913 = vld [vmem:[%s323 + $0x2c0] sm:$0xff]
        %v914 = vld [vmem:[%s323 + $0x2c8] sm:$0xff]
        %v915 = vld [vmem:[%s323 + $0x2d0] sm:$0xff]
        %v916 = vld [vmem:[%s323 + $0x2d8] sm:$0xff]
        %v917 = vld [vmem:[%s323 + $0x2e0] sm:$0xff]
        %v918 = vld [vmem:[%s323 + $0x2e8] sm:$0xff]
        %v919 = vld [vmem:[%s323 + $0x2f0] sm:$0xff]
        %v920 = vld [vmem:[%s323 + $0x2f8] sm:$0xff]
        %v921 = vld [vmem:[%s323 + $0x300] sm:$0xff]
        %v922 = vld [vmem:[%s323 + $0x308] sm:$0xff]
        %v923 = vld [vmem:[%s323 + $0x310] sm:$0xff]
        %v924 = vld [vmem:[%s323 + $0x318] sm:$0xff]
        %v925 = vld [vmem:[%s323 + $0x320] sm:$0xff]
        %v926 = vld [vmem:[%s323 + $0x328] sm:$0xff]
        %v927 = vld [vmem:[%s323 + $0x330] sm:$0xff]
        %v928 = vld [vmem:[%s323 + $0x338] sm:$0xff]
        %v929 = vld [vmem:[%s323 + $0x340] sm:$0xff]
        %v930 = vld [vmem:[%s323 + $0x348] sm:$0xff]
        %v931 = vld [vmem:[%s323 + $0x350] sm:$0xff]
        %v932 = vld [vmem:[%s323 + $0x358] sm:$0xff]
        %v933 = vld [vmem:[%s323 + $0x360] sm:$0xff]
        %v934 = vld [vmem:[%s323 + $0x368] sm:$0xff]
        %v935 = vld [vmem:[%s323 + $0x370] sm:$0xff]
        %v936 = vld [vmem:[%s323 + $0x378] sm:$0xff]
        %v937 = vld [vmem:[%s323 + $0x380] sm:$0xff]
        %v938 = vld [vmem:[%s323 + $0x388] sm:$0xff]
        %v939 = vld [vmem:[%s323 + $0x390] sm:$0xff]
        %v940 = vld [vmem:[%s323 + $0x398] sm:$0xff]
        %v941 = vld [vmem:[%s323 + $0x3a0] sm:$0xff]
        %v942 = vld [vmem:[%s323 + $0x3a8] sm:$0xff]
        %v943 = vld [vmem:[%s323 + $0x3b0] sm:$0xff]
        %v944 = vld [vmem:[%s323 + $0x3b8] sm:$0xff]
        %v945 = vld [vmem:[%s323 + $0x3c0] sm:$0xff]
        %v946 = vld [vmem:[%s323 + $0x3c8] sm:$0xff]
        %v947 = vld [vmem:[%s323 + $0x3d0] sm:$0xff]
        %v948 = vld [vmem:[%s323 + $0x3d8] sm:$0xff]
        %v949 = vld [vmem:[%s323 + $0x3e0] sm:$0xff]
        %v950 = vld [vmem:[%s323 + $0x3e8] sm:$0xff]
        %v951 = vld [vmem:[%s323 + $0x3f0] sm:$0xff]
        %v952 = vld [vmem:[%s323 + $0x3f8] sm:$0xff]
        %v953 = vld [vmem:[%s323 + $0x400] sm:$0xff]
        %v954 = vld [vmem:[%s323 + $0x408] sm:$0xff]
        %v955 = vld [vmem:[%s323 + $0x410] sm:$0xff]
        %v956 = vld [vmem:[%s323 + $0x418] sm:$0xff]
        %v957 = vld [vmem:[%s323 + $0x420] sm:$0xff]
        %v958 = vld [vmem:[%s323 + $0x428] sm:$0xff]
        %v959 = vld [vmem:[%s323 + $0x430] sm:$0xff]
        %v960 = vld [vmem:[%s323 + $0x438] sm:$0xff]
        %v961 = vld [vmem:[%s323 + $0x440] sm:$0xff]
        %v962 = vld [vmem:[%s323 + $0x448] sm:$0xff]
        %v963 = vld [vmem:[%s323 + $0x450] sm:$0xff]
        %v964 = vld [vmem:[%s323 + $0x458] sm:$0xff]
        %v965 = vld [vmem:[%s323 + $0x460] sm:$0xff]
        %v966 = vld [vmem:[%s323 + $0x468] sm:$0xff]
        %v967 = vld [vmem:[%s323 + $0x470] sm:$0xff]
        %v968 = vld [vmem:[%s323 + $0x478] sm:$0xff]
        %v969 = vld [vmem:[%s323 + $0x480] sm:$0xff]
        %v970 = vld [vmem:[%s323 + $0x488] sm:$0xff]
        %v971 = vld [vmem:[%s323 + $0x490] sm:$0xff]
        %v972 = vld [vmem:[%s323 + $0x498] sm:$0xff]
        %v973 = vld [vmem:[%s323 + $0x4a0] sm:$0xff]
        %v974 = vld [vmem:[%s323 + $0x4a8] sm:$0xff]
        %v975 = vld [vmem:[%s323 + $0x4b0] sm:$0xff]
        %v976 = vld [vmem:[%s323 + $0x4b8] sm:$0xff]
        %v977 = vld [vmem:[%s323 + $0x4c0] sm:$0xff]
        %v978 = vld [vmem:[%s323 + $0x4c8] sm:$0xff]
        %v979 = vld [vmem:[%s323 + $0x4d0] sm:$0xff]
        %v980 = vld [vmem:[%s323 + $0x4d8] sm:$0xff]
        %v981 = vld [vmem:[%s323 + $0x4e0] sm:$0xff]
        %v982 = vld [vmem:[%s323 + $0x4e8] sm:$0xff]
        %v983 = vld [vmem:[%s323 + $0x4f0] sm:$0xff]
        %v984 = vld [vmem:[%s323 + $0x4f8] sm:$0xff]
        %v985 = vld [vmem:[%s323 + $0x500] sm:$0xff]
        %v986 = vld [vmem:[%s323 + $0x508] sm:$0xff]
        %v987 = vld [vmem:[%s323 + $0x510] sm:$0xff]
        %v988 = vld [vmem:[%s323 + $0x518] sm:$0xff]
        %v989 = vld [vmem:[%s323 + $0x520] sm:$0xff]
        %v990 = vld [vmem:[%s323 + $0x528] sm:$0xff]
        %v991 = vld [vmem:[%s323 + $0x530] sm:$0xff]
        %v992 = vld [vmem:[%s323 + $0x538] sm:$0xff]
        %v993 = vld [vmem:[%s323 + $0x540] sm:$0xff]
        %v994 = vld [vmem:[%s323 + $0x548] sm:$0xff]
        %v995 = vld [vmem:[%s323 + $0x550] sm:$0xff]
        %v996 = vld [vmem:[%s323 + $0x558] sm:$0xff]
        %v997 = vld [vmem:[%s323 + $0x560] sm:$0xff]
        %v998 = vld [vmem:[%s323 + $0x568] sm:$0xff]
        %v999 = vld [vmem:[%s323 + $0x570] sm:$0xff]
        %v1000 = vld [vmem:[%s323 + $0x578] sm:$0xff]
        %v1001 = vld [vmem:[%s323 + $0x580] sm:$0xff]
        %v1002 = vld [vmem:[%s323 + $0x588] sm:$0xff]
        %v1003 = vld [vmem:[%s323 + $0x590] sm:$0xff]
        %v1004 = vld [vmem:[%s323 + $0x598] sm:$0xff]
        %v1005 = vld [vmem:[%s323 + $0x5a0] sm:$0xff]
        %v1006 = vld [vmem:[%s323 + $0x5a8] sm:$0xff]
        %v1007 = vld [vmem:[%s323 + $0x5b0] sm:$0xff]
        %v1008 = vld [vmem:[%s323 + $0x5b8] sm:$0xff]
        %v1009 = vld [vmem:[%s323 + $0x5c0] sm:$0xff]
        %v1010 = vld [vmem:[%s323 + $0x5c8] sm:$0xff]
        %v1011 = vld [vmem:[%s323 + $0x5d0] sm:$0xff]
        %v1012 = vld [vmem:[%s323 + $0x5d8] sm:$0xff]
        %v1013 = vld [vmem:[%s323 + $0x5e0] sm:$0xff]
        %v1014 = vld [vmem:[%s323 + $0x5e8] sm:$0xff]
        %v1015 = vld [vmem:[%s323 + $0x5f0] sm:$0xff]
        %v1016 = vld [vmem:[%s323 + $0x5f8] sm:$0xff]
        %v1017 = vld [vmem:[%s323 + $0x600] sm:$0xff]
        %v1018 = vld [vmem:[%s323 + $0x608] sm:$0xff]
        %v1019 = vld [vmem:[%s323 + $0x610] sm:$0xff]
        %v1020 = vld [vmem:[%s323 + $0x618] sm:$0xff]
        %v1021 = vld [vmem:[%s323 + $0x620] sm:$0xff]
        %v1022 = vld [vmem:[%s323 + $0x628] sm:$0xff]
        %v1023 = vld [vmem:[%s323 + $0x630] sm:$0xff]
        %v1024 = vld [vmem:[%s323 + $0x638] sm:$0xff]
        %v1025 = vld [vmem:[%s323 + $0x640] sm:$0xff]
        %v1026 = vld [vmem:[%s323 + $0x648] sm:$0xff]
        %v1027 = vld [vmem:[%s323 + $0x650] sm:$0xff]
        %v1028 = vld [vmem:[%s323 + $0x658] sm:$0xff]
        %v1029 = vld [vmem:[%s323 + $0x660] sm:$0xff]
        %v1030 = vld [vmem:[%s323 + $0x668] sm:$0xff]
        %v1031 = vld [vmem:[%s323 + $0x670] sm:$0xff]
        %v1032 = vld [vmem:[%s323 + $0x678] sm:$0xff]
        %v1033 = vld [vmem:[%s323 + $0x680] sm:$0xff]
        %v1034 = vld [vmem:[%s323 + $0x688] sm:$0xff]
        %v1035 = vld [vmem:[%s323 + $0x690] sm:$0xff]
        %v1036 = vld [vmem:[%s323 + $0x698] sm:$0xff]
        %v1037 = vld [vmem:[%s323 + $0x6a0] sm:$0xff]
        %v1038 = vld [vmem:[%s323 + $0x6a8] sm:$0xff]
        %v1039 = vld [vmem:[%s323 + $0x6b0] sm:$0xff]
        %v1040 = vld [vmem:[%s323 + $0x6b8] sm:$0xff]
        %v1041 = vld [vmem:[%s323 + $0x6c0] sm:$0xff]
        %v1042 = vld [vmem:[%s323 + $0x6c8] sm:$0xff]
        %v1043 = vld [vmem:[%s323 + $0x6d0] sm:$0xff]
        %v1044 = vld [vmem:[%s323 + $0x6d8] sm:$0xff]
        %v1045 = vld [vmem:[%s323 + $0x6e0] sm:$0xff]
        %v1046 = vld [vmem:[%s323 + $0x6e8] sm:$0xff]
        %v1047 = vld [vmem:[%s323 + $0x6f0] sm:$0xff]
        %v1048 = vld [vmem:[%s323 + $0x6f8] sm:$0xff]
        %v1049 = vld [vmem:[%s323 + $0x700] sm:$0xff]
        %v1050 = vld [vmem:[%s323 + $0x708] sm:$0xff]
        %v1051 = vld [vmem:[%s323 + $0x710] sm:$0xff]
        %v1052 = vld [vmem:[%s323 + $0x718] sm:$0xff]
        %v1053 = vld [vmem:[%s323 + $0x720] sm:$0xff]
        %v1054 = vld [vmem:[%s323 + $0x728] sm:$0xff]
        %v1055 = vld [vmem:[%s323 + $0x730] sm:$0xff]
        %v1056 = vld [vmem:[%s323 + $0x738] sm:$0xff]
        %v1057 = vld [vmem:[%s323 + $0x740] sm:$0xff]
        %v1058 = vld [vmem:[%s323 + $0x748] sm:$0xff]
        %v1059 = vld [vmem:[%s323 + $0x750] sm:$0xff]
        %v1060 = vld [vmem:[%s323 + $0x758] sm:$0xff]
        %v1061 = vld [vmem:[%s323 + $0x760] sm:$0xff]
        %v1062 = vld [vmem:[%s323 + $0x768] sm:$0xff]
        %v1063 = vld [vmem:[%s323 + $0x770] sm:$0xff]
        %v1064 = vld [vmem:[%s323 + $0x778] sm:$0xff]
        %v1065 = vld [vmem:[%s323 + $0x780] sm:$0xff]
        %v1066 = vld [vmem:[%s323 + $0x788] sm:$0xff]
        %v1067 = vld [vmem:[%s323 + $0x790] sm:$0xff]
        %v1068 = vld [vmem:[%s323 + $0x798] sm:$0xff]
        %v1069 = vld [vmem:[%s323 + $0x7a0] sm:$0xff]
        %v1070 = vld [vmem:[%s323 + $0x7a8] sm:$0xff]
        %v1071 = vld [vmem:[%s323 + $0x7b0] sm:$0xff]
        %v1072 = vld [vmem:[%s323 + $0x7b8] sm:$0xff]
        %v1073 = vld [vmem:[%s323 + $0x7c0] sm:$0xff]
        %v1074 = vld [vmem:[%s323 + $0x7c8] sm:$0xff]
        %v1075 = vld [vmem:[%s323 + $0x7d0] sm:$0xff]
        %v1076 = vld [vmem:[%s323 + $0x7d8] sm:$0xff]
        %v1077 = vld [vmem:[%s323 + $0x7e0] sm:$0xff]
        %v1078 = vld [vmem:[%s323 + $0x7e8] sm:$0xff]
        %v1079 = vld [vmem:[%s323 + $0x7f0] sm:$0xff]
        %v1080 = vld [vmem:[%s323 + $0x7f8] sm:$0xff]
        %v1081 = vld [vmem:[%s323 + $0x800] sm:$0xff]
        %v1082 = vld [vmem:[%s323 + $0x808] sm:$0xff]
        %v1083 = vld [vmem:[%s323 + $0x810] sm:$0xff]
        %v1084 = vld [vmem:[%s323 + $0x818] sm:$0xff]
        %v1085 = vld [vmem:[%s323 + $0x820] sm:$0xff]
        %v1086 = vld [vmem:[%s323 + $0x828] sm:$0xff]
        %v1087 = vld [vmem:[%s323 + $0x830] sm:$0xff]
        %v1088 = vld [vmem:[%s323 + $0x838] sm:$0xff]
        %v1089 = vld [vmem:[%s323 + $0x840] sm:$0xff]
        %v1090 = vld [vmem:[%s323 + $0x848] sm:$0xff]
        %v1091 = vld [vmem:[%s323 + $0x850] sm:$0xff]
        %v1092 = vld [vmem:[%s323 + $0x858] sm:$0xff]
        %v1093 = vld [vmem:[%s323 + $0x860] sm:$0xff]
        %v1094 = vld [vmem:[%s323 + $0x868] sm:$0xff]
        %v1095 = vld [vmem:[%s323 + $0x870] sm:$0xff]
        %v1096 = vld [vmem:[%s323 + $0x878] sm:$0xff]
        %v1097 = vld [vmem:[%s323 + $0x880] sm:$0xff]
        %v1098 = vld [vmem:[%s323 + $0x888] sm:$0xff]
        %v1099 = vld [vmem:[%s323 + $0x890] sm:$0xff]
        %v1100 = vld [vmem:[%s323 + $0x898] sm:$0xff]
        %v1101 = vld [vmem:[%s323 + $0x8a0] sm:$0xff]
        %v1102 = vld [vmem:[%s323 + $0x8a8] sm:$0xff]
        %v1103 = vld [vmem:[%s323 + $0x8b0] sm:$0xff]
        %v1104 = vld [vmem:[%s323 + $0x8b8] sm:$0xff]
        %v1105 = vld [vmem:[%s323 + $0x8c0] sm:$0xff]
        %v1106 = vld [vmem:[%s323 + $0x8c8] sm:$0xff]
        %v1107 = vld [vmem:[%s323 + $0x8d0] sm:$0xff]
        %v1108 = vld [vmem:[%s323 + $0x8d8] sm:$0xff]
        %v1109 = vld [vmem:[%s323 + $0x8e0] sm:$0xff]
        %v1110 = vld [vmem:[%s323 + $0x8e8] sm:$0xff]
        %v1111 = vld [vmem:[%s323 + $0x8f0] sm:$0xff]
        %v1112 = vld [vmem:[%s323 + $0x8f8] sm:$0xff]
        %v1113 = vld [vmem:[%s323 + $0x900] sm:$0xff]
        %v1114 = vld [vmem:[%s323 + $0x908] sm:$0xff]
        %v1115 = vld [vmem:[%s323 + $0x910] sm:$0xff]
        %v1116 = vld [vmem:[%s323 + $0x918] sm:$0xff]
        %v1117 = vld [vmem:[%s323 + $0x920] sm:$0xff]
        %v1118 = vld [vmem:[%s323 + $0x928] sm:$0xff]
        %v1119 = vld [vmem:[%s323 + $0x930] sm:$0xff]
        %v1120 = vld [vmem:[%s323 + $0x938] sm:$0xff]
        %v1121 = vld [vmem:[%s323 + $0x940] sm:$0xff]
        %v1122 = vld [vmem:[%s323 + $0x948] sm:$0xff]
        %v1123 = vld [vmem:[%s323 + $0x950] sm:$0xff]
        %v1124 = vld [vmem:[%s323 + $0x958] sm:$0xff]
        %v1125 = vld [vmem:[%s323 + $0x960] sm:$0xff]
        %v1126 = vld [vmem:[%s323 + $0x968] sm:$0xff]
        %v1127 = vld [vmem:[%s323 + $0x970] sm:$0xff]
        %v1128 = vld [vmem:[%s323 + $0x978] sm:$0xff]
        %v1129 = vld [vmem:[%s323 + $0x980] sm:$0xff]
        %v1130 = vld [vmem:[%s323 + $0x988] sm:$0xff]
        %v1131 = vld [vmem:[%s323 + $0x990] sm:$0xff]
        %v1132 = vld [vmem:[%s323 + $0x998] sm:$0xff]
        %v1133 = vld [vmem:[%s323 + $0x9a0] sm:$0xff]
        %v1134 = vld [vmem:[%s323 + $0x9a8] sm:$0xff]
        %v1135 = vld [vmem:[%s323 + $0x9b0] sm:$0xff]
        %v1136 = vld [vmem:[%s323 + $0x9b8] sm:$0xff]
        %v1137 = vld [vmem:[%s323 + $0x9c0] sm:$0xff]
        %v1138 = vld [vmem:[%s323 + $0x9c8] sm:$0xff]
        %v1139 = vld [vmem:[%s323 + $0x9d0] sm:$0xff]
        %v1140 = vld [vmem:[%s323 + $0x9d8] sm:$0xff]
        %v1141 = vld [vmem:[%s323 + $0x9e0] sm:$0xff]
        %v1142 = vld [vmem:[%s323 + $0x9e8] sm:$0xff]
        %v1143 = vld [vmem:[%s323 + $0x9f0] sm:$0xff]
        %v1144 = vld [vmem:[%s323 + $0x9f8] sm:$0xff]
        %v1145 = vld [vmem:[%s323 + $0xa00] sm:$0xff]
        %v1146 = vld [vmem:[%s323 + $0xa08] sm:$0xff]
        %v1147 = vld [vmem:[%s323 + $0xa10] sm:$0xff]
        %v1148 = vld [vmem:[%s323 + $0xa18] sm:$0xff]
        %v1149 = vld [vmem:[%s323 + $0xa20] sm:$0xff]
        %v1150 = vld [vmem:[%s323 + $0xa28] sm:$0xff]
        %v1151 = vld [vmem:[%s323 + $0xa30] sm:$0xff]
        %v1152 = vld [vmem:[%s323 + $0xa38] sm:$0xff]
        %v1153 = vld [vmem:[%s323 + $0xa40] sm:$0xff]
        %v1154 = vld [vmem:[%s323 + $0xa48] sm:$0xff]
        %v1155 = vld [vmem:[%s323 + $0xa50] sm:$0xff]
        %v1156 = vld [vmem:[%s323 + $0xa58] sm:$0xff]
        %v1157 = vld [vmem:[%s323 + $0xa60] sm:$0xff]
        %v1158 = vld [vmem:[%s323 + $0xa68] sm:$0xff]
        %v1159 = vld [vmem:[%s323 + $0xa70] sm:$0xff]
        %v1160 = vld [vmem:[%s323 + $0xa78] sm:$0xff]
        %v1161 = vld [vmem:[%s323 + $0xa80] sm:$0xff]
        %v1162 = vld [vmem:[%s323 + $0xa88] sm:$0xff]
        %v1163 = vld [vmem:[%s323 + $0xa90] sm:$0xff]
        %v1164 = vld [vmem:[%s323 + $0xa98] sm:$0xff]
        %v1165 = vld [vmem:[%s323 + $0xaa0] sm:$0xff]
        %v1166 = vld [vmem:[%s323 + $0xaa8] sm:$0xff]
        %v1167 = vld [vmem:[%s323 + $0xab0] sm:$0xff]
        %v1168 = vld [vmem:[%s323 + $0xab8] sm:$0xff]
        %v1169 = vld [vmem:[%s323 + $0xac0] sm:$0xff]
        %v1170 = vld [vmem:[%s323 + $0xac8] sm:$0xff]
        %v1171 = vld [vmem:[%s323 + $0xad0] sm:$0xff]
        %v1172 = vld [vmem:[%s323 + $0xad8] sm:$0xff]
        %v1173 = vld [vmem:[%s323 + $0xae0] sm:$0xff]
        %v1174 = vld [vmem:[%s323 + $0xae8] sm:$0xff]
        %v1175 = vld [vmem:[%s323 + $0xaf0] sm:$0xff]
        %v1176 = vld [vmem:[%s323 + $0xaf8] sm:$0xff]
        %v1177 = vld [vmem:[%s323 + $0xb00] sm:$0xff]
        %v1178 = vld [vmem:[%s323 + $0xb08] sm:$0xff]
        %v1179 = vld [vmem:[%s323 + $0xb10] sm:$0xff]
        %v1180 = vld [vmem:[%s323 + $0xb18] sm:$0xff]
        %v1181 = vld [vmem:[%s323 + $0xb20] sm:$0xff]
        %v1182 = vld [vmem:[%s323 + $0xb28] sm:$0xff]
        %v1183 = vld [vmem:[%s323 + $0xb30] sm:$0xff]
        %v1184 = vld [vmem:[%s323 + $0xb38] sm:$0xff]
        %v1185 = vld [vmem:[%s323 + $0xb40] sm:$0xff]
        %v1186 = vld [vmem:[%s323 + $0xb48] sm:$0xff]
        %v1187 = vld [vmem:[%s323 + $0xb50] sm:$0xff]
        %v1188 = vld [vmem:[%s323 + $0xb58] sm:$0xff]
        %v1189 = vld [vmem:[%s323 + $0xb60] sm:$0xff]
        %v1190 = vld [vmem:[%s323 + $0xb68] sm:$0xff]
        %v1191 = vld [vmem:[%s323 + $0xb70] sm:$0xff]
        %v1192 = vld [vmem:[%s323 + $0xb78] sm:$0xff]
        %v1193 = vld [vmem:[%s323 + $0xb80] sm:$0xff]
        %v1194 = vld [vmem:[%s323 + $0xb88] sm:$0xff]
        %v1195 = vld [vmem:[%s323 + $0xb90] sm:$0xff]
        %v1196 = vld [vmem:[%s323 + $0xb98] sm:$0xff]
        %v1197 = vld [vmem:[%s323 + $0xba0] sm:$0xff]
        %v1198 = vld [vmem:[%s323 + $0xba8] sm:$0xff]
        %v1199 = vld [vmem:[%s323 + $0xbb0] sm:$0xff]
        %v1200 = vld [vmem:[%s323 + $0xbb8] sm:$0xff]
        %v1201 = vld [vmem:[%s323 + $0xbc0] sm:$0xff]
        %v1202 = vld [vmem:[%s323 + $0xbc8] sm:$0xff]
        %v1203 = vld [vmem:[%s323 + $0xbd0] sm:$0xff]
        %v1204 = vld [vmem:[%s323 + $0xbd8] sm:$0xff]
        %v1205 = vld [vmem:[%s323 + $0xbe0] sm:$0xff]
        %v1206 = vld [vmem:[%s323 + $0xbe8] sm:$0xff]
        %v1207 = vld [vmem:[%s323 + $0xbf0] sm:$0xff]
        %v1208 = vld [vmem:[%s323 + $0xbf8] sm:$0xff]
        %v1209 = vld [vmem:[%s323 + $0xc00] sm:$0xff]
        %v1210 = vld [vmem:[%s323 + $0xc08] sm:$0xff]
        %v1211 = vld [vmem:[%s323 + $0xc10] sm:$0xff]
        %v1212 = vld [vmem:[%s323 + $0xc18] sm:$0xff]
        %v1213 = vld [vmem:[%s323 + $0xc20] sm:$0xff]
        %v1214 = vld [vmem:[%s323 + $0xc28] sm:$0xff]
        %v1215 = vld [vmem:[%s323 + $0xc30] sm:$0xff]
        %v1216 = vld [vmem:[%s323 + $0xc38] sm:$0xff]
        %v1217 = vld [vmem:[%s323 + $0xc40] sm:$0xff]
        %v1218 = vld [vmem:[%s323 + $0xc48] sm:$0xff]
        %v1219 = vld [vmem:[%s323 + $0xc50] sm:$0xff]
        %v1220 = vld [vmem:[%s323 + $0xc58] sm:$0xff]
        %v1221 = vld [vmem:[%s323 + $0xc60] sm:$0xff]
        %v1222 = vld [vmem:[%s323 + $0xc68] sm:$0xff]
        %v1223 = vld [vmem:[%s323 + $0xc70] sm:$0xff]
        %v1224 = vld [vmem:[%s323 + $0xc78] sm:$0xff]
        %v1225 = vld [vmem:[%s323 + $0xc80] sm:$0xff]
        %v1226 = vld [vmem:[%s323 + $0xc88] sm:$0xff]
        %v1227 = vld [vmem:[%s323 + $0xc90] sm:$0xff]
        %v1228 = vld [vmem:[%s323 + $0xc98] sm:$0xff]
        %v1229 = vld [vmem:[%s323 + $0xca0] sm:$0xff]
        %v1230 = vld [vmem:[%s323 + $0xca8] sm:$0xff]
        %v1231 = vld [vmem:[%s323 + $0xcb0] sm:$0xff]
        %v1232 = vld [vmem:[%s323 + $0xcb8] sm:$0xff]
        %v1233 = vld [vmem:[%s323 + $0xcc0] sm:$0xff]
        %v1234 = vld [vmem:[%s323 + $0xcc8] sm:$0xff]
        %v1235 = vld [vmem:[%s323 + $0xcd0] sm:$0xff]
        %v1236 = vld [vmem:[%s323 + $0xcd8] sm:$0xff]
        %v1237 = vld [vmem:[%s323 + $0xce0] sm:$0xff]
        %v1238 = vld [vmem:[%s323 + $0xce8] sm:$0xff]
        %v1239 = vld [vmem:[%s323 + $0xcf0] sm:$0xff]
        %v1240 = vld [vmem:[%s323 + $0xcf8] sm:$0xff]
        %v1241 = vld [vmem:[%s323 + $0xd00] sm:$0xff]
        %v1242 = vld [vmem:[%s323 + $0xd08] sm:$0xff]
        %v1243 = vld [vmem:[%s323 + $0xd10] sm:$0xff]
        %v1244 = vld [vmem:[%s323 + $0xd18] sm:$0xff]
        %v1245 = vld [vmem:[%s323 + $0xd20] sm:$0xff]
        %v1246 = vld [vmem:[%s323 + $0xd28] sm:$0xff]
        %v1247 = vld [vmem:[%s323 + $0xd30] sm:$0xff]
        %v1248 = vld [vmem:[%s323 + $0xd38] sm:$0xff]
        %v1249 = vld [vmem:[%s323 + $0xd40] sm:$0xff]
        %v1250 = vld [vmem:[%s323 + $0xd48] sm:$0xff]
        %v1251 = vld [vmem:[%s323 + $0xd50] sm:$0xff]
        %v1252 = vld [vmem:[%s323 + $0xd58] sm:$0xff]
        %v1253 = vld [vmem:[%s323 + $0xd60] sm:$0xff]
        %v1254 = vld [vmem:[%s323 + $0xd68] sm:$0xff]
        %v1255 = vld [vmem:[%s323 + $0xd70] sm:$0xff]
        %v1256 = vld [vmem:[%s323 + $0xd78] sm:$0xff]
        %v1257 = vld [vmem:[%s323 + $0xd80] sm:$0xff]
        %v1258 = vld [vmem:[%s323 + $0xd88] sm:$0xff]
        %v1259 = vld [vmem:[%s323 + $0xd90] sm:$0xff]
        %v1260 = vld [vmem:[%s323 + $0xd98] sm:$0xff]
        %v1261 = vld [vmem:[%s323 + $0xda0] sm:$0xff]
        %v1262 = vld [vmem:[%s323 + $0xda8] sm:$0xff]
        %v1263 = vld [vmem:[%s323 + $0xdb0] sm:$0xff]
        %v1264 = vld [vmem:[%s323 + $0xdb8] sm:$0xff]
        %v1265 = vld [vmem:[%s323 + $0xdc0] sm:$0xff]
        %v1266 = vld [vmem:[%s323 + $0xdc8] sm:$0xff]
        %v1267 = vld [vmem:[%s323 + $0xdd0] sm:$0xff]
        %v1268 = vld [vmem:[%s323 + $0xdd8] sm:$0xff]
        %v1269 = vld [vmem:[%s323 + $0xde0] sm:$0xff]
        %v1270 = vld [vmem:[%s323 + $0xde8] sm:$0xff]
        %v1271 = vld [vmem:[%s323 + $0xdf0] sm:$0xff]
        %v1272 = vld [vmem:[%s323 + $0xdf8] sm:$0xff]
        %v1273 = vld [vmem:[%s323 + $0xe00] sm:$0xff]
        %v1274 = vld [vmem:[%s323 + $0xe08] sm:$0xff]
        %v1275 = vld [vmem:[%s323 + $0xe10] sm:$0xff]
        %v1276 = vld [vmem:[%s323 + $0xe18] sm:$0xff]
        %v1277 = vld [vmem:[%s323 + $0xe20] sm:$0xff]
        %v1278 = vld [vmem:[%s323 + $0xe28] sm:$0xff]
        %v1279 = vld [vmem:[%s323 + $0xe30] sm:$0xff]
        %v1280 = vld [vmem:[%s323 + $0xe38] sm:$0xff]
        %v1281 = vld [vmem:[%s323 + $0xe40] sm:$0xff]
        %v1282 = vld [vmem:[%s323 + $0xe48] sm:$0xff]
        %v1283 = vld [vmem:[%s323 + $0xe50] sm:$0xff]
        %v1284 = vld [vmem:[%s323 + $0xe58] sm:$0xff]
        %v1285 = vld [vmem:[%s323 + $0xe60] sm:$0xff]
        %v1286 = vld [vmem:[%s323 + $0xe68] sm:$0xff]
        %v1287 = vld [vmem:[%s323 + $0xe70] sm:$0xff]
        %v1288 = vld [vmem:[%s323 + $0xe78] sm:$0xff]
        %v1289 = vld [vmem:[%s323 + $0xe80] sm:$0xff]
        %v1290 = vld [vmem:[%s323 + $0xe88] sm:$0xff]
        %v1291 = vld [vmem:[%s323 + $0xe90] sm:$0xff]
        %v1292 = vld [vmem:[%s323 + $0xe98] sm:$0xff]
        %v1293 = vld [vmem:[%s323 + $0xea0] sm:$0xff]
        %v1294 = vld [vmem:[%s323 + $0xea8] sm:$0xff]
        %v1295 = vld [vmem:[%s323 + $0xeb0] sm:$0xff]
        %v1296 = vld [vmem:[%s323 + $0xeb8] sm:$0xff]
        %v1297 = vld [vmem:[%s323 + $0xec0] sm:$0xff]
        %v1298 = vld [vmem:[%s323 + $0xec8] sm:$0xff]
        %v1299 = vld [vmem:[%s323 + $0xed0] sm:$0xff]
        %v1300 = vld [vmem:[%s323 + $0xed8] sm:$0xff]
        %v1301 = vld [vmem:[%s323 + $0xee0] sm:$0xff]
        %v1302 = vld [vmem:[%s323 + $0xee8] sm:$0xff]
        %v1303 = vld [vmem:[%s323 + $0xef0] sm:$0xff]
        %v1304 = vld [vmem:[%s323 + $0xef8] sm:$0xff]
        %v1305 = vld [vmem:[%s323 + $0xf00] sm:$0xff]
        %v1306 = vld [vmem:[%s323 + $0xf08] sm:$0xff]
        %v1307 = vld [vmem:[%s323 + $0xf10] sm:$0xff]
        %v1308 = vld [vmem:[%s323 + $0xf18] sm:$0xff]
        %v1309 = vld [vmem:[%s323 + $0xf20] sm:$0xff]
        %v1310 = vld [vmem:[%s323 + $0xf28] sm:$0xff]
        %v1311 = vld [vmem:[%s323 + $0xf30] sm:$0xff]
        %v1312 = vld [vmem:[%s323 + $0xf38] sm:$0xff]
        %v1313 = vld [vmem:[%s323 + $0xf40] sm:$0xff]
        %v1314 = vld [vmem:[%s323 + $0xf48] sm:$0xff]
        %v1315 = vld [vmem:[%s323 + $0xf50] sm:$0xff]
        %v1316 = vld [vmem:[%s323 + $0xf58] sm:$0xff]
        %v1317 = vld [vmem:[%s323 + $0xf60] sm:$0xff]
        %v1318 = vld [vmem:[%s323 + $0xf68] sm:$0xff]
        %v1319 = vld [vmem:[%s323 + $0xf70] sm:$0xff]
        %v1320 = vld [vmem:[%s323 + $0xf78] sm:$0xff]
        %v1321 = vld [vmem:[%s323 + $0xf80] sm:$0xff]
        %v1322 = vld [vmem:[%s323 + $0xf88] sm:$0xff]
        %v1323 = vld [vmem:[%s323 + $0xf90] sm:$0xff]
        %v1324 = vld [vmem:[%s323 + $0xf98] sm:$0xff]
        %v1325 = vld [vmem:[%s323 + $0xfa0] sm:$0xff]
        %v1326 = vld [vmem:[%s323 + $0xfa8] sm:$0xff]
        %v1327 = vld [vmem:[%s323 + $0xfb0] sm:$0xff]
        %v1328 = vld [vmem:[%s323 + $0xfb8] sm:$0xff]
        %v1329 = vld [vmem:[%s323 + $0xfc0] sm:$0xff]
        %v1330 = vld [vmem:[%s323 + $0xfc8] sm:$0xff]
        %v1331 = vld [vmem:[%s323 + $0xfd0] sm:$0xff]
        %v1332 = vld [vmem:[%s323 + $0xfd8] sm:$0xff]
        %v1333 = vld [vmem:[%s323 + $0xfe0] sm:$0xff]
        %v1334 = vld [vmem:[%s323 + $0xfe8] sm:$0xff]
        %v1335 = vld [vmem:[%s323 + $0xff0] sm:$0xff]
        %v1336 = vld [vmem:[%s323 + $0xff8] sm:$0xff]
        %v1341 = vunpack.c.l.b16 %v821
        %v1342 = vunpack.c.h.b16 %v821
        %v1343 = vunpack.c.l.b16 %v822
        %v1344 = vunpack.c.h.b16 %v822
        %v1345 = vunpack.c.l.b16 %v823
        %v1346 = vunpack.c.h.b16 %v823
        %v1347 = vunpack.c.l.b16 %v824
        %v1348 = vunpack.c.h.b16 %v824
        %v1349 = vpack.c.b16 %v1343, %v1341
        %v1350 = vpack.c.b16 %v1344, %v1342
        %v1351 = vpack.c.b16 %v1347, %v1345
        %v1352 = vpack.c.b16 %v1348, %v1346
        %v1869 = vunpack.c.l.b16 %v825
        %v1870 = vunpack.c.h.b16 %v825
        %v1871 = vunpack.c.l.b16 %v826
        %v1872 = vunpack.c.h.b16 %v826
        %v1873 = vunpack.c.l.b16 %v827
        %v1874 = vunpack.c.h.b16 %v827
        %v1875 = vunpack.c.l.b16 %v828
        %v1876 = vunpack.c.h.b16 %v828
        %v1877 = vunpack.c.l.b16 %v829
        %v1878 = vunpack.c.h.b16 %v829
        %v1879 = vunpack.c.l.b16 %v830
        %v1880 = vunpack.c.h.b16 %v830
        %v1881 = vunpack.c.l.b16 %v831
        %v1882 = vunpack.c.h.b16 %v831
        %v1883 = vunpack.c.l.b16 %v832
        %v1884 = vunpack.c.h.b16 %v832
        %v1885 = vunpack.c.l.b16 %v833
        %v1886 = vunpack.c.h.b16 %v833
        %v1887 = vunpack.c.l.b16 %v834
        %v1888 = vunpack.c.h.b16 %v834
        %v1889 = vunpack.c.l.b16 %v835
        %v1890 = vunpack.c.h.b16 %v835
        %v1891 = vunpack.c.l.b16 %v836
        %v1892 = vunpack.c.h.b16 %v836
        %v1893 = vunpack.c.l.b16 %v837
        %v1894 = vunpack.c.h.b16 %v837
        %v1895 = vunpack.c.l.b16 %v838
        %v1896 = vunpack.c.h.b16 %v838
        %v1897 = vunpack.c.l.b16 %v839
        %v1898 = vunpack.c.h.b16 %v839
        %v1899 = vunpack.c.l.b16 %v840
        %v1900 = vunpack.c.h.b16 %v840
        %v1901 = vunpack.c.l.b16 %v841
        %v1902 = vunpack.c.h.b16 %v841
        %v1903 = vunpack.c.l.b16 %v842
        %v1904 = vunpack.c.h.b16 %v842
        %v1905 = vunpack.c.l.b16 %v843
        %v1906 = vunpack.c.h.b16 %v843
        %v1907 = vunpack.c.l.b16 %v844
        %v1908 = vunpack.c.h.b16 %v844
        %v1909 = vunpack.c.l.b16 %v845
        %v1910 = vunpack.c.h.b16 %v845
        %v1911 = vunpack.c.l.b16 %v846
        %v1912 = vunpack.c.h.b16 %v846
        %v1913 = vunpack.c.l.b16 %v847
        %v1914 = vunpack.c.h.b16 %v847
        %v1915 = vunpack.c.l.b16 %v848
        %v1916 = vunpack.c.h.b16 %v848
        %v1917 = vunpack.c.l.b16 %v849
        %v1918 = vunpack.c.h.b16 %v849
        %v1919 = vunpack.c.l.b16 %v850
        %v1920 = vunpack.c.h.b16 %v850
        %v1921 = vunpack.c.l.b16 %v851
        %v1922 = vunpack.c.h.b16 %v851
        %v1923 = vunpack.c.l.b16 %v852
        %v1924 = vunpack.c.h.b16 %v852
        %v1925 = vunpack.c.l.b16 %v853
        %v1926 = vunpack.c.h.b16 %v853
        %v1927 = vunpack.c.l.b16 %v854
        %v1928 = vunpack.c.h.b16 %v854
        %v1929 = vunpack.c.l.b16 %v855
        %v1930 = vunpack.c.h.b16 %v855
        %v1931 = vunpack.c.l.b16 %v856
        %v1932 = vunpack.c.h.b16 %v856
        %v1933 = vunpack.c.l.b16 %v857
        %v1934 = vunpack.c.h.b16 %v857
        %v1935 = vunpack.c.l.b16 %v858
        %v1936 = vunpack.c.h.b16 %v858
        %v1937 = vunpack.c.l.b16 %v859
        %v1938 = vunpack.c.h.b16 %v859
        %v1939 = vunpack.c.l.b16 %v860
        %v1940 = vunpack.c.h.b16 %v860
        %v1941 = vunpack.c.l.b16 %v861
        %v1942 = vunpack.c.h.b16 %v861
        %v1943 = vunpack.c.l.b16 %v862
        %v1944 = vunpack.c.h.b16 %v862
        %v1945 = vunpack.c.l.b16 %v863
        %v1946 = vunpack.c.h.b16 %v863
        %v1947 = vunpack.c.l.b16 %v864
        %v1948 = vunpack.c.h.b16 %v864
        %v1949 = vunpack.c.l.b16 %v865
        %v1950 = vunpack.c.h.b16 %v865
        %v1951 = vunpack.c.l.b16 %v866
        %v1952 = vunpack.c.h.b16 %v866
        %v1953 = vunpack.c.l.b16 %v867
        %v1954 = vunpack.c.h.b16 %v867
        %v1955 = vunpack.c.l.b16 %v868
        %v1956 = vunpack.c.h.b16 %v868
        %v1957 = vunpack.c.l.b16 %v869
        %v1958 = vunpack.c.h.b16 %v869
        %v1959 = vunpack.c.l.b16 %v870
        %v1960 = vunpack.c.h.b16 %v870
        %v1961 = vunpack.c.l.b16 %v871
        %v1962 = vunpack.c.h.b16 %v871
        %v1963 = vunpack.c.l.b16 %v872
        %v1964 = vunpack.c.h.b16 %v872
        %v1965 = vunpack.c.l.b16 %v873
        %v1966 = vunpack.c.h.b16 %v873
        %v1967 = vunpack.c.l.b16 %v874
        %v1968 = vunpack.c.h.b16 %v874
        %v1969 = vunpack.c.l.b16 %v875
        %v1970 = vunpack.c.h.b16 %v875
        %v1971 = vunpack.c.l.b16 %v876
        %v1972 = vunpack.c.h.b16 %v876
        %v1973 = vunpack.c.l.b16 %v877
        %v1974 = vunpack.c.h.b16 %v877
        %v1975 = vunpack.c.l.b16 %v878
        %v1976 = vunpack.c.h.b16 %v878
        %v1977 = vunpack.c.l.b16 %v879
        %v1978 = vunpack.c.h.b16 %v879
        %v1979 = vunpack.c.l.b16 %v880
        %v1980 = vunpack.c.h.b16 %v880
        %v1981 = vunpack.c.l.b16 %v881
        %v1982 = vunpack.c.h.b16 %v881
        %v1983 = vunpack.c.l.b16 %v882
        %v1984 = vunpack.c.h.b16 %v882
        %v1985 = vunpack.c.l.b16 %v883
        %v1986 = vunpack.c.h.b16 %v883
        %v1987 = vunpack.c.l.b16 %v884
        %v1988 = vunpack.c.h.b16 %v884
        %v1989 = vunpack.c.l.b16 %v885
        %v1990 = vunpack.c.h.b16 %v885
        %v1991 = vunpack.c.l.b16 %v886
        %v1992 = vunpack.c.h.b16 %v886
        %v1993 = vunpack.c.l.b16 %v887
        %v1994 = vunpack.c.h.b16 %v887
        %v1995 = vunpack.c.l.b16 %v888
        %v1996 = vunpack.c.h.b16 %v888
        %v1997 = vunpack.c.l.b16 %v889
        %v1998 = vunpack.c.h.b16 %v889
        %v1999 = vunpack.c.l.b16 %v890
        %v2000 = vunpack.c.h.b16 %v890
        %v2001 = vunpack.c.l.b16 %v891
        %v2002 = vunpack.c.h.b16 %v891
        %v2003 = vunpack.c.l.b16 %v892
        %v2004 = vunpack.c.h.b16 %v892
        %v2005 = vunpack.c.l.b16 %v893
        %v2006 = vunpack.c.h.b16 %v893
        %v2007 = vunpack.c.l.b16 %v894
        %v2008 = vunpack.c.h.b16 %v894
        %v2009 = vunpack.c.l.b16 %v895
        %v2010 = vunpack.c.h.b16 %v895
        %v2011 = vunpack.c.l.b16 %v896
        %v2012 = vunpack.c.h.b16 %v896
        %v2013 = vunpack.c.l.b16 %v897
        %v2014 = vunpack.c.h.b16 %v897
        %v2015 = vunpack.c.l.b16 %v898
        %v2016 = vunpack.c.h.b16 %v898
        %v2017 = vunpack.c.l.b16 %v899
        %v2018 = vunpack.c.h.b16 %v899
        %v2019 = vunpack.c.l.b16 %v900
        %v2020 = vunpack.c.h.b16 %v900
        %v2021 = vunpack.c.l.b16 %v901
        %v2022 = vunpack.c.h.b16 %v901
        %v2023 = vunpack.c.l.b16 %v902
        %v2024 = vunpack.c.h.b16 %v902
        %v2025 = vunpack.c.l.b16 %v903
        %v2026 = vunpack.c.h.b16 %v903
        %v2027 = vunpack.c.l.b16 %v904
        %v2028 = vunpack.c.h.b16 %v904
        %v2029 = vunpack.c.l.b16 %v905
        %v2030 = vunpack.c.h.b16 %v905
        %v2031 = vunpack.c.l.b16 %v906
        %v2032 = vunpack.c.h.b16 %v906
        %v2033 = vunpack.c.l.b16 %v907
        %v2034 = vunpack.c.h.b16 %v907
        %v2035 = vunpack.c.l.b16 %v908
        %v2036 = vunpack.c.h.b16 %v908
        %v2037 = vunpack.c.l.b16 %v909
        %v2038 = vunpack.c.h.b16 %v909
        %v2039 = vunpack.c.l.b16 %v910
        %v2040 = vunpack.c.h.b16 %v910
        %v2041 = vunpack.c.l.b16 %v911
        %v2042 = vunpack.c.h.b16 %v911
        %v2043 = vunpack.c.l.b16 %v912
        %v2044 = vunpack.c.h.b16 %v912
        %v2045 = vunpack.c.l.b16 %v913
        %v2046 = vunpack.c.h.b16 %v913
        %v2047 = vunpack.c.l.b16 %v914
        %v2048 = vunpack.c.h.b16 %v914
        %v2049 = vunpack.c.l.b16 %v915
        %v2050 = vunpack.c.h.b16 %v915
        %v2051 = vunpack.c.l.b16 %v916
        %v2052 = vunpack.c.h.b16 %v916
        %v2053 = vunpack.c.l.b16 %v917
        %v2054 = vunpack.c.h.b16 %v917
        %v2055 = vunpack.c.l.b16 %v918
        %v2056 = vunpack.c.h.b16 %v918
        %v2057 = vunpack.c.l.b16 %v919
        %v2058 = vunpack.c.h.b16 %v919
        %v2059 = vunpack.c.l.b16 %v920
        %v2060 = vunpack.c.h.b16 %v920
        %v2061 = vunpack.c.l.b16 %v921
        %v2062 = vunpack.c.h.b16 %v921
        %v2063 = vunpack.c.l.b16 %v922
        %v2064 = vunpack.c.h.b16 %v922
        %v2065 = vunpack.c.l.b16 %v923
        %v2066 = vunpack.c.h.b16 %v923
        %v2067 = vunpack.c.l.b16 %v924
        %v2068 = vunpack.c.h.b16 %v924
        %v2069 = vunpack.c.l.b16 %v925
        %v2070 = vunpack.c.h.b16 %v925
        %v2071 = vunpack.c.l.b16 %v926
        %v2072 = vunpack.c.h.b16 %v926
        %v2073 = vunpack.c.l.b16 %v927
        %v2074 = vunpack.c.h.b16 %v927
        %v2075 = vunpack.c.l.b16 %v928
        %v2076 = vunpack.c.h.b16 %v928
        %v2077 = vunpack.c.l.b16 %v929
        %v2078 = vunpack.c.h.b16 %v929
        %v2079 = vunpack.c.l.b16 %v930
        %v2080 = vunpack.c.h.b16 %v930
        %v2081 = vunpack.c.l.b16 %v931
        %v2082 = vunpack.c.h.b16 %v931
        %v2083 = vunpack.c.l.b16 %v932
        %v2084 = vunpack.c.h.b16 %v932
        %v2085 = vunpack.c.l.b16 %v933
        %v2086 = vunpack.c.h.b16 %v933
        %v2087 = vunpack.c.l.b16 %v934
        %v2088 = vunpack.c.h.b16 %v934
        %v2089 = vunpack.c.l.b16 %v935
        %v2090 = vunpack.c.h.b16 %v935
        %v2091 = vunpack.c.l.b16 %v936
        %v2092 = vunpack.c.h.b16 %v936
        %v2093 = vunpack.c.l.b16 %v937
        %v2094 = vunpack.c.h.b16 %v937
        %v2095 = vunpack.c.l.b16 %v938
        %v2096 = vunpack.c.h.b16 %v938
        %v2097 = vunpack.c.l.b16 %v939
        %v2098 = vunpack.c.h.b16 %v939
        %v2099 = vunpack.c.l.b16 %v940
        %v2100 = vunpack.c.h.b16 %v940
        %v2101 = vunpack.c.l.b16 %v941
        %v2102 = vunpack.c.h.b16 %v941
        %v2103 = vunpack.c.l.b16 %v942
        %v2104 = vunpack.c.h.b16 %v942
        %v2105 = vunpack.c.l.b16 %v943
        %v2106 = vunpack.c.h.b16 %v943
        %v2107 = vunpack.c.l.b16 %v944
        %v2108 = vunpack.c.h.b16 %v944
        %v2109 = vunpack.c.l.b16 %v945
        %v2110 = vunpack.c.h.b16 %v945
        %v2111 = vunpack.c.l.b16 %v946
        %v2112 = vunpack.c.h.b16 %v946
        %v2113 = vunpack.c.l.b16 %v947
        %v2114 = vunpack.c.h.b16 %v947
        %v2115 = vunpack.c.l.b16 %v948
        %v2116 = vunpack.c.h.b16 %v948
        %v2117 = vunpack.c.l.b16 %v949
        %v2118 = vunpack.c.h.b16 %v949
        %v2119 = vunpack.c.l.b16 %v950
        %v2120 = vunpack.c.h.b16 %v950
        %v2121 = vunpack.c.l.b16 %v951
        %v2122 = vunpack.c.h.b16 %v951
        %v2123 = vunpack.c.l.b16 %v952
        %v2124 = vunpack.c.h.b16 %v952
        %v2125 = vunpack.c.l.b16 %v953
        %v2126 = vunpack.c.h.b16 %v953
        %v2127 = vunpack.c.l.b16 %v954
        %v2128 = vunpack.c.h.b16 %v954
        %v2129 = vunpack.c.l.b16 %v955
        %v2130 = vunpack.c.h.b16 %v955
        %v2131 = vunpack.c.l.b16 %v956
        %v2132 = vunpack.c.h.b16 %v956
        %v2133 = vunpack.c.l.b16 %v957
        %v2134 = vunpack.c.h.b16 %v957
        %v2135 = vunpack.c.l.b16 %v958
        %v2136 = vunpack.c.h.b16 %v958
        %v2137 = vunpack.c.l.b16 %v959
        %v2138 = vunpack.c.h.b16 %v959
        %v2139 = vunpack.c.l.b16 %v960
        %v2140 = vunpack.c.h.b16 %v960
        %v2141 = vunpack.c.l.b16 %v961
        %v2142 = vunpack.c.h.b16 %v961
        %v2143 = vunpack.c.l.b16 %v962
        %v2144 = vunpack.c.h.b16 %v962
        %v2145 = vunpack.c.l.b16 %v963
        %v2146 = vunpack.c.h.b16 %v963
        %v2147 = vunpack.c.l.b16 %v964
        %v2148 = vunpack.c.h.b16 %v964
        %v2149 = vunpack.c.l.b16 %v965
        %v2150 = vunpack.c.h.b16 %v965
        %v2151 = vunpack.c.l.b16 %v966
        %v2152 = vunpack.c.h.b16 %v966
        %v2153 = vunpack.c.l.b16 %v967
        %v2154 = vunpack.c.h.b16 %v967
        %v2155 = vunpack.c.l.b16 %v968
        %v2156 = vunpack.c.h.b16 %v968
        %v2157 = vunpack.c.l.b16 %v969
        %v2158 = vunpack.c.h.b16 %v969
        %v2159 = vunpack.c.l.b16 %v970
        %v2160 = vunpack.c.h.b16 %v970
        %v2161 = vunpack.c.l.b16 %v971
        %v2162 = vunpack.c.h.b16 %v971
        %v2163 = vunpack.c.l.b16 %v972
        %v2164 = vunpack.c.h.b16 %v972
        %v2165 = vunpack.c.l.b16 %v973
        %v2166 = vunpack.c.h.b16 %v973
        %v2167 = vunpack.c.l.b16 %v974
        %v2168 = vunpack.c.h.b16 %v974
        %v2169 = vunpack.c.l.b16 %v975
        %v2170 = vunpack.c.h.b16 %v975
        %v2171 = vunpack.c.l.b16 %v976
        %v2172 = vunpack.c.h.b16 %v976
        %v2173 = vunpack.c.l.b16 %v977
        %v2174 = vunpack.c.h.b16 %v977
        %v2175 = vunpack.c.l.b16 %v978
        %v2176 = vunpack.c.h.b16 %v978
        %v2177 = vunpack.c.l.b16 %v979
        %v2178 = vunpack.c.h.b16 %v979
        %v2179 = vunpack.c.l.b16 %v980
        %v2180 = vunpack.c.h.b16 %v980
        %v2181 = vunpack.c.l.b16 %v981
        %v2182 = vunpack.c.h.b16 %v981
        %v2183 = vunpack.c.l.b16 %v982
        %v2184 = vunpack.c.h.b16 %v982
        %v2185 = vunpack.c.l.b16 %v983
        %v2186 = vunpack.c.h.b16 %v983
        %v2187 = vunpack.c.l.b16 %v984
        %v2188 = vunpack.c.h.b16 %v984
        %v2189 = vunpack.c.l.b16 %v985
        %v2190 = vunpack.c.h.b16 %v985
        %v2191 = vunpack.c.l.b16 %v986
        %v2192 = vunpack.c.h.b16 %v986
        %v2193 = vunpack.c.l.b16 %v987
        %v2194 = vunpack.c.h.b16 %v987
        %v2195 = vunpack.c.l.b16 %v988
        %v2196 = vunpack.c.h.b16 %v988
        %v2197 = vunpack.c.l.b16 %v989
        %v2198 = vunpack.c.h.b16 %v989
        %v2199 = vunpack.c.l.b16 %v990
        %v2200 = vunpack.c.h.b16 %v990
        %v2201 = vunpack.c.l.b16 %v991
        %v2202 = vunpack.c.h.b16 %v991
        %v2203 = vunpack.c.l.b16 %v992
        %v2204 = vunpack.c.h.b16 %v992
        %v2205 = vunpack.c.l.b16 %v993
        %v2206 = vunpack.c.h.b16 %v993
        %v2207 = vunpack.c.l.b16 %v994
        %v2208 = vunpack.c.h.b16 %v994
        %v2209 = vunpack.c.l.b16 %v995
        %v2210 = vunpack.c.h.b16 %v995
        %v2211 = vunpack.c.l.b16 %v996
        %v2212 = vunpack.c.h.b16 %v996
        %v2213 = vunpack.c.l.b16 %v997
        %v2214 = vunpack.c.h.b16 %v997
        %v2215 = vunpack.c.l.b16 %v998
        %v2216 = vunpack.c.h.b16 %v998
        %v2217 = vunpack.c.l.b16 %v999
        %v2218 = vunpack.c.h.b16 %v999
        %v2219 = vunpack.c.l.b16 %v1000
        %v2220 = vunpack.c.h.b16 %v1000
        %v2221 = vunpack.c.l.b16 %v1001
        %v2222 = vunpack.c.h.b16 %v1001
        %v2223 = vunpack.c.l.b16 %v1002
        %v2224 = vunpack.c.h.b16 %v1002
        %v2225 = vunpack.c.l.b16 %v1003
        %v2226 = vunpack.c.h.b16 %v1003
        %v2227 = vunpack.c.l.b16 %v1004
        %v2228 = vunpack.c.h.b16 %v1004
        %v2229 = vunpack.c.l.b16 %v1005
        %v2230 = vunpack.c.h.b16 %v1005
        %v2231 = vunpack.c.l.b16 %v1006
        %v2232 = vunpack.c.h.b16 %v1006
        %v2233 = vunpack.c.l.b16 %v1007
        %v2234 = vunpack.c.h.b16 %v1007
        %v2235 = vunpack.c.l.b16 %v1008
        %v2236 = vunpack.c.h.b16 %v1008
        %v2237 = vunpack.c.l.b16 %v1009
        %v2238 = vunpack.c.h.b16 %v1009
        %v2239 = vunpack.c.l.b16 %v1010
        %v2240 = vunpack.c.h.b16 %v1010
        %v2241 = vunpack.c.l.b16 %v1011
        %v2242 = vunpack.c.h.b16 %v1011
        %v2243 = vunpack.c.l.b16 %v1012
        %v2244 = vunpack.c.h.b16 %v1012
        %v2245 = vunpack.c.l.b16 %v1013
        %v2246 = vunpack.c.h.b16 %v1013
        %v2247 = vunpack.c.l.b16 %v1014
        %v2248 = vunpack.c.h.b16 %v1014
        %v2249 = vunpack.c.l.b16 %v1015
        %v2250 = vunpack.c.h.b16 %v1015
        %v2251 = vunpack.c.l.b16 %v1016
        %v2252 = vunpack.c.h.b16 %v1016
        %v2253 = vunpack.c.l.b16 %v1017
        %v2254 = vunpack.c.h.b16 %v1017
        %v2255 = vunpack.c.l.b16 %v1018
        %v2256 = vunpack.c.h.b16 %v1018
        %v2257 = vunpack.c.l.b16 %v1019
        %v2258 = vunpack.c.h.b16 %v1019
        %v2259 = vunpack.c.l.b16 %v1020
        %v2260 = vunpack.c.h.b16 %v1020
        %v2261 = vunpack.c.l.b16 %v1021
        %v2262 = vunpack.c.h.b16 %v1021
        %v2263 = vunpack.c.l.b16 %v1022
        %v2264 = vunpack.c.h.b16 %v1022
        %v2265 = vunpack.c.l.b16 %v1023
        %v2266 = vunpack.c.h.b16 %v1023
        %v2267 = vunpack.c.l.b16 %v1024
        %v2268 = vunpack.c.h.b16 %v1024
        %v2269 = vunpack.c.l.b16 %v1025
        %v2270 = vunpack.c.h.b16 %v1025
        %v2271 = vunpack.c.l.b16 %v1026
        %v2272 = vunpack.c.h.b16 %v1026
        %v2273 = vunpack.c.l.b16 %v1027
        %v2274 = vunpack.c.h.b16 %v1027
        %v2275 = vunpack.c.l.b16 %v1028
        %v2276 = vunpack.c.h.b16 %v1028
        %v2277 = vunpack.c.l.b16 %v1029
        %v2278 = vunpack.c.h.b16 %v1029
        %v2279 = vunpack.c.l.b16 %v1030
        %v2280 = vunpack.c.h.b16 %v1030
        %v2281 = vunpack.c.l.b16 %v1031
        %v2282 = vunpack.c.h.b16 %v1031
        %v2283 = vunpack.c.l.b16 %v1032
        %v2284 = vunpack.c.h.b16 %v1032
        %v2285 = vunpack.c.l.b16 %v1033
        %v2286 = vunpack.c.h.b16 %v1033
        %v2287 = vunpack.c.l.b16 %v1034
        %v2288 = vunpack.c.h.b16 %v1034
        %v2289 = vunpack.c.l.b16 %v1035
        %v2290 = vunpack.c.h.b16 %v1035
        %v2291 = vunpack.c.l.b16 %v1036
        %v2292 = vunpack.c.h.b16 %v1036
        %v2293 = vunpack.c.l.b16 %v1037
        %v2294 = vunpack.c.h.b16 %v1037
        %v2295 = vunpack.c.l.b16 %v1038
        %v2296 = vunpack.c.h.b16 %v1038
        %v2297 = vunpack.c.l.b16 %v1039
        %v2298 = vunpack.c.h.b16 %v1039
        %v2299 = vunpack.c.l.b16 %v1040
        %v2300 = vunpack.c.h.b16 %v1040
        %v2301 = vunpack.c.l.b16 %v1041
        %v2302 = vunpack.c.h.b16 %v1041
        %v2303 = vunpack.c.l.b16 %v1042
        %v2304 = vunpack.c.h.b16 %v1042
        %v2305 = vunpack.c.l.b16 %v1043
        %v2306 = vunpack.c.h.b16 %v1043
        %v2307 = vunpack.c.l.b16 %v1044
        %v2308 = vunpack.c.h.b16 %v1044
        %v2309 = vunpack.c.l.b16 %v1045
        %v2310 = vunpack.c.h.b16 %v1045
        %v2311 = vunpack.c.l.b16 %v1046
        %v2312 = vunpack.c.h.b16 %v1046
        %v2313 = vunpack.c.l.b16 %v1047
        %v2314 = vunpack.c.h.b16 %v1047
        %v2315 = vunpack.c.l.b16 %v1048
        %v2316 = vunpack.c.h.b16 %v1048
        %v2317 = vunpack.c.l.b16 %v1049
        %v2318 = vunpack.c.h.b16 %v1049
        %v2319 = vunpack.c.l.b16 %v1050
        %v2320 = vunpack.c.h.b16 %v1050
        %v2321 = vunpack.c.l.b16 %v1051
        %v2322 = vunpack.c.h.b16 %v1051
        %v2323 = vunpack.c.l.b16 %v1052
        %v2324 = vunpack.c.h.b16 %v1052
        %v2325 = vunpack.c.l.b16 %v1053
        %v2326 = vunpack.c.h.b16 %v1053
        %v2327 = vunpack.c.l.b16 %v1054
        %v2328 = vunpack.c.h.b16 %v1054
        %v2329 = vunpack.c.l.b16 %v1055
        %v2330 = vunpack.c.h.b16 %v1055
        %v2331 = vunpack.c.l.b16 %v1056
        %v2332 = vunpack.c.h.b16 %v1056
        %v2333 = vunpack.c.l.b16 %v1057
        %v2334 = vunpack.c.h.b16 %v1057
        %v2335 = vunpack.c.l.b16 %v1058
        %v2336 = vunpack.c.h.b16 %v1058
        %v2337 = vunpack.c.l.b16 %v1059
        %v2338 = vunpack.c.h.b16 %v1059
        %v2339 = vunpack.c.l.b16 %v1060
        %v2340 = vunpack.c.h.b16 %v1060
        %v2341 = vunpack.c.l.b16 %v1061
        %v2342 = vunpack.c.h.b16 %v1061
        %v2343 = vunpack.c.l.b16 %v1062
        %v2344 = vunpack.c.h.b16 %v1062
        %v2345 = vunpack.c.l.b16 %v1063
        %v2346 = vunpack.c.h.b16 %v1063
        %v2347 = vunpack.c.l.b16 %v1064
        %v2348 = vunpack.c.h.b16 %v1064
        %v2349 = vunpack.c.l.b16 %v1065
        %v2350 = vunpack.c.h.b16 %v1065
        %v2351 = vunpack.c.l.b16 %v1066
        %v2352 = vunpack.c.h.b16 %v1066
        %v2353 = vunpack.c.l.b16 %v1067
        %v2354 = vunpack.c.h.b16 %v1067
        %v2355 = vunpack.c.l.b16 %v1068
        %v2356 = vunpack.c.h.b16 %v1068
        %v2357 = vunpack.c.l.b16 %v1069
        %v2358 = vunpack.c.h.b16 %v1069
        %v2359 = vunpack.c.l.b16 %v1070
        %v2360 = vunpack.c.h.b16 %v1070
        %v2361 = vunpack.c.l.b16 %v1071
        %v2362 = vunpack.c.h.b16 %v1071
        %v2363 = vunpack.c.l.b16 %v1072
        %v2364 = vunpack.c.h.b16 %v1072
        %v2365 = vunpack.c.l.b16 %v1073
        %v2366 = vunpack.c.h.b16 %v1073
        %v2367 = vunpack.c.l.b16 %v1074
        %v2368 = vunpack.c.h.b16 %v1074
        %v2369 = vunpack.c.l.b16 %v1075
        %v2370 = vunpack.c.h.b16 %v1075
        %v2371 = vunpack.c.l.b16 %v1076
        %v2372 = vunpack.c.h.b16 %v1076
        %v2373 = vunpack.c.l.b16 %v1077
        %v2374 = vunpack.c.h.b16 %v1077
        %v2375 = vunpack.c.l.b16 %v1078
        %v2376 = vunpack.c.h.b16 %v1078
        %v2377 = vunpack.c.l.b16 %v1079
        %v2378 = vunpack.c.h.b16 %v1079
        %v2379 = vunpack.c.l.b16 %v1080
        %v2380 = vunpack.c.h.b16 %v1080
        %v2381 = vunpack.c.l.b16 %v1081
        %v2382 = vunpack.c.h.b16 %v1081
        %v2383 = vunpack.c.l.b16 %v1082
        %v2384 = vunpack.c.h.b16 %v1082
        %v2385 = vunpack.c.l.b16 %v1083
        %v2386 = vunpack.c.h.b16 %v1083
        %v2387 = vunpack.c.l.b16 %v1084
        %v2388 = vunpack.c.h.b16 %v1084
        %v2389 = vunpack.c.l.b16 %v1085
        %v2390 = vunpack.c.h.b16 %v1085
        %v2391 = vunpack.c.l.b16 %v1086
        %v2392 = vunpack.c.h.b16 %v1086
        %v2393 = vunpack.c.l.b16 %v1087
        %v2394 = vunpack.c.h.b16 %v1087
        %v2395 = vunpack.c.l.b16 %v1088
        %v2396 = vunpack.c.h.b16 %v1088
        %v2397 = vunpack.c.l.b16 %v1089
        %v2398 = vunpack.c.h.b16 %v1089
        %v2399 = vunpack.c.l.b16 %v1090
        %v2400 = vunpack.c.h.b16 %v1090
        %v2401 = vunpack.c.l.b16 %v1091
        %v2402 = vunpack.c.h.b16 %v1091
        %v2403 = vunpack.c.l.b16 %v1092
        %v2404 = vunpack.c.h.b16 %v1092
        %v2405 = vunpack.c.l.b16 %v1093
        %v2406 = vunpack.c.h.b16 %v1093
        %v2407 = vunpack.c.l.b16 %v1094
        %v2408 = vunpack.c.h.b16 %v1094
        %v2409 = vunpack.c.l.b16 %v1095
        %v2410 = vunpack.c.h.b16 %v1095
        %v2411 = vunpack.c.l.b16 %v1096
        %v2412 = vunpack.c.h.b16 %v1096
        %v2413 = vunpack.c.l.b16 %v1097
        %v2414 = vunpack.c.h.b16 %v1097
        %v2415 = vunpack.c.l.b16 %v1098
        %v2416 = vunpack.c.h.b16 %v1098
        %v2417 = vunpack.c.l.b16 %v1099
        %v2418 = vunpack.c.h.b16 %v1099
        %v2419 = vunpack.c.l.b16 %v1100
        %v2420 = vunpack.c.h.b16 %v1100
        %v2421 = vunpack.c.l.b16 %v1101
        %v2422 = vunpack.c.h.b16 %v1101
        %v2423 = vunpack.c.l.b16 %v1102
        %v2424 = vunpack.c.h.b16 %v1102
        %v2425 = vunpack.c.l.b16 %v1103
        %v2426 = vunpack.c.h.b16 %v1103
        %v2427 = vunpack.c.l.b16 %v1104
        %v2428 = vunpack.c.h.b16 %v1104
        %v2429 = vunpack.c.l.b16 %v1105
        %v2430 = vunpack.c.h.b16 %v1105
        %v2431 = vunpack.c.l.b16 %v1106
        %v2432 = vunpack.c.h.b16 %v1106
        %v2433 = vunpack.c.l.b16 %v1107
        %v2434 = vunpack.c.h.b16 %v1107
        %v2435 = vunpack.c.l.b16 %v1108
        %v2436 = vunpack.c.h.b16 %v1108
        %v2437 = vunpack.c.l.b16 %v1109
        %v2438 = vunpack.c.h.b16 %v1109
        %v2439 = vunpack.c.l.b16 %v1110
        %v2440 = vunpack.c.h.b16 %v1110
        %v2441 = vunpack.c.l.b16 %v1111
        %v2442 = vunpack.c.h.b16 %v1111
        %v2443 = vunpack.c.l.b16 %v1112
        %v2444 = vunpack.c.h.b16 %v1112
        %v2445 = vunpack.c.l.b16 %v1113
        %v2446 = vunpack.c.h.b16 %v1113
        %v2447 = vunpack.c.l.b16 %v1114
        %v2448 = vunpack.c.h.b16 %v1114
        %v2449 = vunpack.c.l.b16 %v1115
        %v2450 = vunpack.c.h.b16 %v1115
        %v2451 = vunpack.c.l.b16 %v1116
        %v2452 = vunpack.c.h.b16 %v1116
        %v2453 = vunpack.c.l.b16 %v1117
        %v2454 = vunpack.c.h.b16 %v1117
        %v2455 = vunpack.c.l.b16 %v1118
        %v2456 = vunpack.c.h.b16 %v1118
        %v2457 = vunpack.c.l.b16 %v1119
        %v2458 = vunpack.c.h.b16 %v1119
        %v2459 = vunpack.c.l.b16 %v1120
        %v2460 = vunpack.c.h.b16 %v1120
        %v2461 = vunpack.c.l.b16 %v1121
        %v2462 = vunpack.c.h.b16 %v1121
        %v2463 = vunpack.c.l.b16 %v1122
        %v2464 = vunpack.c.h.b16 %v1122
        %v2465 = vunpack.c.l.b16 %v1123
        %v2466 = vunpack.c.h.b16 %v1123
        %v2467 = vunpack.c.l.b16 %v1124
        %v2468 = vunpack.c.h.b16 %v1124
        %v2469 = vunpack.c.l.b16 %v1125
        %v2470 = vunpack.c.h.b16 %v1125
        %v2471 = vunpack.c.l.b16 %v1126
        %v2472 = vunpack.c.h.b16 %v1126
        %v2473 = vunpack.c.l.b16 %v1127
        %v2474 = vunpack.c.h.b16 %v1127
        %v2475 = vunpack.c.l.b16 %v1128
        %v2476 = vunpack.c.h.b16 %v1128
        %v2477 = vunpack.c.l.b16 %v1129
        %v2478 = vunpack.c.h.b16 %v1129
        %v2479 = vunpack.c.l.b16 %v1130
        %v2480 = vunpack.c.h.b16 %v1130
        %v2481 = vunpack.c.l.b16 %v1131
        %v2482 = vunpack.c.h.b16 %v1131
        %v2483 = vunpack.c.l.b16 %v1132
        %v2484 = vunpack.c.h.b16 %v1132
        %v2485 = vunpack.c.l.b16 %v1133
        %v2486 = vunpack.c.h.b16 %v1133
        %v2487 = vunpack.c.l.b16 %v1134
        %v2488 = vunpack.c.h.b16 %v1134
        %v2489 = vunpack.c.l.b16 %v1135
        %v2490 = vunpack.c.h.b16 %v1135
        %v2491 = vunpack.c.l.b16 %v1136
        %v2492 = vunpack.c.h.b16 %v1136
        %v2493 = vunpack.c.l.b16 %v1137
        %v2494 = vunpack.c.h.b16 %v1137
        %v2495 = vunpack.c.l.b16 %v1138
        %v2496 = vunpack.c.h.b16 %v1138
        %v2497 = vunpack.c.l.b16 %v1139
        %v2498 = vunpack.c.h.b16 %v1139
        %v2499 = vunpack.c.l.b16 %v1140
        %v2500 = vunpack.c.h.b16 %v1140
        %v2501 = vunpack.c.l.b16 %v1141
        %v2502 = vunpack.c.h.b16 %v1141
        %v2503 = vunpack.c.l.b16 %v1142
        %v2504 = vunpack.c.h.b16 %v1142
        %v2505 = vunpack.c.l.b16 %v1143
        %v2506 = vunpack.c.h.b16 %v1143
        %v2507 = vunpack.c.l.b16 %v1144
        %v2508 = vunpack.c.h.b16 %v1144
        %v2509 = vunpack.c.l.b16 %v1145
        %v2510 = vunpack.c.h.b16 %v1145
        %v2511 = vunpack.c.l.b16 %v1146
        %v2512 = vunpack.c.h.b16 %v1146
        %v2513 = vunpack.c.l.b16 %v1147
        %v2514 = vunpack.c.h.b16 %v1147
        %v2515 = vunpack.c.l.b16 %v1148
        %v2516 = vunpack.c.h.b16 %v1148
        %v2517 = vunpack.c.l.b16 %v1149
        %v2518 = vunpack.c.h.b16 %v1149
        %v2519 = vunpack.c.l.b16 %v1150
        %v2520 = vunpack.c.h.b16 %v1150
        %v2521 = vunpack.c.l.b16 %v1151
        %v2522 = vunpack.c.h.b16 %v1151
        %v2523 = vunpack.c.l.b16 %v1152
        %v2524 = vunpack.c.h.b16 %v1152
        %v2525 = vunpack.c.l.b16 %v1153
        %v2526 = vunpack.c.h.b16 %v1153
        %v2527 = vunpack.c.l.b16 %v1154
        %v2528 = vunpack.c.h.b16 %v1154
        %v2529 = vunpack.c.l.b16 %v1155
        %v2530 = vunpack.c.h.b16 %v1155
        %v2531 = vunpack.c.l.b16 %v1156
        %v2532 = vunpack.c.h.b16 %v1156
        %v2533 = vunpack.c.l.b16 %v1157
        %v2534 = vunpack.c.h.b16 %v1157
        %v2535 = vunpack.c.l.b16 %v1158
        %v2536 = vunpack.c.h.b16 %v1158
        %v2537 = vunpack.c.l.b16 %v1159
        %v2538 = vunpack.c.h.b16 %v1159
        %v2539 = vunpack.c.l.b16 %v1160
        %v2540 = vunpack.c.h.b16 %v1160
        %v2541 = vunpack.c.l.b16 %v1161
        %v2542 = vunpack.c.h.b16 %v1161
        %v2543 = vunpack.c.l.b16 %v1162
        %v2544 = vunpack.c.h.b16 %v1162
        %v2545 = vunpack.c.l.b16 %v1163
        %v2546 = vunpack.c.h.b16 %v1163
        %v2547 = vunpack.c.l.b16 %v1164
        %v2548 = vunpack.c.h.b16 %v1164
        %v2549 = vunpack.c.l.b16 %v1165
        %v2550 = vunpack.c.h.b16 %v1165
        %v2551 = vunpack.c.l.b16 %v1166
        %v2552 = vunpack.c.h.b16 %v1166
        %v2553 = vunpack.c.l.b16 %v1167
        %v2554 = vunpack.c.h.b16 %v1167
        %v2555 = vunpack.c.l.b16 %v1168
        %v2556 = vunpack.c.h.b16 %v1168
        %v2557 = vunpack.c.l.b16 %v1169
        %v2558 = vunpack.c.h.b16 %v1169
        %v2559 = vunpack.c.l.b16 %v1170
        %v2560 = vunpack.c.h.b16 %v1170
        %v2561 = vunpack.c.l.b16 %v1171
        %v2562 = vunpack.c.h.b16 %v1171
        %v2563 = vunpack.c.l.b16 %v1172
        %v2564 = vunpack.c.h.b16 %v1172
        %v2565 = vunpack.c.l.b16 %v1173
        %v2566 = vunpack.c.h.b16 %v1173
        %v2567 = vunpack.c.l.b16 %v1174
        %v2568 = vunpack.c.h.b16 %v1174
        %v2569 = vunpack.c.l.b16 %v1175
        %v2570 = vunpack.c.h.b16 %v1175
        %v2571 = vunpack.c.l.b16 %v1176
        %v2572 = vunpack.c.h.b16 %v1176
        %v2573 = vunpack.c.l.b16 %v1177
        %v2574 = vunpack.c.h.b16 %v1177
        %v2575 = vunpack.c.l.b16 %v1178
        %v2576 = vunpack.c.h.b16 %v1178
        %v2577 = vunpack.c.l.b16 %v1179
        %v2578 = vunpack.c.h.b16 %v1179
        %v2579 = vunpack.c.l.b16 %v1180
        %v2580 = vunpack.c.h.b16 %v1180
        %v2581 = vunpack.c.l.b16 %v1181
        %v2582 = vunpack.c.h.b16 %v1181
        %v2583 = vunpack.c.l.b16 %v1182
        %v2584 = vunpack.c.h.b16 %v1182
        %v2585 = vunpack.c.l.b16 %v1183
        %v2586 = vunpack.c.h.b16 %v1183
        %v2587 = vunpack.c.l.b16 %v1184
        %v2588 = vunpack.c.h.b16 %v1184
        %v2589 = vunpack.c.l.b16 %v1185
        %v2590 = vunpack.c.h.b16 %v1185
        %v2591 = vunpack.c.l.b16 %v1186
        %v2592 = vunpack.c.h.b16 %v1186
        %v2593 = vunpack.c.l.b16 %v1187
        %v2594 = vunpack.c.h.b16 %v1187
        %v2595 = vunpack.c.l.b16 %v1188
        %v2596 = vunpack.c.h.b16 %v1188
        %v2597 = vunpack.c.l.b16 %v1189
        %v2598 = vunpack.c.h.b16 %v1189
        %v2599 = vunpack.c.l.b16 %v1190
        %v2600 = vunpack.c.h.b16 %v1190
        %v2601 = vunpack.c.l.b16 %v1191
        %v2602 = vunpack.c.h.b16 %v1191
        %v2603 = vunpack.c.l.b16 %v1192
        %v2604 = vunpack.c.h.b16 %v1192
        %v2605 = vunpack.c.l.b16 %v1193
        %v2606 = vunpack.c.h.b16 %v1193
        %v2607 = vunpack.c.l.b16 %v1194
        %v2608 = vunpack.c.h.b16 %v1194
        %v2609 = vunpack.c.l.b16 %v1195
        %v2610 = vunpack.c.h.b16 %v1195
        %v2611 = vunpack.c.l.b16 %v1196
        %v2612 = vunpack.c.h.b16 %v1196
        %v2613 = vunpack.c.l.b16 %v1197
        %v2614 = vunpack.c.h.b16 %v1197
        %v2615 = vunpack.c.l.b16 %v1198
        %v2616 = vunpack.c.h.b16 %v1198
        %v2617 = vunpack.c.l.b16 %v1199
        %v2618 = vunpack.c.h.b16 %v1199
        %v2619 = vunpack.c.l.b16 %v1200
        %v2620 = vunpack.c.h.b16 %v1200
        %v2621 = vunpack.c.l.b16 %v1201
        %v2622 = vunpack.c.h.b16 %v1201
        %v2623 = vunpack.c.l.b16 %v1202
        %v2624 = vunpack.c.h.b16 %v1202
        %v2625 = vunpack.c.l.b16 %v1203
        %v2626 = vunpack.c.h.b16 %v1203
        %v2627 = vunpack.c.l.b16 %v1204
        %v2628 = vunpack.c.h.b16 %v1204
        %v2629 = vunpack.c.l.b16 %v1205
        %v2630 = vunpack.c.h.b16 %v1205
        %v2631 = vunpack.c.l.b16 %v1206
        %v2632 = vunpack.c.h.b16 %v1206
        %v2633 = vunpack.c.l.b16 %v1207
        %v2634 = vunpack.c.h.b16 %v1207
        %v2635 = vunpack.c.l.b16 %v1208
        %v2636 = vunpack.c.h.b16 %v1208
        %v2637 = vunpack.c.l.b16 %v1209
        %v2638 = vunpack.c.h.b16 %v1209
        %v2639 = vunpack.c.l.b16 %v1210
        %v2640 = vunpack.c.h.b16 %v1210
        %v2641 = vunpack.c.l.b16 %v1211
        %v2642 = vunpack.c.h.b16 %v1211
        %v2643 = vunpack.c.l.b16 %v1212
        %v2644 = vunpack.c.h.b16 %v1212
        %v2645 = vunpack.c.l.b16 %v1213
        %v2646 = vunpack.c.h.b16 %v1213
        %v2647 = vunpack.c.l.b16 %v1214
        %v2648 = vunpack.c.h.b16 %v1214
        %v2649 = vunpack.c.l.b16 %v1215
        %v2650 = vunpack.c.h.b16 %v1215
        %v2651 = vunpack.c.l.b16 %v1216
        %v2652 = vunpack.c.h.b16 %v1216
        %v2653 = vunpack.c.l.b16 %v1217
        %v2654 = vunpack.c.h.b16 %v1217
        %v2655 = vunpack.c.l.b16 %v1218
        %v2656 = vunpack.c.h.b16 %v1218
        %v2657 = vunpack.c.l.b16 %v1219
        %v2658 = vunpack.c.h.b16 %v1219
        %v2659 = vunpack.c.l.b16 %v1220
        %v2660 = vunpack.c.h.b16 %v1220
        %v2661 = vunpack.c.l.b16 %v1221
        %v2662 = vunpack.c.h.b16 %v1221
        %v2663 = vunpack.c.l.b16 %v1222
        %v2664 = vunpack.c.h.b16 %v1222
        %v2665 = vunpack.c.l.b16 %v1223
        %v2666 = vunpack.c.h.b16 %v1223
        %v2667 = vunpack.c.l.b16 %v1224
        %v2668 = vunpack.c.h.b16 %v1224
        %v2669 = vunpack.c.l.b16 %v1225
        %v2670 = vunpack.c.h.b16 %v1225
        %v2671 = vunpack.c.l.b16 %v1226
        %v2672 = vunpack.c.h.b16 %v1226
        %v2673 = vunpack.c.l.b16 %v1227
        %v2674 = vunpack.c.h.b16 %v1227
        %v2675 = vunpack.c.l.b16 %v1228
        %v2676 = vunpack.c.h.b16 %v1228
        %v2677 = vunpack.c.l.b16 %v1229
        %v2678 = vunpack.c.h.b16 %v1229
        %v2679 = vunpack.c.l.b16 %v1230
        %v2680 = vunpack.c.h.b16 %v1230
        %v2681 = vunpack.c.l.b16 %v1231
        %v2682 = vunpack.c.h.b16 %v1231
        %v2683 = vunpack.c.l.b16 %v1232
        %v2684 = vunpack.c.h.b16 %v1232
        %v2685 = vunpack.c.l.b16 %v1233
        %v2686 = vunpack.c.h.b16 %v1233
        %v2687 = vunpack.c.l.b16 %v1234
        %v2688 = vunpack.c.h.b16 %v1234
        %v2689 = vunpack.c.l.b16 %v1235
        %v2690 = vunpack.c.h.b16 %v1235
        %v2691 = vunpack.c.l.b16 %v1236
        %v2692 = vunpack.c.h.b16 %v1236
        %v2693 = vunpack.c.l.b16 %v1237
        %v2694 = vunpack.c.h.b16 %v1237
        %v2695 = vunpack.c.l.b16 %v1238
        %v2696 = vunpack.c.h.b16 %v1238
        %v2697 = vunpack.c.l.b16 %v1239
        %v2698 = vunpack.c.h.b16 %v1239
        %v2699 = vunpack.c.l.b16 %v1240
        %v2700 = vunpack.c.h.b16 %v1240
        %v2701 = vunpack.c.l.b16 %v1241
        %v2702 = vunpack.c.h.b16 %v1241
        %v2703 = vunpack.c.l.b16 %v1242
        %v2704 = vunpack.c.h.b16 %v1242
        %v2705 = vunpack.c.l.b16 %v1243
        %v2706 = vunpack.c.h.b16 %v1243
        %v2707 = vunpack.c.l.b16 %v1244
        %v2708 = vunpack.c.h.b16 %v1244
        %v2709 = vunpack.c.l.b16 %v1245
        %v2710 = vunpack.c.h.b16 %v1245
        %v2711 = vunpack.c.l.b16 %v1246
        %v2712 = vunpack.c.h.b16 %v1246
        %v2713 = vunpack.c.l.b16 %v1247
        %v2714 = vunpack.c.h.b16 %v1247
        %v2715 = vunpack.c.l.b16 %v1248
        %v2716 = vunpack.c.h.b16 %v1248
        %v2717 = vunpack.c.l.b16 %v1249
        %v2718 = vunpack.c.h.b16 %v1249
        %v2719 = vunpack.c.l.b16 %v1250
        %v2720 = vunpack.c.h.b16 %v1250
        %v2721 = vunpack.c.l.b16 %v1251
        %v2722 = vunpack.c.h.b16 %v1251
        %v2723 = vunpack.c.l.b16 %v1252
        %v2724 = vunpack.c.h.b16 %v1252
        %v2725 = vunpack.c.l.b16 %v1253
        %v2726 = vunpack.c.h.b16 %v1253
        %v2727 = vunpack.c.l.b16 %v1254
        %v2728 = vunpack.c.h.b16 %v1254
        %v2729 = vunpack.c.l.b16 %v1255
        %v2730 = vunpack.c.h.b16 %v1255
        %v2731 = vunpack.c.l.b16 %v1256
        %v2732 = vunpack.c.h.b16 %v1256
        %v2733 = vunpack.c.l.b16 %v1257
        %v2734 = vunpack.c.h.b16 %v1257
        %v2735 = vunpack.c.l.b16 %v1258
        %v2736 = vunpack.c.h.b16 %v1258
        %v2737 = vunpack.c.l.b16 %v1259
        %v2738 = vunpack.c.h.b16 %v1259
        %v2739 = vunpack.c.l.b16 %v1260
        %v2740 = vunpack.c.h.b16 %v1260
        %v2741 = vunpack.c.l.b16 %v1261
        %v2742 = vunpack.c.h.b16 %v1261
        %v2743 = vunpack.c.l.b16 %v1262
        %v2744 = vunpack.c.h.b16 %v1262
        %v2745 = vunpack.c.l.b16 %v1263
        %v2746 = vunpack.c.h.b16 %v1263
        %v2747 = vunpack.c.l.b16 %v1264
        %v2748 = vunpack.c.h.b16 %v1264
        %v2749 = vunpack.c.l.b16 %v1265
        %v2750 = vunpack.c.h.b16 %v1265
        %v2751 = vunpack.c.l.b16 %v1266
        %v2752 = vunpack.c.h.b16 %v1266
        %v2753 = vunpack.c.l.b16 %v1267
        %v2754 = vunpack.c.h.b16 %v1267
        %v2755 = vunpack.c.l.b16 %v1268
        %v2756 = vunpack.c.h.b16 %v1268
        %v2757 = vunpack.c.l.b16 %v1269
        %v2758 = vunpack.c.h.b16 %v1269
        %v2759 = vunpack.c.l.b16 %v1270
        %v2760 = vunpack.c.h.b16 %v1270
        %v2761 = vunpack.c.l.b16 %v1271
        %v2762 = vunpack.c.h.b16 %v1271
        %v2763 = vunpack.c.l.b16 %v1272
        %v2764 = vunpack.c.h.b16 %v1272
        %v2765 = vunpack.c.l.b16 %v1273
        %v2766 = vunpack.c.h.b16 %v1273
        %v2767 = vunpack.c.l.b16 %v1274
        %v2768 = vunpack.c.h.b16 %v1274
        %v2769 = vunpack.c.l.b16 %v1275
        %v2770 = vunpack.c.h.b16 %v1275
        %v2771 = vunpack.c.l.b16 %v1276
        %v2772 = vunpack.c.h.b16 %v1276
        %v2773 = vunpack.c.l.b16 %v1277
        %v2774 = vunpack.c.h.b16 %v1277
        %v2775 = vunpack.c.l.b16 %v1278
        %v2776 = vunpack.c.h.b16 %v1278
        %v2777 = vunpack.c.l.b16 %v1279
        %v2778 = vunpack.c.h.b16 %v1279
        %v2779 = vunpack.c.l.b16 %v1280
        %v2780 = vunpack.c.h.b16 %v1280
        %v2781 = vunpack.c.l.b16 %v1281
        %v2782 = vunpack.c.h.b16 %v1281
        %v2783 = vunpack.c.l.b16 %v1282
        %v2784 = vunpack.c.h.b16 %v1282
        %v2785 = vunpack.c.l.b16 %v1283
        %v2786 = vunpack.c.h.b16 %v1283
        %v2787 = vunpack.c.l.b16 %v1284
        %v2788 = vunpack.c.h.b16 %v1284
        %v2789 = vunpack.c.l.b16 %v1285
        %v2790 = vunpack.c.h.b16 %v1285
        %v2791 = vunpack.c.l.b16 %v1286
        %v2792 = vunpack.c.h.b16 %v1286
        %v2793 = vunpack.c.l.b16 %v1287
        %v2794 = vunpack.c.h.b16 %v1287
        %v2795 = vunpack.c.l.b16 %v1288
        %v2796 = vunpack.c.h.b16 %v1288
        %v2797 = vunpack.c.l.b16 %v1289
        %v2798 = vunpack.c.h.b16 %v1289
        %v2799 = vunpack.c.l.b16 %v1290
        %v2800 = vunpack.c.h.b16 %v1290
        %v2801 = vunpack.c.l.b16 %v1291
        %v2802 = vunpack.c.h.b16 %v1291
        %v2803 = vunpack.c.l.b16 %v1292
        %v2804 = vunpack.c.h.b16 %v1292
        %v2805 = vunpack.c.l.b16 %v1293
        %v2806 = vunpack.c.h.b16 %v1293
        %v2807 = vunpack.c.l.b16 %v1294
        %v2808 = vunpack.c.h.b16 %v1294
        %v2809 = vunpack.c.l.b16 %v1295
        %v2810 = vunpack.c.h.b16 %v1295
        %v2811 = vunpack.c.l.b16 %v1296
        %v2812 = vunpack.c.h.b16 %v1296
        %v2813 = vunpack.c.l.b16 %v1297
        %v2814 = vunpack.c.h.b16 %v1297
        %v2815 = vunpack.c.l.b16 %v1298
        %v2816 = vunpack.c.h.b16 %v1298
        %v2817 = vunpack.c.l.b16 %v1299
        %v2818 = vunpack.c.h.b16 %v1299
        %v2819 = vunpack.c.l.b16 %v1300
        %v2820 = vunpack.c.h.b16 %v1300
        %v2821 = vunpack.c.l.b16 %v1301
        %v2822 = vunpack.c.h.b16 %v1301
        %v2823 = vunpack.c.l.b16 %v1302
        %v2824 = vunpack.c.h.b16 %v1302
        %v2825 = vunpack.c.l.b16 %v1303
        %v2826 = vunpack.c.h.b16 %v1303
        %v2827 = vunpack.c.l.b16 %v1304
        %v2828 = vunpack.c.h.b16 %v1304
        %v2829 = vunpack.c.l.b16 %v1305
        %v2830 = vunpack.c.h.b16 %v1305
        %v2831 = vunpack.c.l.b16 %v1306
        %v2832 = vunpack.c.h.b16 %v1306
        %v2833 = vunpack.c.l.b16 %v1307
        %v2834 = vunpack.c.h.b16 %v1307
        %v2835 = vunpack.c.l.b16 %v1308
        %v2836 = vunpack.c.h.b16 %v1308
        %v2837 = vunpack.c.l.b16 %v1309
        %v2838 = vunpack.c.h.b16 %v1309
        %v2839 = vunpack.c.l.b16 %v1310
        %v2840 = vunpack.c.h.b16 %v1310
        %v2841 = vunpack.c.l.b16 %v1311
        %v2842 = vunpack.c.h.b16 %v1311
        %v2843 = vunpack.c.l.b16 %v1312
        %v2844 = vunpack.c.h.b16 %v1312
        %v2845 = vunpack.c.l.b16 %v1313
        %v2846 = vunpack.c.h.b16 %v1313
        %v2847 = vunpack.c.l.b16 %v1314
        %v2848 = vunpack.c.h.b16 %v1314
        %v2849 = vunpack.c.l.b16 %v1315
        %v2850 = vunpack.c.h.b16 %v1315
        %v2851 = vunpack.c.l.b16 %v1316
        %v2852 = vunpack.c.h.b16 %v1316
        %v2853 = vunpack.c.l.b16 %v1317
        %v2854 = vunpack.c.h.b16 %v1317
        %v2855 = vunpack.c.l.b16 %v1318
        %v2856 = vunpack.c.h.b16 %v1318
        %v2857 = vunpack.c.l.b16 %v1319
        %v2858 = vunpack.c.h.b16 %v1319
        %v2859 = vunpack.c.l.b16 %v1320
        %v2860 = vunpack.c.h.b16 %v1320
        %v2861 = vunpack.c.l.b16 %v1321
        %v2862 = vunpack.c.h.b16 %v1321
        %v2863 = vunpack.c.l.b16 %v1322
        %v2864 = vunpack.c.h.b16 %v1322
        %v2865 = vunpack.c.l.b16 %v1323
        %v2866 = vunpack.c.h.b16 %v1323
        %v2867 = vunpack.c.l.b16 %v1324
        %v2868 = vunpack.c.h.b16 %v1324
        %v2869 = vunpack.c.l.b16 %v1325
        %v2870 = vunpack.c.h.b16 %v1325
        %v2871 = vunpack.c.l.b16 %v1326
        %v2872 = vunpack.c.h.b16 %v1326
        %v2873 = vunpack.c.l.b16 %v1327
        %v2874 = vunpack.c.h.b16 %v1327
        %v2875 = vunpack.c.l.b16 %v1328
        %v2876 = vunpack.c.h.b16 %v1328
        %v2877 = vunpack.c.l.b16 %v1329
        %v2878 = vunpack.c.h.b16 %v1329
        %v2879 = vunpack.c.l.b16 %v1330
        %v2880 = vunpack.c.h.b16 %v1330
        %v2881 = vunpack.c.l.b16 %v1331
        %v2882 = vunpack.c.h.b16 %v1331
        %v2883 = vunpack.c.l.b16 %v1332
        %v2884 = vunpack.c.h.b16 %v1332
        %v2885 = vunpack.c.l.b16 %v1333
        %v2886 = vunpack.c.h.b16 %v1333
        %v2887 = vunpack.c.l.b16 %v1334
        %v2888 = vunpack.c.h.b16 %v1334
        %v2889 = vunpack.c.l.b16 %v1335
        %v2890 = vunpack.c.h.b16 %v1335
        %v2891 = vunpack.c.l.b16 %v1336
        %v2892 = vunpack.c.h.b16 %v1336
        %v2893 = vpack.c.b16 %v1901, %v1869
        %v2894 = vpack.c.b16 %v1902, %v1870
        %v2895 = vpack.c.b16 %v1903, %v1871
        %v2896 = vpack.c.b16 %v1904, %v1872
        %v2897 = vpack.c.b16 %v1905, %v1873
        %v2898 = vpack.c.b16 %v1906, %v1874
        %v2899 = vpack.c.b16 %v1907, %v1875
        %v2900 = vpack.c.b16 %v1908, %v1876
        %v2901 = vpack.c.b16 %v1909, %v1877
        %v2902 = vpack.c.b16 %v1910, %v1878
        %v2903 = vpack.c.b16 %v1911, %v1879
        %v2904 = vpack.c.b16 %v1912, %v1880
        %v2905 = vpack.c.b16 %v1913, %v1881
        %v2906 = vpack.c.b16 %v1914, %v1882
        %v2907 = vpack.c.b16 %v1915, %v1883
        %v2908 = vpack.c.b16 %v1916, %v1884
        %v2909 = vpack.c.b16 %v1917, %v1885
        %v2910 = vpack.c.b16 %v1918, %v1886
        %v2911 = vpack.c.b16 %v1919, %v1887
        %v2912 = vpack.c.b16 %v1920, %v1888
        %v2913 = vpack.c.b16 %v1921, %v1889
        %v2914 = vpack.c.b16 %v1922, %v1890
        %v2915 = vpack.c.b16 %v1923, %v1891
        %v2916 = vpack.c.b16 %v1924, %v1892
        %v2917 = vpack.c.b16 %v1925, %v1893
        %v2918 = vpack.c.b16 %v1926, %v1894
        %v2919 = vpack.c.b16 %v1927, %v1895
        %v2920 = vpack.c.b16 %v1928, %v1896
        %v2921 = vpack.c.b16 %v1929, %v1897
        %v2922 = vpack.c.b16 %v1930, %v1898
        %v2923 = vpack.c.b16 %v1931, %v1899
        %v2924 = vpack.c.b16 %v1932, %v1900
        %v2925 = vpack.c.b16 %v1965, %v1933
        %v2926 = vpack.c.b16 %v1966, %v1934
        %v2927 = vpack.c.b16 %v1967, %v1935
        %v2928 = vpack.c.b16 %v1968, %v1936
        %v2929 = vpack.c.b16 %v1969, %v1937
        %v2930 = vpack.c.b16 %v1970, %v1938
        %v2931 = vpack.c.b16 %v1971, %v1939
        %v2932 = vpack.c.b16 %v1972, %v1940
        %v2933 = vpack.c.b16 %v1973, %v1941
        %v2934 = vpack.c.b16 %v1974, %v1942
        %v2935 = vpack.c.b16 %v1975, %v1943
        %v2936 = vpack.c.b16 %v1976, %v1944
        %v2937 = vpack.c.b16 %v1977, %v1945
        %v2938 = vpack.c.b16 %v1978, %v1946
        %v2939 = vpack.c.b16 %v1979, %v1947
        %v2940 = vpack.c.b16 %v1980, %v1948
        %v2941 = vpack.c.b16 %v1981, %v1949
        %v2942 = vpack.c.b16 %v1982, %v1950
        %v2943 = vpack.c.b16 %v1983, %v1951
        %v2944 = vpack.c.b16 %v1984, %v1952
        %v2945 = vpack.c.b16 %v1985, %v1953
        %v2946 = vpack.c.b16 %v1986, %v1954
        %v2947 = vpack.c.b16 %v1987, %v1955
        %v2948 = vpack.c.b16 %v1988, %v1956
        %v2949 = vpack.c.b16 %v1989, %v1957
        %v2950 = vpack.c.b16 %v1990, %v1958
        %v2951 = vpack.c.b16 %v1991, %v1959
        %v2952 = vpack.c.b16 %v1992, %v1960
        %v2953 = vpack.c.b16 %v1993, %v1961
        %v2954 = vpack.c.b16 %v1994, %v1962
        %v2955 = vpack.c.b16 %v1995, %v1963
        %v2956 = vpack.c.b16 %v1996, %v1964
        %v2957 = vpack.c.b16 %v2029, %v1997
        %v2958 = vpack.c.b16 %v2030, %v1998
        %v2959 = vpack.c.b16 %v2031, %v1999
        %v2960 = vpack.c.b16 %v2032, %v2000
        %v2961 = vpack.c.b16 %v2033, %v2001
        %v2962 = vpack.c.b16 %v2034, %v2002
        %v2963 = vpack.c.b16 %v2035, %v2003
        %v2964 = vpack.c.b16 %v2036, %v2004
        %v2965 = vpack.c.b16 %v2037, %v2005
        %v2966 = vpack.c.b16 %v2038, %v2006
        %v2967 = vpack.c.b16 %v2039, %v2007
        %v2968 = vpack.c.b16 %v2040, %v2008
        %v2969 = vpack.c.b16 %v2041, %v2009
        %v2970 = vpack.c.b16 %v2042, %v2010
        %v2971 = vpack.c.b16 %v2043, %v2011
        %v2972 = vpack.c.b16 %v2044, %v2012
        %v2973 = vpack.c.b16 %v2045, %v2013
        %v2974 = vpack.c.b16 %v2046, %v2014
        %v2975 = vpack.c.b16 %v2047, %v2015
        %v2976 = vpack.c.b16 %v2048, %v2016
        %v2977 = vpack.c.b16 %v2049, %v2017
        %v2978 = vpack.c.b16 %v2050, %v2018
        %v2979 = vpack.c.b16 %v2051, %v2019
        %v2980 = vpack.c.b16 %v2052, %v2020
        %v2981 = vpack.c.b16 %v2053, %v2021
        %v2982 = vpack.c.b16 %v2054, %v2022
        %v2983 = vpack.c.b16 %v2055, %v2023
        %v2984 = vpack.c.b16 %v2056, %v2024
        %v2985 = vpack.c.b16 %v2057, %v2025
        %v2986 = vpack.c.b16 %v2058, %v2026
        %v2987 = vpack.c.b16 %v2059, %v2027
        %v2988 = vpack.c.b16 %v2060, %v2028
        %v2989 = vpack.c.b16 %v2093, %v2061
        %v2990 = vpack.c.b16 %v2094, %v2062
        %v2991 = vpack.c.b16 %v2095, %v2063
        %v2992 = vpack.c.b16 %v2096, %v2064
        %v2993 = vpack.c.b16 %v2097, %v2065
        %v2994 = vpack.c.b16 %v2098, %v2066
        %v2995 = vpack.c.b16 %v2099, %v2067
        %v2996 = vpack.c.b16 %v2100, %v2068
        %v2997 = vpack.c.b16 %v2101, %v2069
        %v2998 = vpack.c.b16 %v2102, %v2070
        %v2999 = vpack.c.b16 %v2103, %v2071
        %v3000 = vpack.c.b16 %v2104, %v2072
        %v3001 = vpack.c.b16 %v2105, %v2073
        %v3002 = vpack.c.b16 %v2106, %v2074
        %v3003 = vpack.c.b16 %v2107, %v2075
        %v3004 = vpack.c.b16 %v2108, %v2076
        %v3005 = vpack.c.b16 %v2109, %v2077
        %v3006 = vpack.c.b16 %v2110, %v2078
        %v3007 = vpack.c.b16 %v2111, %v2079
        %v3008 = vpack.c.b16 %v2112, %v2080
        %v3009 = vpack.c.b16 %v2113, %v2081
        %v3010 = vpack.c.b16 %v2114, %v2082
        %v3011 = vpack.c.b16 %v2115, %v2083
        %v3012 = vpack.c.b16 %v2116, %v2084
        %v3013 = vpack.c.b16 %v2117, %v2085
        %v3014 = vpack.c.b16 %v2118, %v2086
        %v3015 = vpack.c.b16 %v2119, %v2087
        %v3016 = vpack.c.b16 %v2120, %v2088
        %v3017 = vpack.c.b16 %v2121, %v2089
        %v3018 = vpack.c.b16 %v2122, %v2090
        %v3019 = vpack.c.b16 %v2123, %v2091
        %v3020 = vpack.c.b16 %v2124, %v2092
        %v3021 = vpack.c.b16 %v2157, %v2125
        %v3022 = vpack.c.b16 %v2158, %v2126
        %v3023 = vpack.c.b16 %v2159, %v2127
        %v3024 = vpack.c.b16 %v2160, %v2128
        %v3025 = vpack.c.b16 %v2161, %v2129
        %v3026 = vpack.c.b16 %v2162, %v2130
        %v3027 = vpack.c.b16 %v2163, %v2131
        %v3028 = vpack.c.b16 %v2164, %v2132
        %v3029 = vpack.c.b16 %v2165, %v2133
        %v3030 = vpack.c.b16 %v2166, %v2134
        %v3031 = vpack.c.b16 %v2167, %v2135
        %v3032 = vpack.c.b16 %v2168, %v2136
        %v3033 = vpack.c.b16 %v2169, %v2137
        %v3034 = vpack.c.b16 %v2170, %v2138
        %v3035 = vpack.c.b16 %v2171, %v2139
        %v3036 = vpack.c.b16 %v2172, %v2140
        %v3037 = vpack.c.b16 %v2173, %v2141
        %v3038 = vpack.c.b16 %v2174, %v2142
        %v3039 = vpack.c.b16 %v2175, %v2143
        %v3040 = vpack.c.b16 %v2176, %v2144
        %v3041 = vpack.c.b16 %v2177, %v2145
        %v3042 = vpack.c.b16 %v2178, %v2146
        %v3043 = vpack.c.b16 %v2179, %v2147
        %v3044 = vpack.c.b16 %v2180, %v2148
        %v3045 = vpack.c.b16 %v2181, %v2149
        %v3046 = vpack.c.b16 %v2182, %v2150
        %v3047 = vpack.c.b16 %v2183, %v2151
        %v3048 = vpack.c.b16 %v2184, %v2152
        %v3049 = vpack.c.b16 %v2185, %v2153
        %v3050 = vpack.c.b16 %v2186, %v2154
        %v3051 = vpack.c.b16 %v2187, %v2155
        %v3052 = vpack.c.b16 %v2188, %v2156
        %v3053 = vpack.c.b16 %v2221, %v2189
        %v3054 = vpack.c.b16 %v2222, %v2190
        %v3055 = vpack.c.b16 %v2223, %v2191
        %v3056 = vpack.c.b16 %v2224, %v2192
        %v3057 = vpack.c.b16 %v2225, %v2193
        %v3058 = vpack.c.b16 %v2226, %v2194
        %v3059 = vpack.c.b16 %v2227, %v2195
        %v3060 = vpack.c.b16 %v2228, %v2196
        %v3061 = vpack.c.b16 %v2229, %v2197
        %v3062 = vpack.c.b16 %v2230, %v2198
        %v3063 = vpack.c.b16 %v2231, %v2199
        %v3064 = vpack.c.b16 %v2232, %v2200
        %v3065 = vpack.c.b16 %v2233, %v2201
        %v3066 = vpack.c.b16 %v2234, %v2202
        %v3067 = vpack.c.b16 %v2235, %v2203
        %v3068 = vpack.c.b16 %v2236, %v2204
        %v3069 = vpack.c.b16 %v2237, %v2205
        %v3070 = vpack.c.b16 %v2238, %v2206
        %v3071 = vpack.c.b16 %v2239, %v2207
        %v3072 = vpack.c.b16 %v2240, %v2208
        %v3073 = vpack.c.b16 %v2241, %v2209
        %v3074 = vpack.c.b16 %v2242, %v2210
        %v3075 = vpack.c.b16 %v2243, %v2211
        %v3076 = vpack.c.b16 %v2244, %v2212
        %v3077 = vpack.c.b16 %v2245, %v2213
        %v3078 = vpack.c.b16 %v2246, %v2214
        %v3079 = vpack.c.b16 %v2247, %v2215
        %v3080 = vpack.c.b16 %v2248, %v2216
        %v3081 = vpack.c.b16 %v2249, %v2217
        %v3082 = vpack.c.b16 %v2250, %v2218
        %v3083 = vpack.c.b16 %v2251, %v2219
        %v3084 = vpack.c.b16 %v2252, %v2220
        %v3085 = vpack.c.b16 %v2285, %v2253
        %v3086 = vpack.c.b16 %v2286, %v2254
        %v3087 = vpack.c.b16 %v2287, %v2255
        %v3088 = vpack.c.b16 %v2288, %v2256
        %v3089 = vpack.c.b16 %v2289, %v2257
        %v3090 = vpack.c.b16 %v2290, %v2258
        %v3091 = vpack.c.b16 %v2291, %v2259
        %v3092 = vpack.c.b16 %v2292, %v2260
        %v3093 = vpack.c.b16 %v2293, %v2261
        %v3094 = vpack.c.b16 %v2294, %v2262
        %v3095 = vpack.c.b16 %v2295, %v2263
        %v3096 = vpack.c.b16 %v2296, %v2264
        %v3097 = vpack.c.b16 %v2297, %v2265
        %v3098 = vpack.c.b16 %v2298, %v2266
        %v3099 = vpack.c.b16 %v2299, %v2267
        %v3100 = vpack.c.b16 %v2300, %v2268
        %v3101 = vpack.c.b16 %v2301, %v2269
        %v3102 = vpack.c.b16 %v2302, %v2270
        %v3103 = vpack.c.b16 %v2303, %v2271
        %v3104 = vpack.c.b16 %v2304, %v2272
        %v3105 = vpack.c.b16 %v2305, %v2273
        %v3106 = vpack.c.b16 %v2306, %v2274
        %v3107 = vpack.c.b16 %v2307, %v2275
        %v3108 = vpack.c.b16 %v2308, %v2276
        %v3109 = vpack.c.b16 %v2309, %v2277
        %v3110 = vpack.c.b16 %v2310, %v2278
        %v3111 = vpack.c.b16 %v2311, %v2279
        %v3112 = vpack.c.b16 %v2312, %v2280
        %v3113 = vpack.c.b16 %v2313, %v2281
        %v3114 = vpack.c.b16 %v2314, %v2282
        %v3115 = vpack.c.b16 %v2315, %v2283
        %v3116 = vpack.c.b16 %v2316, %v2284
        %v3117 = vpack.c.b16 %v2349, %v2317
        %v3118 = vpack.c.b16 %v2350, %v2318
        %v3119 = vpack.c.b16 %v2351, %v2319
        %v3120 = vpack.c.b16 %v2352, %v2320
        %v3121 = vpack.c.b16 %v2353, %v2321
        %v3122 = vpack.c.b16 %v2354, %v2322
        %v3123 = vpack.c.b16 %v2355, %v2323
        %v3124 = vpack.c.b16 %v2356, %v2324
        %v3125 = vpack.c.b16 %v2357, %v2325
        %v3126 = vpack.c.b16 %v2358, %v2326
        %v3127 = vpack.c.b16 %v2359, %v2327
        %v3128 = vpack.c.b16 %v2360, %v2328
        %v3129 = vpack.c.b16 %v2361, %v2329
        %v3130 = vpack.c.b16 %v2362, %v2330
        %v3131 = vpack.c.b16 %v2363, %v2331
        %v3132 = vpack.c.b16 %v2364, %v2332
        %v3133 = vpack.c.b16 %v2365, %v2333
        %v3134 = vpack.c.b16 %v2366, %v2334
        %v3135 = vpack.c.b16 %v2367, %v2335
        %v3136 = vpack.c.b16 %v2368, %v2336
        %v3137 = vpack.c.b16 %v2369, %v2337
        %v3138 = vpack.c.b16 %v2370, %v2338
        %v3139 = vpack.c.b16 %v2371, %v2339
        %v3140 = vpack.c.b16 %v2372, %v2340
        %v3141 = vpack.c.b16 %v2373, %v2341
        %v3142 = vpack.c.b16 %v2374, %v2342
        %v3143 = vpack.c.b16 %v2375, %v2343
        %v3144 = vpack.c.b16 %v2376, %v2344
        %v3145 = vpack.c.b16 %v2377, %v2345
        %v3146 = vpack.c.b16 %v2378, %v2346
        %v3147 = vpack.c.b16 %v2379, %v2347
        %v3148 = vpack.c.b16 %v2380, %v2348
        %v3149 = vpack.c.b16 %v2413, %v2381
        %v3150 = vpack.c.b16 %v2414, %v2382
        %v3151 = vpack.c.b16 %v2415, %v2383
        %v3152 = vpack.c.b16 %v2416, %v2384
        %v3153 = vpack.c.b16 %v2417, %v2385
        %v3154 = vpack.c.b16 %v2418, %v2386
        %v3155 = vpack.c.b16 %v2419, %v2387
        %v3156 = vpack.c.b16 %v2420, %v2388
        %v3157 = vpack.c.b16 %v2421, %v2389
        %v3158 = vpack.c.b16 %v2422, %v2390
        %v3159 = vpack.c.b16 %v2423, %v2391
        %v3160 = vpack.c.b16 %v2424, %v2392
        %v3161 = vpack.c.b16 %v2425, %v2393
        %v3162 = vpack.c.b16 %v2426, %v2394
        %v3163 = vpack.c.b16 %v2427, %v2395
        %v3164 = vpack.c.b16 %v2428, %v2396
        %v3165 = vpack.c.b16 %v2429, %v2397
        %v3166 = vpack.c.b16 %v2430, %v2398
        %v3167 = vpack.c.b16 %v2431, %v2399
        %v3168 = vpack.c.b16 %v2432, %v2400
        %v3169 = vpack.c.b16 %v2433, %v2401
        %v3170 = vpack.c.b16 %v2434, %v2402
        %v3171 = vpack.c.b16 %v2435, %v2403
        %v3172 = vpack.c.b16 %v2436, %v2404
        %v3173 = vpack.c.b16 %v2437, %v2405
        %v3174 = vpack.c.b16 %v2438, %v2406
        %v3175 = vpack.c.b16 %v2439, %v2407
        %v3176 = vpack.c.b16 %v2440, %v2408
        %v3177 = vpack.c.b16 %v2441, %v2409
        %v3178 = vpack.c.b16 %v2442, %v2410
        %v3179 = vpack.c.b16 %v2443, %v2411
        %v3180 = vpack.c.b16 %v2444, %v2412
        %v3181 = vpack.c.b16 %v2477, %v2445
        %v3182 = vpack.c.b16 %v2478, %v2446
        %v3183 = vpack.c.b16 %v2479, %v2447
        %v3184 = vpack.c.b16 %v2480, %v2448
        %v3185 = vpack.c.b16 %v2481, %v2449
        %v3186 = vpack.c.b16 %v2482, %v2450
        %v3187 = vpack.c.b16 %v2483, %v2451
        %v3188 = vpack.c.b16 %v2484, %v2452
        %v3189 = vpack.c.b16 %v2485, %v2453
        %v3190 = vpack.c.b16 %v2486, %v2454
        %v3191 = vpack.c.b16 %v2487, %v2455
        %v3192 = vpack.c.b16 %v2488, %v2456
        %v3193 = vpack.c.b16 %v2489, %v2457
        %v3194 = vpack.c.b16 %v2490, %v2458
        %v3195 = vpack.c.b16 %v2491, %v2459
        %v3196 = vpack.c.b16 %v2492, %v2460
        %v3197 = vpack.c.b16 %v2493, %v2461
        %v3198 = vpack.c.b16 %v2494, %v2462
        %v3199 = vpack.c.b16 %v2495, %v2463
        %v3200 = vpack.c.b16 %v2496, %v2464
        %v3201 = vpack.c.b16 %v2497, %v2465
        %v3202 = vpack.c.b16 %v2498, %v2466
        %v3203 = vpack.c.b16 %v2499, %v2467
        %v3204 = vpack.c.b16 %v2500, %v2468
        %v3205 = vpack.c.b16 %v2501, %v2469
        %v3206 = vpack.c.b16 %v2502, %v2470
        %v3207 = vpack.c.b16 %v2503, %v2471
        %v3208 = vpack.c.b16 %v2504, %v2472
        %v3209 = vpack.c.b16 %v2505, %v2473
        %v3210 = vpack.c.b16 %v2506, %v2474
        %v3211 = vpack.c.b16 %v2507, %v2475
        %v3212 = vpack.c.b16 %v2508, %v2476
        %v3213 = vpack.c.b16 %v2541, %v2509
        %v3214 = vpack.c.b16 %v2542, %v2510
        %v3215 = vpack.c.b16 %v2543, %v2511
        %v3216 = vpack.c.b16 %v2544, %v2512
        %v3217 = vpack.c.b16 %v2545, %v2513
        %v3218 = vpack.c.b16 %v2546, %v2514
        %v3219 = vpack.c.b16 %v2547, %v2515
        %v3220 = vpack.c.b16 %v2548, %v2516
        %v3221 = vpack.c.b16 %v2549, %v2517
        %v3222 = vpack.c.b16 %v2550, %v2518
        %v3223 = vpack.c.b16 %v2551, %v2519
        %v3224 = vpack.c.b16 %v2552, %v2520
        %v3225 = vpack.c.b16 %v2553, %v2521
        %v3226 = vpack.c.b16 %v2554, %v2522
        %v3227 = vpack.c.b16 %v2555, %v2523
        %v3228 = vpack.c.b16 %v2556, %v2524
        %v3229 = vpack.c.b16 %v2557, %v2525
        %v3230 = vpack.c.b16 %v2558, %v2526
        %v3231 = vpack.c.b16 %v2559, %v2527
        %v3232 = vpack.c.b16 %v2560, %v2528
        %v3233 = vpack.c.b16 %v2561, %v2529
        %v3234 = vpack.c.b16 %v2562, %v2530
        %v3235 = vpack.c.b16 %v2563, %v2531
        %v3236 = vpack.c.b16 %v2564, %v2532
        %v3237 = vpack.c.b16 %v2565, %v2533
        %v3238 = vpack.c.b16 %v2566, %v2534
        %v3239 = vpack.c.b16 %v2567, %v2535
        %v3240 = vpack.c.b16 %v2568, %v2536
        %v3241 = vpack.c.b16 %v2569, %v2537
        %v3242 = vpack.c.b16 %v2570, %v2538
        %v3243 = vpack.c.b16 %v2571, %v2539
        %v3244 = vpack.c.b16 %v2572, %v2540
        %v3245 = vpack.c.b16 %v2605, %v2573
        %v3246 = vpack.c.b16 %v2606, %v2574
        %v3247 = vpack.c.b16 %v2607, %v2575
        %v3248 = vpack.c.b16 %v2608, %v2576
        %v3249 = vpack.c.b16 %v2609, %v2577
        %v3250 = vpack.c.b16 %v2610, %v2578
        %v3251 = vpack.c.b16 %v2611, %v2579
        %v3252 = vpack.c.b16 %v2612, %v2580
        %v3253 = vpack.c.b16 %v2613, %v2581
        %v3254 = vpack.c.b16 %v2614, %v2582
        %v3255 = vpack.c.b16 %v2615, %v2583
        %v3256 = vpack.c.b16 %v2616, %v2584
        %v3257 = vpack.c.b16 %v2617, %v2585
        %v3258 = vpack.c.b16 %v2618, %v2586
        %v3259 = vpack.c.b16 %v2619, %v2587
        %v3260 = vpack.c.b16 %v2620, %v2588
        %v3261 = vpack.c.b16 %v2621, %v2589
        %v3262 = vpack.c.b16 %v2622, %v2590
        %v3263 = vpack.c.b16 %v2623, %v2591
        %v3264 = vpack.c.b16 %v2624, %v2592
        %v3265 = vpack.c.b16 %v2625, %v2593
        %v3266 = vpack.c.b16 %v2626, %v2594
        %v3267 = vpack.c.b16 %v2627, %v2595
        %v3268 = vpack.c.b16 %v2628, %v2596
        %v3269 = vpack.c.b16 %v2629, %v2597
        %v3270 = vpack.c.b16 %v2630, %v2598
        %v3271 = vpack.c.b16 %v2631, %v2599
        %v3272 = vpack.c.b16 %v2632, %v2600
        %v3273 = vpack.c.b16 %v2633, %v2601
        %v3274 = vpack.c.b16 %v2634, %v2602
        %v3275 = vpack.c.b16 %v2635, %v2603
        %v3276 = vpack.c.b16 %v2636, %v2604
        %v3277 = vpack.c.b16 %v2669, %v2637
        %v3278 = vpack.c.b16 %v2670, %v2638
        %v3279 = vpack.c.b16 %v2671, %v2639
        %v3280 = vpack.c.b16 %v2672, %v2640
        %v3281 = vpack.c.b16 %v2673, %v2641
        %v3282 = vpack.c.b16 %v2674, %v2642
        %v3283 = vpack.c.b16 %v2675, %v2643
        %v3284 = vpack.c.b16 %v2676, %v2644
        %v3285 = vpack.c.b16 %v2677, %v2645
        %v3286 = vpack.c.b16 %v2678, %v2646
        %v3287 = vpack.c.b16 %v2679, %v2647
        %v3288 = vpack.c.b16 %v2680, %v2648
        %v3289 = vpack.c.b16 %v2681, %v2649
        %v3290 = vpack.c.b16 %v2682, %v2650
        %v3291 = vpack.c.b16 %v2683, %v2651
        %v3292 = vpack.c.b16 %v2684, %v2652
        %v3293 = vpack.c.b16 %v2685, %v2653
        %v3294 = vpack.c.b16 %v2686, %v2654
        %v3295 = vpack.c.b16 %v2687, %v2655
        %v3296 = vpack.c.b16 %v2688, %v2656
        %v3297 = vpack.c.b16 %v2689, %v2657
        %v3298 = vpack.c.b16 %v2690, %v2658
        %v3299 = vpack.c.b16 %v2691, %v2659
        %v3300 = vpack.c.b16 %v2692, %v2660
        %v3301 = vpack.c.b16 %v2693, %v2661
        %v3302 = vpack.c.b16 %v2694, %v2662
        %v3303 = vpack.c.b16 %v2695, %v2663
        %v3304 = vpack.c.b16 %v2696, %v2664
        %v3305 = vpack.c.b16 %v2697, %v2665
        %v3306 = vpack.c.b16 %v2698, %v2666
        %v3307 = vpack.c.b16 %v2699, %v2667
        %v3308 = vpack.c.b16 %v2700, %v2668
        %v3309 = vpack.c.b16 %v2733, %v2701
        %v3310 = vpack.c.b16 %v2734, %v2702
        %v3311 = vpack.c.b16 %v2735, %v2703
        %v3312 = vpack.c.b16 %v2736, %v2704
        %v3313 = vpack.c.b16 %v2737, %v2705
        %v3314 = vpack.c.b16 %v2738, %v2706
        %v3315 = vpack.c.b16 %v2739, %v2707
        %v3316 = vpack.c.b16 %v2740, %v2708
        %v3317 = vpack.c.b16 %v2741, %v2709
        %v3318 = vpack.c.b16 %v2742, %v2710
        %v3319 = vpack.c.b16 %v2743, %v2711
        %v3320 = vpack.c.b16 %v2744, %v2712
        %v3321 = vpack.c.b16 %v2745, %v2713
        %v3322 = vpack.c.b16 %v2746, %v2714
        %v3323 = vpack.c.b16 %v2747, %v2715
        %v3324 = vpack.c.b16 %v2748, %v2716
        %v3325 = vpack.c.b16 %v2749, %v2717
        %v3326 = vpack.c.b16 %v2750, %v2718
        %v3327 = vpack.c.b16 %v2751, %v2719
        %v3328 = vpack.c.b16 %v2752, %v2720
        %v3329 = vpack.c.b16 %v2753, %v2721
        %v3330 = vpack.c.b16 %v2754, %v2722
        %v3331 = vpack.c.b16 %v2755, %v2723
        %v3332 = vpack.c.b16 %v2756, %v2724
        %v3333 = vpack.c.b16 %v2757, %v2725
        %v3334 = vpack.c.b16 %v2758, %v2726
        %v3335 = vpack.c.b16 %v2759, %v2727
        %v3336 = vpack.c.b16 %v2760, %v2728
        %v3337 = vpack.c.b16 %v2761, %v2729
        %v3338 = vpack.c.b16 %v2762, %v2730
        %v3339 = vpack.c.b16 %v2763, %v2731
        %v3340 = vpack.c.b16 %v2764, %v2732
        %v3341 = vpack.c.b16 %v2797, %v2765
        %v3342 = vpack.c.b16 %v2798, %v2766
        %v3343 = vpack.c.b16 %v2799, %v2767
        %v3344 = vpack.c.b16 %v2800, %v2768
        %v3345 = vpack.c.b16 %v2801, %v2769
        %v3346 = vpack.c.b16 %v2802, %v2770
        %v3347 = vpack.c.b16 %v2803, %v2771
        %v3348 = vpack.c.b16 %v2804, %v2772
        %v3349 = vpack.c.b16 %v2805, %v2773
        %v3350 = vpack.c.b16 %v2806, %v2774
        %v3351 = vpack.c.b16 %v2807, %v2775
        %v3352 = vpack.c.b16 %v2808, %v2776
        %v3353 = vpack.c.b16 %v2809, %v2777
        %v3354 = vpack.c.b16 %v2810, %v2778
        %v3355 = vpack.c.b16 %v2811, %v2779
        %v3356 = vpack.c.b16 %v2812, %v2780
        %v3357 = vpack.c.b16 %v2813, %v2781
        %v3358 = vpack.c.b16 %v2814, %v2782
        %v3359 = vpack.c.b16 %v2815, %v2783
        %v3360 = vpack.c.b16 %v2816, %v2784
        %v3361 = vpack.c.b16 %v2817, %v2785
        %v3362 = vpack.c.b16 %v2818, %v2786
        %v3363 = vpack.c.b16 %v2819, %v2787
        %v3364 = vpack.c.b16 %v2820, %v2788
        %v3365 = vpack.c.b16 %v2821, %v2789
        %v3366 = vpack.c.b16 %v2822, %v2790
        %v3367 = vpack.c.b16 %v2823, %v2791
        %v3368 = vpack.c.b16 %v2824, %v2792
        %v3369 = vpack.c.b16 %v2825, %v2793
        %v3370 = vpack.c.b16 %v2826, %v2794
        %v3371 = vpack.c.b16 %v2827, %v2795
        %v3372 = vpack.c.b16 %v2828, %v2796
        %v3373 = vpack.c.b16 %v2861, %v2829
        %v3374 = vpack.c.b16 %v2862, %v2830
        %v3375 = vpack.c.b16 %v2863, %v2831
        %v3376 = vpack.c.b16 %v2864, %v2832
        %v3377 = vpack.c.b16 %v2865, %v2833
        %v3378 = vpack.c.b16 %v2866, %v2834
        %v3379 = vpack.c.b16 %v2867, %v2835
        %v3380 = vpack.c.b16 %v2868, %v2836
        %v3381 = vpack.c.b16 %v2869, %v2837
        %v3382 = vpack.c.b16 %v2870, %v2838
        %v3383 = vpack.c.b16 %v2871, %v2839
        %v3384 = vpack.c.b16 %v2872, %v2840
        %v3385 = vpack.c.b16 %v2873, %v2841
        %v3386 = vpack.c.b16 %v2874, %v2842
        %v3387 = vpack.c.b16 %v2875, %v2843
        %v3388 = vpack.c.b16 %v2876, %v2844
        %v3389 = vpack.c.b16 %v2877, %v2845
        %v3390 = vpack.c.b16 %v2878, %v2846
        %v3391 = vpack.c.b16 %v2879, %v2847
        %v3392 = vpack.c.b16 %v2880, %v2848
        %v3393 = vpack.c.b16 %v2881, %v2849
        %v3394 = vpack.c.b16 %v2882, %v2850
        %v3395 = vpack.c.b16 %v2883, %v2851
        %v3396 = vpack.c.b16 %v2884, %v2852
        %v3397 = vpack.c.b16 %v2885, %v2853
        %v3398 = vpack.c.b16 %v2886, %v2854
        %v3399 = vpack.c.b16 %v2887, %v2855
        %v3400 = vpack.c.b16 %v2888, %v2856
        %v3401 = vpack.c.b16 %v2889, %v2857
        %v3402 = vpack.c.b16 %v2890, %v2858
        %v3403 = vpack.c.b16 %v2891, %v2859
        %v3404 = vpack.c.b16 %v2892, %v2860
        %3917 = vmatpush.bf16.msra.mxu0 %v3117
        %3918 = vmatpush.bf16.msra.mxu0 %v3085
        %3919 = vmatpush.bf16.msra.mxu0 %v3053
        %3920 = vmatpush.bf16.msra.mxu0 %v3021
        %3921 = vmatpush.bf16.msra.mxu0 %v2989
        %3922 = vmatpush.bf16.msra.mxu0 %v2957
        %3923 = vmatpush.bf16.msra.mxu0 %v2925
        %3924 = vmatpush.bf16.msra.mxu0 %v2893
        %3925 = vmatmul.bf16.gmra.mxu0 %v1349
        %v3926 = vpop.f32.mrf.mxu0
        %v3927 = vadd.f32 0.0, %v3926
        %v3928 = vpop.f32.mrf.mxu0
        %3929 = vmatmul.bf16.gmra.mxu0 %v1351
        %v3930 = vpop.f32.mrf.mxu0
        %v3931 = vadd.f32 0.0, %v3930
        %v3932 = vpop.f32.mrf.mxu0
        %3933 = vdwg.mxu0
        %3934 = vmatpush.bf16.msra.mxu0 %v3373
        %3935 = vmatpush.bf16.msra.mxu0 %v3341
        %3936 = vmatpush.bf16.msra.mxu0 %v3309
        %3937 = vmatpush.bf16.msra.mxu0 %v3277
        %3938 = vmatpush.bf16.msra.mxu0 %v3245
        %3939 = vmatpush.bf16.msra.mxu0 %v3213
        %3940 = vmatpush.bf16.msra.mxu0 %v3181
        %3941 = vmatpush.bf16.msra.mxu0 %v3149
        %3942 = vmatmul.bf16.gmra.mxu0 %v1350
        %v3943 = vpop.f32.mrf.mxu0
        %v3944 = vadd.f32 %v3927, %v3943
        %v3945 = vpop.f32.mrf.mxu0
        %3946 = vmatmul.bf16.gmra.mxu0 %v1352
        %v3947 = vpop.f32.mrf.mxu0
        %v3948 = vadd.f32 %v3931, %v3947
        %v3949 = vpop.f32.mrf.mxu0
        %3950 = vdwg.mxu0
        %3951 = vmatpush.bf16.msra.mxu0 %v3118
        %3952 = vmatpush.bf16.msra.mxu0 %v3086
        %3953 = vmatpush.bf16.msra.mxu0 %v3054
        %3954 = vmatpush.bf16.msra.mxu0 %v3022
        %3955 = vmatpush.bf16.msra.mxu0 %v2990
        %3956 = vmatpush.bf16.msra.mxu0 %v2958
        %3957 = vmatpush.bf16.msra.mxu0 %v2926
        %3958 = vmatpush.bf16.msra.mxu0 %v2894
        %3959 = vmatmul.bf16.gmra.mxu0 %v1349
        %v3960 = vpop.f32.mrf.mxu0
        %v3961 = vadd.f32 0.0, %v3960
        %v3962 = vpop.f32.mrf.mxu0
        %3963 = vmatmul.bf16.gmra.mxu0 %v1351
        %v3964 = vpop.f32.mrf.mxu0
        %v3965 = vadd.f32 0.0, %v3964
        %v3966 = vpop.f32.mrf.mxu0
        %3967 = vdwg.mxu0
        %3968 = vmatpush.bf16.msra.mxu0 %v3374
        %3969 = vmatpush.bf16.msra.mxu0 %v3342
        %3970 = vmatpush.bf16.msra.mxu0 %v3310
        %3971 = vmatpush.bf16.msra.mxu0 %v3278
        %3972 = vmatpush.bf16.msra.mxu0 %v3246
        %3973 = vmatpush.bf16.msra.mxu0 %v3214
        %3974 = vmatpush.bf16.msra.mxu0 %v3182
        %3975 = vmatpush.bf16.msra.mxu0 %v3150
        %3976 = vmatmul.bf16.gmra.mxu0 %v1350
        %v3977 = vpop.f32.mrf.mxu0
        %v3978 = vadd.f32 %v3961, %v3977
        %v3979 = vpop.f32.mrf.mxu0
        %3980 = vmatmul.bf16.gmra.mxu0 %v1352
        %v3981 = vpop.f32.mrf.mxu0
        %v3982 = vadd.f32 %v3965, %v3981
        %v3983 = vpop.f32.mrf.mxu0
        %3984 = vdwg.mxu0
        %3985 = vmatpush.bf16.msra.mxu0 %v3119
        %3986 = vmatpush.bf16.msra.mxu0 %v3087
        %3987 = vmatpush.bf16.msra.mxu0 %v3055
        %3988 = vmatpush.bf16.msra.mxu0 %v3023
        %3989 = vmatpush.bf16.msra.mxu0 %v2991
        %3990 = vmatpush.bf16.msra.mxu0 %v2959
        %3991 = vmatpush.bf16.msra.mxu0 %v2927
        %3992 = vmatpush.bf16.msra.mxu0 %v2895
        %3993 = vmatmul.bf16.gmra.mxu0 %v1349
        %v3994 = vpop.f32.mrf.mxu0
        %v3995 = vadd.f32 0.0, %v3994
        %v3996 = vpop.f32.mrf.mxu0
        %3997 = vmatmul.bf16.gmra.mxu0 %v1351
        %v3998 = vpop.f32.mrf.mxu0
        %v3999 = vadd.f32 0.0, %v3998
        %v4000 = vpop.f32.mrf.mxu0
        %4001 = vdwg.mxu0
        %4002 = vmatpush.bf16.msra.mxu0 %v3375
        %4003 = vmatpush.bf16.msra.mxu0 %v3343
        %4004 = vmatpush.bf16.msra.mxu0 %v3311
        %4005 = vmatpush.bf16.msra.mxu0 %v3279
        %4006 = vmatpush.bf16.msra.mxu0 %v3247
        %4007 = vmatpush.bf16.msra.mxu0 %v3215
        %4008 = vmatpush.bf16.msra.mxu0 %v3183
        %4009 = vmatpush.bf16.msra.mxu0 %v3151
        %4010 = vmatmul.bf16.gmra.mxu0 %v1350
        %v4011 = vpop.f32.mrf.mxu0
        %v4012 = vadd.f32 %v3995, %v4011
        %v4013 = vpop.f32.mrf.mxu0
        %4014 = vmatmul.bf16.gmra.mxu0 %v1352
        %v4015 = vpop.f32.mrf.mxu0
        %v4016 = vadd.f32 %v3999, %v4015
        %v4017 = vpop.f32.mrf.mxu0
        %4018 = vdwg.mxu0
        %4019 = vmatpush.bf16.msra.mxu0 %v3120
        %4020 = vmatpush.bf16.msra.mxu0 %v3088
        %4021 = vmatpush.bf16.msra.mxu0 %v3056
        %4022 = vmatpush.bf16.msra.mxu0 %v3024
        %4023 = vmatpush.bf16.msra.mxu0 %v2992
        %4024 = vmatpush.bf16.msra.mxu0 %v2960
        %4025 = vmatpush.bf16.msra.mxu0 %v2928
        %4026 = vmatpush.bf16.msra.mxu0 %v2896
        %4027 = vmatmul.bf16.gmra.mxu0 %v1349
        %v4028 = vpop.f32.mrf.mxu0
        %v4029 = vadd.f32 0.0, %v4028
        %v4030 = vpop.f32.mrf.mxu0
        %4031 = vmatmul.bf16.gmra.mxu0 %v1351
        %v4032 = vpop.f32.mrf.mxu0
        %v4033 = vadd.f32 0.0, %v4032
        %v4034 = vpop.f32.mrf.mxu0
        %4035 = vdwg.mxu0
        %4036 = vmatpush.bf16.msra.mxu0 %v3376
        %4037 = vmatpush.bf16.msra.mxu0 %v3344
        %4038 = vmatpush.bf16.msra.mxu0 %v3312
        %4039 = vmatpush.bf16.msra.mxu0 %v3280
        %4040 = vmatpush.bf16.msra.mxu0 %v3248
        %4041 = vmatpush.bf16.msra.mxu0 %v3216
        %4042 = vmatpush.bf16.msra.mxu0 %v3184
        %4043 = vmatpush.bf16.msra.mxu0 %v3152
        %4044 = vmatmul.bf16.gmra.mxu0 %v1350
        %v4045 = vpop.f32.mrf.mxu0
        %v4046 = vadd.f32 %v4029, %v4045
        %v4047 = vpop.f32.mrf.mxu0
        %4048 = vmatmul.bf16.gmra.mxu0 %v1352
        %v4049 = vpop.f32.mrf.mxu0
        %v4050 = vadd.f32 %v4033, %v4049
        %v4051 = vpop.f32.mrf.mxu0
        %4052 = vdwg.mxu0
        %4053 = vmatpush.bf16.msra.mxu0 %v3121
        %4054 = vmatpush.bf16.msra.mxu0 %v3089
        %4055 = vmatpush.bf16.msra.mxu0 %v3057
        %4056 = vmatpush.bf16.msra.mxu0 %v3025
        %4057 = vmatpush.bf16.msra.mxu0 %v2993
        %4058 = vmatpush.bf16.msra.mxu0 %v2961
        %4059 = vmatpush.bf16.msra.mxu0 %v2929
        %4060 = vmatpush.bf16.msra.mxu0 %v2897
        %4061 = vmatmul.bf16.gmra.mxu0 %v1349
        %v4062 = vpop.f32.mrf.mxu0
        %v4063 = vadd.f32 0.0, %v4062
        %v4064 = vpop.f32.mrf.mxu0
        %4065 = vmatmul.bf16.gmra.mxu0 %v1351
        %v4066 = vpop.f32.mrf.mxu0
        %v4067 = vadd.f32 0.0, %v4066
        %v4068 = vpop.f32.mrf.mxu0
        %4069 = vdwg.mxu0
        %4070 = vmatpush.bf16.msra.mxu0 %v3377
        %4071 = vmatpush.bf16.msra.mxu0 %v3345
        %4072 = vmatpush.bf16.msra.mxu0 %v3313
        %4073 = vmatpush.bf16.msra.mxu0 %v3281
        %4074 = vmatpush.bf16.msra.mxu0 %v3249
        %4075 = vmatpush.bf16.msra.mxu0 %v3217
        %4076 = vmatpush.bf16.msra.mxu0 %v3185
        %4077 = vmatpush.bf16.msra.mxu0 %v3153
        %4078 = vmatmul.bf16.gmra.mxu0 %v1350
        %v4079 = vpop.f32.mrf.mxu0
        %v4080 = vadd.f32 %v4063, %v4079
        %v4081 = vpop.f32.mrf.mxu0
        %4082 = vmatmul.bf16.gmra.mxu0 %v1352
        %v4083 = vpop.f32.mrf.mxu0
        %v4084 = vadd.f32 %v4067, %v4083
        %v4085 = vpop.f32.mrf.mxu0
        %4086 = vdwg.mxu0
        %4087 = vmatpush.bf16.msra.mxu0 %v3122
        %4088 = vmatpush.bf16.msra.mxu0 %v3090
        %4089 = vmatpush.bf16.msra.mxu0 %v3058
        %4090 = vmatpush.bf16.msra.mxu0 %v3026
        %4091 = vmatpush.bf16.msra.mxu0 %v2994
        %4092 = vmatpush.bf16.msra.mxu0 %v2962
        %4093 = vmatpush.bf16.msra.mxu0 %v2930
        %4094 = vmatpush.bf16.msra.mxu0 %v2898
        %4095 = vmatmul.bf16.gmra.mxu0 %v1349
        %v4096 = vpop.f32.mrf.mxu0
        %v4097 = vadd.f32 0.0, %v4096
        %v4098 = vpop.f32.mrf.mxu0
        %4099 = vmatmul.bf16.gmra.mxu0 %v1351
        %v4100 = vpop.f32.mrf.mxu0
        %v4101 = vadd.f32 0.0, %v4100
        %v4102 = vpop.f32.mrf.mxu0
        %4103 = vdwg.mxu0
        %4104 = vmatpush.bf16.msra.mxu0 %v3378
        %4105 = vmatpush.bf16.msra.mxu0 %v3346
        %4106 = vmatpush.bf16.msra.mxu0 %v3314
        %4107 = vmatpush.bf16.msra.mxu0 %v3282
        %4108 = vmatpush.bf16.msra.mxu0 %v3250
        %4109 = vmatpush.bf16.msra.mxu0 %v3218
        %4110 = vmatpush.bf16.msra.mxu0 %v3186
        %4111 = vmatpush.bf16.msra.mxu0 %v3154
        %4112 = vmatmul.bf16.gmra.mxu0 %v1350
        %v4113 = vpop.f32.mrf.mxu0
        %v4114 = vadd.f32 %v4097, %v4113
        %v4115 = vpop.f32.mrf.mxu0
        %4116 = vmatmul.bf16.gmra.mxu0 %v1352
        %v4117 = vpop.f32.mrf.mxu0
        %v4118 = vadd.f32 %v4101, %v4117
        %v4119 = vpop.f32.mrf.mxu0
        %4120 = vdwg.mxu0
        %4121 = vmatpush.bf16.msra.mxu0 %v3123
        %4122 = vmatpush.bf16.msra.mxu0 %v3091
        %4123 = vmatpush.bf16.msra.mxu0 %v3059
        %4124 = vmatpush.bf16.msra.mxu0 %v3027
        %4125 = vmatpush.bf16.msra.mxu0 %v2995
        %4126 = vmatpush.bf16.msra.mxu0 %v2963
        %4127 = vmatpush.bf16.msra.mxu0 %v2931
        %4128 = vmatpush.bf16.msra.mxu0 %v2899
        %4129 = vmatmul.bf16.gmra.mxu0 %v1349
        %v4130 = vpop.f32.mrf.mxu0
        %v4131 = vadd.f32 0.0, %v4130
        %v4132 = vpop.f32.mrf.mxu0
        %4133 = vmatmul.bf16.gmra.mxu0 %v1351
        %v4134 = vpop.f32.mrf.mxu0
        %v4135 = vadd.f32 0.0, %v4134
        %v4136 = vpop.f32.mrf.mxu0
        %4137 = vdwg.mxu0
        %4138 = vmatpush.bf16.msra.mxu0 %v3379
        %4139 = vmatpush.bf16.msra.mxu0 %v3347
        %4140 = vmatpush.bf16.msra.mxu0 %v3315
        %4141 = vmatpush.bf16.msra.mxu0 %v3283
        %4142 = vmatpush.bf16.msra.mxu0 %v3251
        %4143 = vmatpush.bf16.msra.mxu0 %v3219
        %4144 = vmatpush.bf16.msra.mxu0 %v3187
        %4145 = vmatpush.bf16.msra.mxu0 %v3155
        %4146 = vmatmul.bf16.gmra.mxu0 %v1350
        %v4147 = vpop.f32.mrf.mxu0
        %v4148 = vadd.f32 %v4131, %v4147
        %v4149 = vpop.f32.mrf.mxu0
        %4150 = vmatmul.bf16.gmra.mxu0 %v1352
        %v4151 = vpop.f32.mrf.mxu0
        %v4152 = vadd.f32 %v4135, %v4151
        %v4153 = vpop.f32.mrf.mxu0
        %4154 = vdwg.mxu0
        %4155 = vmatpush.bf16.msra.mxu0 %v3124
        %4156 = vmatpush.bf16.msra.mxu0 %v3092
        %4157 = vmatpush.bf16.msra.mxu0 %v3060
        %4158 = vmatpush.bf16.msra.mxu0 %v3028
        %4159 = vmatpush.bf16.msra.mxu0 %v2996
        %4160 = vmatpush.bf16.msra.mxu0 %v2964
        %4161 = vmatpush.bf16.msra.mxu0 %v2932
        %4162 = vmatpush.bf16.msra.mxu0 %v2900
        %4163 = vmatmul.bf16.gmra.mxu0 %v1349
        %v4164 = vpop.f32.mrf.mxu0
        %v4165 = vadd.f32 0.0, %v4164
        %v4166 = vpop.f32.mrf.mxu0
        %4167 = vmatmul.bf16.gmra.mxu0 %v1351
        %v4168 = vpop.f32.mrf.mxu0
        %v4169 = vadd.f32 0.0, %v4168
        %v4170 = vpop.f32.mrf.mxu0
        %4171 = vdwg.mxu0
        %4172 = vmatpush.bf16.msra.mxu0 %v3380
        %4173 = vmatpush.bf16.msra.mxu0 %v3348
        %4174 = vmatpush.bf16.msra.mxu0 %v3316
        %4175 = vmatpush.bf16.msra.mxu0 %v3284
        %4176 = vmatpush.bf16.msra.mxu0 %v3252
        %4177 = vmatpush.bf16.msra.mxu0 %v3220
        %4178 = vmatpush.bf16.msra.mxu0 %v3188
        %4179 = vmatpush.bf16.msra.mxu0 %v3156
        %4180 = vmatmul.bf16.gmra.mxu0 %v1350
        %v4181 = vpop.f32.mrf.mxu0
        %v4182 = vadd.f32 %v4165, %v4181
        %v4183 = vpop.f32.mrf.mxu0
        %4184 = vmatmul.bf16.gmra.mxu0 %v1352
        %v4185 = vpop.f32.mrf.mxu0
        %v4186 = vadd.f32 %v4169, %v4185
        %v4187 = vpop.f32.mrf.mxu0
        %4188 = vdwg.mxu0
        %4189 = vmatpush.bf16.msra.mxu0 %v3125
        %4190 = vmatpush.bf16.msra.mxu0 %v3093
        %4191 = vmatpush.bf16.msra.mxu0 %v3061
        %4192 = vmatpush.bf16.msra.mxu0 %v3029
        %4193 = vmatpush.bf16.msra.mxu0 %v2997
        %4194 = vmatpush.bf16.msra.mxu0 %v2965
        %4195 = vmatpush.bf16.msra.mxu0 %v2933
        %4196 = vmatpush.bf16.msra.mxu0 %v2901
        %4197 = vmatmul.bf16.gmra.mxu0 %v1349
        %v4198 = vpop.f32.mrf.mxu0
        %v4199 = vadd.f32 0.0, %v4198
        %v4200 = vpop.f32.mrf.mxu0
        %4201 = vmatmul.bf16.gmra.mxu0 %v1351
        %v4202 = vpop.f32.mrf.mxu0
        %v4203 = vadd.f32 0.0, %v4202
        %v4204 = vpop.f32.mrf.mxu0
        %4205 = vdwg.mxu0
        %4206 = vmatpush.bf16.msra.mxu0 %v3381
        %4207 = vmatpush.bf16.msra.mxu0 %v3349
        %4208 = vmatpush.bf16.msra.mxu0 %v3317
        %4209 = vmatpush.bf16.msra.mxu0 %v3285
        %4210 = vmatpush.bf16.msra.mxu0 %v3253
        %4211 = vmatpush.bf16.msra.mxu0 %v3221
        %4212 = vmatpush.bf16.msra.mxu0 %v3189
        %4213 = vmatpush.bf16.msra.mxu0 %v3157
        %4214 = vmatmul.bf16.gmra.mxu0 %v1350
        %v4215 = vpop.f32.mrf.mxu0
        %v4216 = vadd.f32 %v4199, %v4215
        %v4217 = vpop.f32.mrf.mxu0
        %4218 = vmatmul.bf16.gmra.mxu0 %v1352
        %v4219 = vpop.f32.mrf.mxu0
        %v4220 = vadd.f32 %v4203, %v4219
        %v4221 = vpop.f32.mrf.mxu0
        %4222 = vdwg.mxu0
        %4223 = vmatpush.bf16.msra.mxu0 %v3126
        %4224 = vmatpush.bf16.msra.mxu0 %v3094
        %4225 = vmatpush.bf16.msra.mxu0 %v3062
        %4226 = vmatpush.bf16.msra.mxu0 %v3030
        %4227 = vmatpush.bf16.msra.mxu0 %v2998
        %4228 = vmatpush.bf16.msra.mxu0 %v2966
        %4229 = vmatpush.bf16.msra.mxu0 %v2934
        %4230 = vmatpush.bf16.msra.mxu0 %v2902
        %4231 = vmatmul.bf16.gmra.mxu0 %v1349
        %v4232 = vpop.f32.mrf.mxu0
        %v4233 = vadd.f32 0.0, %v4232
        %v4234 = vpop.f32.mrf.mxu0
        %4235 = vmatmul.bf16.gmra.mxu0 %v1351
        %v4236 = vpop.f32.mrf.mxu0
        %v4237 = vadd.f32 0.0, %v4236
        %v4238 = vpop.f32.mrf.mxu0
        %4239 = vdwg.mxu0
        %4240 = vmatpush.bf16.msra.mxu0 %v3382
        %4241 = vmatpush.bf16.msra.mxu0 %v3350
        %4242 = vmatpush.bf16.msra.mxu0 %v3318
        %4243 = vmatpush.bf16.msra.mxu0 %v3286
        %4244 = vmatpush.bf16.msra.mxu0 %v3254
        %4245 = vmatpush.bf16.msra.mxu0 %v3222
        %4246 = vmatpush.bf16.msra.mxu0 %v3190
        %4247 = vmatpush.bf16.msra.mxu0 %v3158
        %4248 = vmatmul.bf16.gmra.mxu0 %v1350
        %v4249 = vpop.f32.mrf.mxu0
        %v4250 = vadd.f32 %v4233, %v4249
        %v4251 = vpop.f32.mrf.mxu0
        %4252 = vmatmul.bf16.gmra.mxu0 %v1352
        %v4253 = vpop.f32.mrf.mxu0
        %v4254 = vadd.f32 %v4237, %v4253
        %v4255 = vpop.f32.mrf.mxu0
        %4256 = vdwg.mxu0
        %4257 = vmatpush.bf16.msra.mxu0 %v3127
        %4258 = vmatpush.bf16.msra.mxu0 %v3095
        %4259 = vmatpush.bf16.msra.mxu0 %v3063
        %4260 = vmatpush.bf16.msra.mxu0 %v3031
        %4261 = vmatpush.bf16.msra.mxu0 %v2999
        %4262 = vmatpush.bf16.msra.mxu0 %v2967
        %4263 = vmatpush.bf16.msra.mxu0 %v2935
        %4264 = vmatpush.bf16.msra.mxu0 %v2903
        %4265 = vmatmul.bf16.gmra.mxu0 %v1349
        %v4266 = vpop.f32.mrf.mxu0
        %v4267 = vadd.f32 0.0, %v4266
        %v4268 = vpop.f32.mrf.mxu0
        %4269 = vmatmul.bf16.gmra.mxu0 %v1351
        %v4270 = vpop.f32.mrf.mxu0
        %v4271 = vadd.f32 0.0, %v4270
        %v4272 = vpop.f32.mrf.mxu0
        %4273 = vdwg.mxu0
        %4274 = vmatpush.bf16.msra.mxu0 %v3383
        %4275 = vmatpush.bf16.msra.mxu0 %v3351
        %4276 = vmatpush.bf16.msra.mxu0 %v3319
        %4277 = vmatpush.bf16.msra.mxu0 %v3287
        %4278 = vmatpush.bf16.msra.mxu0 %v3255
        %4279 = vmatpush.bf16.msra.mxu0 %v3223
        %4280 = vmatpush.bf16.msra.mxu0 %v3191
        %4281 = vmatpush.bf16.msra.mxu0 %v3159
        %4282 = vmatmul.bf16.gmra.mxu0 %v1350
        %v4283 = vpop.f32.mrf.mxu0
        %v4284 = vadd.f32 %v4267, %v4283
        %v4285 = vpop.f32.mrf.mxu0
        %4286 = vmatmul.bf16.gmra.mxu0 %v1352
        %v4287 = vpop.f32.mrf.mxu0
        %v4288 = vadd.f32 %v4271, %v4287
        %v4289 = vpop.f32.mrf.mxu0
        %4290 = vdwg.mxu0
        %4291 = vmatpush.bf16.msra.mxu0 %v3128
        %4292 = vmatpush.bf16.msra.mxu0 %v3096
        %4293 = vmatpush.bf16.msra.mxu0 %v3064
        %4294 = vmatpush.bf16.msra.mxu0 %v3032
        %4295 = vmatpush.bf16.msra.mxu0 %v3000
        %4296 = vmatpush.bf16.msra.mxu0 %v2968
        %4297 = vmatpush.bf16.msra.mxu0 %v2936
        %4298 = vmatpush.bf16.msra.mxu0 %v2904
        %4299 = vmatmul.bf16.gmra.mxu0 %v1349
        %v4300 = vpop.f32.mrf.mxu0
        %v4301 = vadd.f32 0.0, %v4300
        %v4302 = vpop.f32.mrf.mxu0
        %4303 = vmatmul.bf16.gmra.mxu0 %v1351
        %v4304 = vpop.f32.mrf.mxu0
        %v4305 = vadd.f32 0.0, %v4304
        %v4306 = vpop.f32.mrf.mxu0
        %4307 = vdwg.mxu0
        %4308 = vmatpush.bf16.msra.mxu0 %v3384
        %4309 = vmatpush.bf16.msra.mxu0 %v3352
        %4310 = vmatpush.bf16.msra.mxu0 %v3320
        %4311 = vmatpush.bf16.msra.mxu0 %v3288
        %4312 = vmatpush.bf16.msra.mxu0 %v3256
        %4313 = vmatpush.bf16.msra.mxu0 %v3224
        %4314 = vmatpush.bf16.msra.mxu0 %v3192
        %4315 = vmatpush.bf16.msra.mxu0 %v3160
        %4316 = vmatmul.bf16.gmra.mxu0 %v1350
        %v4317 = vpop.f32.mrf.mxu0
        %v4318 = vadd.f32 %v4301, %v4317
        %v4319 = vpop.f32.mrf.mxu0
        %4320 = vmatmul.bf16.gmra.mxu0 %v1352
        %v4321 = vpop.f32.mrf.mxu0
        %v4322 = vadd.f32 %v4305, %v4321
        %v4323 = vpop.f32.mrf.mxu0
        %4324 = vdwg.mxu0
        %4325 = vmatpush.bf16.msra.mxu0 %v3129
        %4326 = vmatpush.bf16.msra.mxu0 %v3097
        %4327 = vmatpush.bf16.msra.mxu0 %v3065
        %4328 = vmatpush.bf16.msra.mxu0 %v3033
        %4329 = vmatpush.bf16.msra.mxu0 %v3001
        %4330 = vmatpush.bf16.msra.mxu0 %v2969
        %4331 = vmatpush.bf16.msra.mxu0 %v2937
        %4332 = vmatpush.bf16.msra.mxu0 %v2905
        %4333 = vmatmul.bf16.gmra.mxu0 %v1349
        %v4334 = vpop.f32.mrf.mxu0
        %v4335 = vadd.f32 0.0, %v4334
        %v4336 = vpop.f32.mrf.mxu0
        %4337 = vmatmul.bf16.gmra.mxu0 %v1351
        %v4338 = vpop.f32.mrf.mxu0
        %v4339 = vadd.f32 0.0, %v4338
        %v4340 = vpop.f32.mrf.mxu0
        %4341 = vdwg.mxu0
        %4342 = vmatpush.bf16.msra.mxu0 %v3385
        %4343 = vmatpush.bf16.msra.mxu0 %v3353
        %4344 = vmatpush.bf16.msra.mxu0 %v3321
        %4345 = vmatpush.bf16.msra.mxu0 %v3289
        %4346 = vmatpush.bf16.msra.mxu0 %v3257
        %4347 = vmatpush.bf16.msra.mxu0 %v3225
        %4348 = vmatpush.bf16.msra.mxu0 %v3193
        %4349 = vmatpush.bf16.msra.mxu0 %v3161
        %4350 = vmatmul.bf16.gmra.mxu0 %v1350
        %v4351 = vpop.f32.mrf.mxu0
        %v4352 = vadd.f32 %v4335, %v4351
        %v4353 = vpop.f32.mrf.mxu0
        %4354 = vmatmul.bf16.gmra.mxu0 %v1352
        %v4355 = vpop.f32.mrf.mxu0
        %v4356 = vadd.f32 %v4339, %v4355
        %v4357 = vpop.f32.mrf.mxu0
        %4358 = vdwg.mxu0
        %4359 = vmatpush.bf16.msra.mxu0 %v3130
        %4360 = vmatpush.bf16.msra.mxu0 %v3098
        %4361 = vmatpush.bf16.msra.mxu0 %v3066
        %4362 = vmatpush.bf16.msra.mxu0 %v3034
        %4363 = vmatpush.bf16.msra.mxu0 %v3002
        %4364 = vmatpush.bf16.msra.mxu0 %v2970
        %4365 = vmatpush.bf16.msra.mxu0 %v2938
        %4366 = vmatpush.bf16.msra.mxu0 %v2906
        %4367 = vmatmul.bf16.gmra.mxu0 %v1349
        %v4368 = vpop.f32.mrf.mxu0
        %v4369 = vadd.f32 0.0, %v4368
        %v4370 = vpop.f32.mrf.mxu0
        %4371 = vmatmul.bf16.gmra.mxu0 %v1351
        %v4372 = vpop.f32.mrf.mxu0
        %v4373 = vadd.f32 0.0, %v4372
        %v4374 = vpop.f32.mrf.mxu0
        %4375 = vdwg.mxu0
        %4376 = vmatpush.bf16.msra.mxu0 %v3386
        %4377 = vmatpush.bf16.msra.mxu0 %v3354
        %4378 = vmatpush.bf16.msra.mxu0 %v3322
        %4379 = vmatpush.bf16.msra.mxu0 %v3290
        %4380 = vmatpush.bf16.msra.mxu0 %v3258
        %4381 = vmatpush.bf16.msra.mxu0 %v3226
        %4382 = vmatpush.bf16.msra.mxu0 %v3194
        %4383 = vmatpush.bf16.msra.mxu0 %v3162
        %4384 = vmatmul.bf16.gmra.mxu0 %v1350
        %v4385 = vpop.f32.mrf.mxu0
        %v4386 = vadd.f32 %v4369, %v4385
        %v4387 = vpop.f32.mrf.mxu0
        %4388 = vmatmul.bf16.gmra.mxu0 %v1352
        %v4389 = vpop.f32.mrf.mxu0
        %v4390 = vadd.f32 %v4373, %v4389
        %v4391 = vpop.f32.mrf.mxu0
        %4392 = vdwg.mxu0
        %4393 = vmatpush.bf16.msra.mxu0 %v3131
        %4394 = vmatpush.bf16.msra.mxu0 %v3099
        %4395 = vmatpush.bf16.msra.mxu0 %v3067
        %4396 = vmatpush.bf16.msra.mxu0 %v3035
        %4397 = vmatpush.bf16.msra.mxu0 %v3003
        %4398 = vmatpush.bf16.msra.mxu0 %v2971
        %4399 = vmatpush.bf16.msra.mxu0 %v2939
        %4400 = vmatpush.bf16.msra.mxu0 %v2907
        %4401 = vmatmul.bf16.gmra.mxu0 %v1349
        %v4402 = vpop.f32.mrf.mxu0
        %v4403 = vadd.f32 0.0, %v4402
        %v4404 = vpop.f32.mrf.mxu0
        %4405 = vmatmul.bf16.gmra.mxu0 %v1351
        %v4406 = vpop.f32.mrf.mxu0
        %v4407 = vadd.f32 0.0, %v4406
        %v4408 = vpop.f32.mrf.mxu0
        %4409 = vdwg.mxu0
        %4410 = vmatpush.bf16.msra.mxu0 %v3387
        %4411 = vmatpush.bf16.msra.mxu0 %v3355
        %4412 = vmatpush.bf16.msra.mxu0 %v3323
        %4413 = vmatpush.bf16.msra.mxu0 %v3291
        %4414 = vmatpush.bf16.msra.mxu0 %v3259
        %4415 = vmatpush.bf16.msra.mxu0 %v3227
        %4416 = vmatpush.bf16.msra.mxu0 %v3195
        %4417 = vmatpush.bf16.msra.mxu0 %v3163
        %4418 = vmatmul.bf16.gmra.mxu0 %v1350
        %v4419 = vpop.f32.mrf.mxu0
        %v4420 = vadd.f32 %v4403, %v4419
        %v4421 = vpop.f32.mrf.mxu0
        %4422 = vmatmul.bf16.gmra.mxu0 %v1352
        %v4423 = vpop.f32.mrf.mxu0
        %v4424 = vadd.f32 %v4407, %v4423
        %v4425 = vpop.f32.mrf.mxu0
        %4426 = vdwg.mxu0
        %4427 = vmatpush.bf16.msra.mxu0 %v3132
        %4428 = vmatpush.bf16.msra.mxu0 %v3100
        %4429 = vmatpush.bf16.msra.mxu0 %v3068
        %4430 = vmatpush.bf16.msra.mxu0 %v3036
        %4431 = vmatpush.bf16.msra.mxu0 %v3004
        %4432 = vmatpush.bf16.msra.mxu0 %v2972
        %4433 = vmatpush.bf16.msra.mxu0 %v2940
        %4434 = vmatpush.bf16.msra.mxu0 %v2908
        %4435 = vmatmul.bf16.gmra.mxu0 %v1349
        %v4436 = vpop.f32.mrf.mxu0
        %v4437 = vadd.f32 0.0, %v4436
        %v4438 = vpop.f32.mrf.mxu0
        %4439 = vmatmul.bf16.gmra.mxu0 %v1351
        %v4440 = vpop.f32.mrf.mxu0
        %v4441 = vadd.f32 0.0, %v4440
        %v4442 = vpop.f32.mrf.mxu0
        %4443 = vdwg.mxu0
        %4444 = vmatpush.bf16.msra.mxu0 %v3388
        %4445 = vmatpush.bf16.msra.mxu0 %v3356
        %4446 = vmatpush.bf16.msra.mxu0 %v3324
        %4447 = vmatpush.bf16.msra.mxu0 %v3292
        %4448 = vmatpush.bf16.msra.mxu0 %v3260
        %4449 = vmatpush.bf16.msra.mxu0 %v3228
        %4450 = vmatpush.bf16.msra.mxu0 %v3196
        %4451 = vmatpush.bf16.msra.mxu0 %v3164
        %4452 = vmatmul.bf16.gmra.mxu0 %v1350
        %v4453 = vpop.f32.mrf.mxu0
        %v4454 = vadd.f32 %v4437, %v4453
        %v4455 = vpop.f32.mrf.mxu0
        %4456 = vmatmul.bf16.gmra.mxu0 %v1352
        %v4457 = vpop.f32.mrf.mxu0
        %v4458 = vadd.f32 %v4441, %v4457
        %v4459 = vpop.f32.mrf.mxu0
        %4460 = vdwg.mxu0
        %4461 = vmatpush.bf16.msra.mxu0 %v3133
        %4462 = vmatpush.bf16.msra.mxu0 %v3101
        %4463 = vmatpush.bf16.msra.mxu0 %v3069
        %4464 = vmatpush.bf16.msra.mxu0 %v3037
        %4465 = vmatpush.bf16.msra.mxu0 %v3005
        %4466 = vmatpush.bf16.msra.mxu0 %v2973
        %4467 = vmatpush.bf16.msra.mxu0 %v2941
        %4468 = vmatpush.bf16.msra.mxu0 %v2909
        %4469 = vmatmul.bf16.gmra.mxu0 %v1349
        %v4470 = vpop.f32.mrf.mxu0
        %v4471 = vpop.f32.mrf.mxu0
        %v4472 = vadd.f32 0.0, %v4471
        %4473 = vmatmul.bf16.gmra.mxu0 %v1351
        %v4474 = vpop.f32.mrf.mxu0
        %v4475 = vpop.f32.mrf.mxu0
        %v4476 = vadd.f32 0.0, %v4475
        %4477 = vdwg.mxu0
        %4478 = vmatpush.bf16.msra.mxu0 %v3389
        %4479 = vmatpush.bf16.msra.mxu0 %v3357
        %4480 = vmatpush.bf16.msra.mxu0 %v3325
        %4481 = vmatpush.bf16.msra.mxu0 %v3293
        %4482 = vmatpush.bf16.msra.mxu0 %v3261
        %4483 = vmatpush.bf16.msra.mxu0 %v3229
        %4484 = vmatpush.bf16.msra.mxu0 %v3197
        %4485 = vmatpush.bf16.msra.mxu0 %v3165
        %4486 = vmatmul.bf16.gmra.mxu0 %v1350
        %v4487 = vpop.f32.mrf.mxu0
        %v4488 = vpop.f32.mrf.mxu0
        %v4489 = vadd.f32 %v4472, %v4488
        %4490 = vmatmul.bf16.gmra.mxu0 %v1352
        %v4491 = vpop.f32.mrf.mxu0
        %v4492 = vpop.f32.mrf.mxu0
        %v4493 = vadd.f32 %v4476, %v4492
        %4494 = vdwg.mxu0
        %4495 = vmatpush.bf16.msra.mxu0 %v3134
        %4496 = vmatpush.bf16.msra.mxu0 %v3102
        %4497 = vmatpush.bf16.msra.mxu0 %v3070
        %4498 = vmatpush.bf16.msra.mxu0 %v3038
        %4499 = vmatpush.bf16.msra.mxu0 %v3006
        %4500 = vmatpush.bf16.msra.mxu0 %v2974
        %4501 = vmatpush.bf16.msra.mxu0 %v2942
        %4502 = vmatpush.bf16.msra.mxu0 %v2910
        %4503 = vmatmul.bf16.gmra.mxu0 %v1349
        %v4504 = vpop.f32.mrf.mxu0
        %v4505 = vpop.f32.mrf.mxu0
        %v4506 = vadd.f32 0.0, %v4505
        %4507 = vmatmul.bf16.gmra.mxu0 %v1351
        %v4508 = vpop.f32.mrf.mxu0
        %v4509 = vpop.f32.mrf.mxu0
        %v4510 = vadd.f32 0.0, %v4509
        %4511 = vdwg.mxu0
        %4512 = vmatpush.bf16.msra.mxu0 %v3390
        %4513 = vmatpush.bf16.msra.mxu0 %v3358
        %4514 = vmatpush.bf16.msra.mxu0 %v3326
        %4515 = vmatpush.bf16.msra.mxu0 %v3294
        %4516 = vmatpush.bf16.msra.mxu0 %v3262
        %4517 = vmatpush.bf16.msra.mxu0 %v3230
        %4518 = vmatpush.bf16.msra.mxu0 %v3198
        %4519 = vmatpush.bf16.msra.mxu0 %v3166
        %4520 = vmatmul.bf16.gmra.mxu0 %v1350
        %v4521 = vpop.f32.mrf.mxu0
        %v4522 = vpop.f32.mrf.mxu0
        %v4523 = vadd.f32 %v4506, %v4522
        %4524 = vmatmul.bf16.gmra.mxu0 %v1352
        %v4525 = vpop.f32.mrf.mxu0
        %v4526 = vpop.f32.mrf.mxu0
        %v4527 = vadd.f32 %v4510, %v4526
        %4528 = vdwg.mxu0
        %4529 = vmatpush.bf16.msra.mxu0 %v3135
        %4530 = vmatpush.bf16.msra.mxu0 %v3103
        %4531 = vmatpush.bf16.msra.mxu0 %v3071
        %4532 = vmatpush.bf16.msra.mxu0 %v3039
        %4533 = vmatpush.bf16.msra.mxu0 %v3007
        %4534 = vmatpush.bf16.msra.mxu0 %v2975
        %4535 = vmatpush.bf16.msra.mxu0 %v2943
        %4536 = vmatpush.bf16.msra.mxu0 %v2911
        %4537 = vmatmul.bf16.gmra.mxu0 %v1349
        %v4538 = vpop.f32.mrf.mxu0
        %v4539 = vpop.f32.mrf.mxu0
        %v4540 = vadd.f32 0.0, %v4539
        %4541 = vmatmul.bf16.gmra.mxu0 %v1351
        %v4542 = vpop.f32.mrf.mxu0
        %v4543 = vpop.f32.mrf.mxu0
        %v4544 = vadd.f32 0.0, %v4543
        %4545 = vdwg.mxu0
        %4546 = vmatpush.bf16.msra.mxu0 %v3391
        %4547 = vmatpush.bf16.msra.mxu0 %v3359
        %4548 = vmatpush.bf16.msra.mxu0 %v3327
        %4549 = vmatpush.bf16.msra.mxu0 %v3295
        %4550 = vmatpush.bf16.msra.mxu0 %v3263
        %4551 = vmatpush.bf16.msra.mxu0 %v3231
        %4552 = vmatpush.bf16.msra.mxu0 %v3199
        %4553 = vmatpush.bf16.msra.mxu0 %v3167
        %4554 = vmatmul.bf16.gmra.mxu0 %v1350
        %v4555 = vpop.f32.mrf.mxu0
        %v4556 = vpop.f32.mrf.mxu0
        %v4557 = vadd.f32 %v4540, %v4556
        %4558 = vmatmul.bf16.gmra.mxu0 %v1352
        %v4559 = vpop.f32.mrf.mxu0
        %v4560 = vpop.f32.mrf.mxu0
        %v4561 = vadd.f32 %v4544, %v4560
        %4562 = vdwg.mxu0
        %4563 = vmatpush.bf16.msra.mxu0 %v3136
        %4564 = vmatpush.bf16.msra.mxu0 %v3104
        %4565 = vmatpush.bf16.msra.mxu0 %v3072
        %4566 = vmatpush.bf16.msra.mxu0 %v3040
        %4567 = vmatpush.bf16.msra.mxu0 %v3008
        %4568 = vmatpush.bf16.msra.mxu0 %v2976
        %4569 = vmatpush.bf16.msra.mxu0 %v2944
        %4570 = vmatpush.bf16.msra.mxu0 %v2912
        %4571 = vmatmul.bf16.gmra.mxu0 %v1349
        %v4572 = vpop.f32.mrf.mxu0
        %v4573 = vpop.f32.mrf.mxu0
        %v4574 = vadd.f32 0.0, %v4573
        %4575 = vmatmul.bf16.gmra.mxu0 %v1351
        %v4576 = vpop.f32.mrf.mxu0
        %v4577 = vpop.f32.mrf.mxu0
        %v4578 = vadd.f32 0.0, %v4577
        %4579 = vdwg.mxu0
        %4580 = vmatpush.bf16.msra.mxu0 %v3392
        %4581 = vmatpush.bf16.msra.mxu0 %v3360
        %4582 = vmatpush.bf16.msra.mxu0 %v3328
        %4583 = vmatpush.bf16.msra.mxu0 %v3296
        %4584 = vmatpush.bf16.msra.mxu0 %v3264
        %4585 = vmatpush.bf16.msra.mxu0 %v3232
        %4586 = vmatpush.bf16.msra.mxu0 %v3200
        %4587 = vmatpush.bf16.msra.mxu0 %v3168
        %4588 = vmatmul.bf16.gmra.mxu0 %v1350
        %v4589 = vpop.f32.mrf.mxu0
        %v4590 = vpop.f32.mrf.mxu0
        %v4591 = vadd.f32 %v4574, %v4590
        %4592 = vmatmul.bf16.gmra.mxu0 %v1352
        %v4593 = vpop.f32.mrf.mxu0
        %v4594 = vpop.f32.mrf.mxu0
        %v4595 = vadd.f32 %v4578, %v4594
        %4596 = vdwg.mxu0
        %4597 = vmatpush.bf16.msra.mxu0 %v3137
        %4598 = vmatpush.bf16.msra.mxu0 %v3105
        %4599 = vmatpush.bf16.msra.mxu0 %v3073
        %4600 = vmatpush.bf16.msra.mxu0 %v3041
        %4601 = vmatpush.bf16.msra.mxu0 %v3009
        %4602 = vmatpush.bf16.msra.mxu0 %v2977
        %4603 = vmatpush.bf16.msra.mxu0 %v2945
        %4604 = vmatpush.bf16.msra.mxu0 %v2913
        %4605 = vmatmul.bf16.gmra.mxu0 %v1349
        %v4606 = vpop.f32.mrf.mxu0
        %v4607 = vpop.f32.mrf.mxu0
        %v4608 = vadd.f32 0.0, %v4607
        %4609 = vmatmul.bf16.gmra.mxu0 %v1351
        %v4610 = vpop.f32.mrf.mxu0
        %v4611 = vpop.f32.mrf.mxu0
        %v4612 = vadd.f32 0.0, %v4611
        %4613 = vdwg.mxu0
        %4614 = vmatpush.bf16.msra.mxu0 %v3393
        %4615 = vmatpush.bf16.msra.mxu0 %v3361
        %4616 = vmatpush.bf16.msra.mxu0 %v3329
        %4617 = vmatpush.bf16.msra.mxu0 %v3297
        %4618 = vmatpush.bf16.msra.mxu0 %v3265
        %4619 = vmatpush.bf16.msra.mxu0 %v3233
        %4620 = vmatpush.bf16.msra.mxu0 %v3201
        %4621 = vmatpush.bf16.msra.mxu0 %v3169
        %4622 = vmatmul.bf16.gmra.mxu0 %v1350
        %v4623 = vpop.f32.mrf.mxu0
        %v4624 = vpop.f32.mrf.mxu0
        %v4625 = vadd.f32 %v4608, %v4624
        %4626 = vmatmul.bf16.gmra.mxu0 %v1352
        %v4627 = vpop.f32.mrf.mxu0
        %v4628 = vpop.f32.mrf.mxu0
        %v4629 = vadd.f32 %v4612, %v4628
        %4630 = vdwg.mxu0
        %4631 = vmatpush.bf16.msra.mxu0 %v3138
        %4632 = vmatpush.bf16.msra.mxu0 %v3106
        %4633 = vmatpush.bf16.msra.mxu0 %v3074
        %4634 = vmatpush.bf16.msra.mxu0 %v3042
        %4635 = vmatpush.bf16.msra.mxu0 %v3010
        %4636 = vmatpush.bf16.msra.mxu0 %v2978
        %4637 = vmatpush.bf16.msra.mxu0 %v2946
        %4638 = vmatpush.bf16.msra.mxu0 %v2914
        %4639 = vmatmul.bf16.gmra.mxu0 %v1349
        %v4640 = vpop.f32.mrf.mxu0
        %v4641 = vpop.f32.mrf.mxu0
        %v4642 = vadd.f32 0.0, %v4641
        %4643 = vmatmul.bf16.gmra.mxu0 %v1351
        %v4644 = vpop.f32.mrf.mxu0
        %v4645 = vpop.f32.mrf.mxu0
        %v4646 = vadd.f32 0.0, %v4645
        %4647 = vdwg.mxu0
        %4648 = vmatpush.bf16.msra.mxu0 %v3394
        %4649 = vmatpush.bf16.msra.mxu0 %v3362
        %4650 = vmatpush.bf16.msra.mxu0 %v3330
        %4651 = vmatpush.bf16.msra.mxu0 %v3298
        %4652 = vmatpush.bf16.msra.mxu0 %v3266
        %4653 = vmatpush.bf16.msra.mxu0 %v3234
        %4654 = vmatpush.bf16.msra.mxu0 %v3202
        %4655 = vmatpush.bf16.msra.mxu0 %v3170
        %4656 = vmatmul.bf16.gmra.mxu0 %v1350
        %v4657 = vpop.f32.mrf.mxu0
        %v4658 = vpop.f32.mrf.mxu0
        %v4659 = vadd.f32 %v4642, %v4658
        %4660 = vmatmul.bf16.gmra.mxu0 %v1352
        %v4661 = vpop.f32.mrf.mxu0
        %v4662 = vpop.f32.mrf.mxu0
        %v4663 = vadd.f32 %v4646, %v4662
        %4664 = vdwg.mxu0
        %4665 = vmatpush.bf16.msra.mxu0 %v3139
        %4666 = vmatpush.bf16.msra.mxu0 %v3107
        %4667 = vmatpush.bf16.msra.mxu0 %v3075
        %4668 = vmatpush.bf16.msra.mxu0 %v3043
        %4669 = vmatpush.bf16.msra.mxu0 %v3011
        %4670 = vmatpush.bf16.msra.mxu0 %v2979
        %4671 = vmatpush.bf16.msra.mxu0 %v2947
        %4672 = vmatpush.bf16.msra.mxu0 %v2915
        %4673 = vmatmul.bf16.gmra.mxu0 %v1349
        %v4674 = vpop.f32.mrf.mxu0
        %v4675 = vpop.f32.mrf.mxu0
        %v4676 = vadd.f32 0.0, %v4675
        %4677 = vmatmul.bf16.gmra.mxu0 %v1351
        %v4678 = vpop.f32.mrf.mxu0
        %v4679 = vpop.f32.mrf.mxu0
        %v4680 = vadd.f32 0.0, %v4679
        %4681 = vdwg.mxu0
        %4682 = vmatpush.bf16.msra.mxu0 %v3395
        %4683 = vmatpush.bf16.msra.mxu0 %v3363
        %4684 = vmatpush.bf16.msra.mxu0 %v3331
        %4685 = vmatpush.bf16.msra.mxu0 %v3299
        %4686 = vmatpush.bf16.msra.mxu0 %v3267
        %4687 = vmatpush.bf16.msra.mxu0 %v3235
        %4688 = vmatpush.bf16.msra.mxu0 %v3203
        %4689 = vmatpush.bf16.msra.mxu0 %v3171
        %4690 = vmatmul.bf16.gmra.mxu0 %v1350
        %v4691 = vpop.f32.mrf.mxu0
        %v4692 = vpop.f32.mrf.mxu0
        %v4693 = vadd.f32 %v4676, %v4692
        %4694 = vmatmul.bf16.gmra.mxu0 %v1352
        %v4695 = vpop.f32.mrf.mxu0
        %v4696 = vpop.f32.mrf.mxu0
        %v4697 = vadd.f32 %v4680, %v4696
        %4698 = vdwg.mxu0
        %4699 = vmatpush.bf16.msra.mxu0 %v3140
        %4700 = vmatpush.bf16.msra.mxu0 %v3108
        %4701 = vmatpush.bf16.msra.mxu0 %v3076
        %4702 = vmatpush.bf16.msra.mxu0 %v3044
        %4703 = vmatpush.bf16.msra.mxu0 %v3012
        %4704 = vmatpush.bf16.msra.mxu0 %v2980
        %4705 = vmatpush.bf16.msra.mxu0 %v2948
        %4706 = vmatpush.bf16.msra.mxu0 %v2916
        %4707 = vmatmul.bf16.gmra.mxu0 %v1349
        %v4708 = vpop.f32.mrf.mxu0
        %v4709 = vpop.f32.mrf.mxu0
        %v4710 = vadd.f32 0.0, %v4709
        %4711 = vmatmul.bf16.gmra.mxu0 %v1351
        %v4712 = vpop.f32.mrf.mxu0
        %v4713 = vpop.f32.mrf.mxu0
        %v4714 = vadd.f32 0.0, %v4713
        %4715 = vdwg.mxu0
        %4716 = vmatpush.bf16.msra.mxu0 %v3396
        %4717 = vmatpush.bf16.msra.mxu0 %v3364
        %4718 = vmatpush.bf16.msra.mxu0 %v3332
        %4719 = vmatpush.bf16.msra.mxu0 %v3300
        %4720 = vmatpush.bf16.msra.mxu0 %v3268
        %4721 = vmatpush.bf16.msra.mxu0 %v3236
        %4722 = vmatpush.bf16.msra.mxu0 %v3204
        %4723 = vmatpush.bf16.msra.mxu0 %v3172
        %4724 = vmatmul.bf16.gmra.mxu0 %v1350
        %v4725 = vpop.f32.mrf.mxu0
        %v4726 = vpop.f32.mrf.mxu0
        %v4727 = vadd.f32 %v4710, %v4726
        %4728 = vmatmul.bf16.gmra.mxu0 %v1352
        %v4729 = vpop.f32.mrf.mxu0
        %v4730 = vpop.f32.mrf.mxu0
        %v4731 = vadd.f32 %v4714, %v4730
        %4732 = vdwg.mxu0
        %4733 = vmatpush.bf16.msra.mxu0 %v3141
        %4734 = vmatpush.bf16.msra.mxu0 %v3109
        %4735 = vmatpush.bf16.msra.mxu0 %v3077
        %4736 = vmatpush.bf16.msra.mxu0 %v3045
        %4737 = vmatpush.bf16.msra.mxu0 %v3013
        %4738 = vmatpush.bf16.msra.mxu0 %v2981
        %4739 = vmatpush.bf16.msra.mxu0 %v2949
        %4740 = vmatpush.bf16.msra.mxu0 %v2917
        %4741 = vmatmul.bf16.gmra.mxu0 %v1349
        %v4742 = vpop.f32.mrf.mxu0
        %v4743 = vpop.f32.mrf.mxu0
        %v4744 = vadd.f32 0.0, %v4743
        %4745 = vmatmul.bf16.gmra.mxu0 %v1351
        %v4746 = vpop.f32.mrf.mxu0
        %v4747 = vpop.f32.mrf.mxu0
        %v4748 = vadd.f32 0.0, %v4747
        %4749 = vdwg.mxu0
        %4750 = vmatpush.bf16.msra.mxu0 %v3397
        %4751 = vmatpush.bf16.msra.mxu0 %v3365
        %4752 = vmatpush.bf16.msra.mxu0 %v3333
        %4753 = vmatpush.bf16.msra.mxu0 %v3301
        %4754 = vmatpush.bf16.msra.mxu0 %v3269
        %4755 = vmatpush.bf16.msra.mxu0 %v3237
        %4756 = vmatpush.bf16.msra.mxu0 %v3205
        %4757 = vmatpush.bf16.msra.mxu0 %v3173
        %4758 = vmatmul.bf16.gmra.mxu0 %v1350
        %v4759 = vpop.f32.mrf.mxu0
        %v4760 = vpop.f32.mrf.mxu0
        %v4761 = vadd.f32 %v4744, %v4760
        %4762 = vmatmul.bf16.gmra.mxu0 %v1352
        %v4763 = vpop.f32.mrf.mxu0
        %v4764 = vpop.f32.mrf.mxu0
        %v4765 = vadd.f32 %v4748, %v4764
        %4766 = vdwg.mxu0
        %4767 = vmatpush.bf16.msra.mxu0 %v3142
        %4768 = vmatpush.bf16.msra.mxu0 %v3110
        %4769 = vmatpush.bf16.msra.mxu0 %v3078
        %4770 = vmatpush.bf16.msra.mxu0 %v3046
        %4771 = vmatpush.bf16.msra.mxu0 %v3014
        %4772 = vmatpush.bf16.msra.mxu0 %v2982
        %4773 = vmatpush.bf16.msra.mxu0 %v2950
        %4774 = vmatpush.bf16.msra.mxu0 %v2918
        %4775 = vmatmul.bf16.gmra.mxu0 %v1349
        %v4776 = vpop.f32.mrf.mxu0
        %v4777 = vpop.f32.mrf.mxu0
        %v4778 = vadd.f32 0.0, %v4777
        %4779 = vmatmul.bf16.gmra.mxu0 %v1351
        %v4780 = vpop.f32.mrf.mxu0
        %v4781 = vpop.f32.mrf.mxu0
        %v4782 = vadd.f32 0.0, %v4781
        %4783 = vdwg.mxu0
        %4784 = vmatpush.bf16.msra.mxu0 %v3398
        %4785 = vmatpush.bf16.msra.mxu0 %v3366
        %4786 = vmatpush.bf16.msra.mxu0 %v3334
        %4787 = vmatpush.bf16.msra.mxu0 %v3302
        %4788 = vmatpush.bf16.msra.mxu0 %v3270
        %4789 = vmatpush.bf16.msra.mxu0 %v3238
        %4790 = vmatpush.bf16.msra.mxu0 %v3206
        %4791 = vmatpush.bf16.msra.mxu0 %v3174
        %4792 = vmatmul.bf16.gmra.mxu0 %v1350
        %v4793 = vpop.f32.mrf.mxu0
        %v4794 = vpop.f32.mrf.mxu0
        %v4795 = vadd.f32 %v4778, %v4794
        %4796 = vmatmul.bf16.gmra.mxu0 %v1352
        %v4797 = vpop.f32.mrf.mxu0
        %v4798 = vpop.f32.mrf.mxu0
        %v4799 = vadd.f32 %v4782, %v4798
        %4800 = vdwg.mxu0
        %4801 = vmatpush.bf16.msra.mxu0 %v3143
        %4802 = vmatpush.bf16.msra.mxu0 %v3111
        %4803 = vmatpush.bf16.msra.mxu0 %v3079
        %4804 = vmatpush.bf16.msra.mxu0 %v3047
        %4805 = vmatpush.bf16.msra.mxu0 %v3015
        %4806 = vmatpush.bf16.msra.mxu0 %v2983
        %4807 = vmatpush.bf16.msra.mxu0 %v2951
        %4808 = vmatpush.bf16.msra.mxu0 %v2919
        %4809 = vmatmul.bf16.gmra.mxu0 %v1349
        %v4810 = vpop.f32.mrf.mxu0
        %v4811 = vpop.f32.mrf.mxu0
        %v4812 = vadd.f32 0.0, %v4811
        %4813 = vmatmul.bf16.gmra.mxu0 %v1351
        %v4814 = vpop.f32.mrf.mxu0
        %v4815 = vpop.f32.mrf.mxu0
        %v4816 = vadd.f32 0.0, %v4815
        %4817 = vdwg.mxu0
        %4818 = vmatpush.bf16.msra.mxu0 %v3399
        %4819 = vmatpush.bf16.msra.mxu0 %v3367
        %4820 = vmatpush.bf16.msra.mxu0 %v3335
        %4821 = vmatpush.bf16.msra.mxu0 %v3303
        %4822 = vmatpush.bf16.msra.mxu0 %v3271
        %4823 = vmatpush.bf16.msra.mxu0 %v3239
        %4824 = vmatpush.bf16.msra.mxu0 %v3207
        %4825 = vmatpush.bf16.msra.mxu0 %v3175
        %4826 = vmatmul.bf16.gmra.mxu0 %v1350
        %v4827 = vpop.f32.mrf.mxu0
        %v4828 = vpop.f32.mrf.mxu0
        %v4829 = vadd.f32 %v4812, %v4828
        %4830 = vmatmul.bf16.gmra.mxu0 %v1352
        %v4831 = vpop.f32.mrf.mxu0
        %v4832 = vpop.f32.mrf.mxu0
        %v4833 = vadd.f32 %v4816, %v4832
        %4834 = vdwg.mxu0
        %4835 = vmatpush.bf16.msra.mxu0 %v3144
        %4836 = vmatpush.bf16.msra.mxu0 %v3112
        %4837 = vmatpush.bf16.msra.mxu0 %v3080
        %4838 = vmatpush.bf16.msra.mxu0 %v3048
        %4839 = vmatpush.bf16.msra.mxu0 %v3016
        %4840 = vmatpush.bf16.msra.mxu0 %v2984
        %4841 = vmatpush.bf16.msra.mxu0 %v2952
        %4842 = vmatpush.bf16.msra.mxu0 %v2920
        %4843 = vmatmul.bf16.gmra.mxu0 %v1349
        %v4844 = vpop.f32.mrf.mxu0
        %v4845 = vpop.f32.mrf.mxu0
        %v4846 = vadd.f32 0.0, %v4845
        %4847 = vmatmul.bf16.gmra.mxu0 %v1351
        %v4848 = vpop.f32.mrf.mxu0
        %v4849 = vpop.f32.mrf.mxu0
        %v4850 = vadd.f32 0.0, %v4849
        %4851 = vdwg.mxu0
        %4852 = vmatpush.bf16.msra.mxu0 %v3400
        %4853 = vmatpush.bf16.msra.mxu0 %v3368
        %4854 = vmatpush.bf16.msra.mxu0 %v3336
        %4855 = vmatpush.bf16.msra.mxu0 %v3304
        %4856 = vmatpush.bf16.msra.mxu0 %v3272
        %4857 = vmatpush.bf16.msra.mxu0 %v3240
        %4858 = vmatpush.bf16.msra.mxu0 %v3208
        %4859 = vmatpush.bf16.msra.mxu0 %v3176
        %4860 = vmatmul.bf16.gmra.mxu0 %v1350
        %v4861 = vpop.f32.mrf.mxu0
        %v4862 = vpop.f32.mrf.mxu0
        %v4863 = vadd.f32 %v4846, %v4862
        %4864 = vmatmul.bf16.gmra.mxu0 %v1352
        %v4865 = vpop.f32.mrf.mxu0
        %v4866 = vpop.f32.mrf.mxu0
        %v4867 = vadd.f32 %v4850, %v4866
        %4868 = vdwg.mxu0
        %4869 = vmatpush.bf16.msra.mxu0 %v3145
        %4870 = vmatpush.bf16.msra.mxu0 %v3113
        %4871 = vmatpush.bf16.msra.mxu0 %v3081
        %4872 = vmatpush.bf16.msra.mxu0 %v3049
        %4873 = vmatpush.bf16.msra.mxu0 %v3017
        %4874 = vmatpush.bf16.msra.mxu0 %v2985
        %4875 = vmatpush.bf16.msra.mxu0 %v2953
        %4876 = vmatpush.bf16.msra.mxu0 %v2921
        %4877 = vmatmul.bf16.gmra.mxu0 %v1349
        %v4878 = vpop.f32.mrf.mxu0
        %v4879 = vpop.f32.mrf.mxu0
        %v4880 = vadd.f32 0.0, %v4879
        %4881 = vmatmul.bf16.gmra.mxu0 %v1351
        %v4882 = vpop.f32.mrf.mxu0
        %v4883 = vpop.f32.mrf.mxu0
        %v4884 = vadd.f32 0.0, %v4883
        %4885 = vdwg.mxu0
        %4886 = vmatpush.bf16.msra.mxu0 %v3401
        %4887 = vmatpush.bf16.msra.mxu0 %v3369
        %4888 = vmatpush.bf16.msra.mxu0 %v3337
        %4889 = vmatpush.bf16.msra.mxu0 %v3305
        %4890 = vmatpush.bf16.msra.mxu0 %v3273
        %4891 = vmatpush.bf16.msra.mxu0 %v3241
        %4892 = vmatpush.bf16.msra.mxu0 %v3209
        %4893 = vmatpush.bf16.msra.mxu0 %v3177
        %4894 = vmatmul.bf16.gmra.mxu0 %v1350
        %v4895 = vpop.f32.mrf.mxu0
        %v4896 = vpop.f32.mrf.mxu0
        %v4897 = vadd.f32 %v4880, %v4896
        %4898 = vmatmul.bf16.gmra.mxu0 %v1352
        %v4899 = vpop.f32.mrf.mxu0
        %v4900 = vpop.f32.mrf.mxu0
        %v4901 = vadd.f32 %v4884, %v4900
        %4902 = vdwg.mxu0
        %4903 = vmatpush.bf16.msra.mxu0 %v3146
        %4904 = vmatpush.bf16.msra.mxu0 %v3114
        %4905 = vmatpush.bf16.msra.mxu0 %v3082
        %4906 = vmatpush.bf16.msra.mxu0 %v3050
        %4907 = vmatpush.bf16.msra.mxu0 %v3018
        %4908 = vmatpush.bf16.msra.mxu0 %v2986
        %4909 = vmatpush.bf16.msra.mxu0 %v2954
        %4910 = vmatpush.bf16.msra.mxu0 %v2922
        %4911 = vmatmul.bf16.gmra.mxu0 %v1349
        %v4912 = vpop.f32.mrf.mxu0
        %v4913 = vpop.f32.mrf.mxu0
        %v4914 = vadd.f32 0.0, %v4913
        %4915 = vmatmul.bf16.gmra.mxu0 %v1351
        %v4916 = vpop.f32.mrf.mxu0
        %v4917 = vpop.f32.mrf.mxu0
        %v4918 = vadd.f32 0.0, %v4917
        %4919 = vdwg.mxu0
        %4920 = vmatpush.bf16.msra.mxu0 %v3402
        %4921 = vmatpush.bf16.msra.mxu0 %v3370
        %4922 = vmatpush.bf16.msra.mxu0 %v3338
        %4923 = vmatpush.bf16.msra.mxu0 %v3306
        %4924 = vmatpush.bf16.msra.mxu0 %v3274
        %4925 = vmatpush.bf16.msra.mxu0 %v3242
        %4926 = vmatpush.bf16.msra.mxu0 %v3210
        %4927 = vmatpush.bf16.msra.mxu0 %v3178
        %4928 = vmatmul.bf16.gmra.mxu0 %v1350
        %v4929 = vpop.f32.mrf.mxu0
        %v4930 = vpop.f32.mrf.mxu0
        %v4931 = vadd.f32 %v4914, %v4930
        %4932 = vmatmul.bf16.gmra.mxu0 %v1352
        %v4933 = vpop.f32.mrf.mxu0
        %v4934 = vpop.f32.mrf.mxu0
        %v4935 = vadd.f32 %v4918, %v4934
        %4936 = vdwg.mxu0
        %4937 = vmatpush.bf16.msra.mxu0 %v3147
        %4938 = vmatpush.bf16.msra.mxu0 %v3115
        %4939 = vmatpush.bf16.msra.mxu0 %v3083
        %4940 = vmatpush.bf16.msra.mxu0 %v3051
        %4941 = vmatpush.bf16.msra.mxu0 %v3019
        %4942 = vmatpush.bf16.msra.mxu0 %v2987
        %4943 = vmatpush.bf16.msra.mxu0 %v2955
        %4944 = vmatpush.bf16.msra.mxu0 %v2923
        %4945 = vmatmul.bf16.gmra.mxu0 %v1349
        %v4946 = vpop.f32.mrf.mxu0
        %v4947 = vpop.f32.mrf.mxu0
        %v4948 = vadd.f32 0.0, %v4947
        %4949 = vmatmul.bf16.gmra.mxu0 %v1351
        %v4950 = vpop.f32.mrf.mxu0
        %v4951 = vpop.f32.mrf.mxu0
        %v4952 = vadd.f32 0.0, %v4951
        %4953 = vdwg.mxu0
        %4954 = vmatpush.bf16.msra.mxu0 %v3403
        %4955 = vmatpush.bf16.msra.mxu0 %v3371
        %4956 = vmatpush.bf16.msra.mxu0 %v3339
        %4957 = vmatpush.bf16.msra.mxu0 %v3307
        %4958 = vmatpush.bf16.msra.mxu0 %v3275
        %4959 = vmatpush.bf16.msra.mxu0 %v3243
        %4960 = vmatpush.bf16.msra.mxu0 %v3211
        %4961 = vmatpush.bf16.msra.mxu0 %v3179
        %4962 = vmatmul.bf16.gmra.mxu0 %v1350
        %v4963 = vpop.f32.mrf.mxu0
        %v4964 = vpop.f32.mrf.mxu0
        %v4965 = vadd.f32 %v4948, %v4964
        %4966 = vmatmul.bf16.gmra.mxu0 %v1352
        %v4967 = vpop.f32.mrf.mxu0
        %v4968 = vpop.f32.mrf.mxu0
        %v4969 = vadd.f32 %v4952, %v4968
        %4970 = vdwg.mxu0
        %4971 = vmatpush.bf16.msra.mxu0 %v3148
        %4972 = vmatpush.bf16.msra.mxu0 %v3116
        %4973 = vmatpush.bf16.msra.mxu0 %v3084
        %4974 = vmatpush.bf16.msra.mxu0 %v3052
        %4975 = vmatpush.bf16.msra.mxu0 %v3020
        %4976 = vmatpush.bf16.msra.mxu0 %v2988
        %4977 = vmatpush.bf16.msra.mxu0 %v2956
        %4978 = vmatpush.bf16.msra.mxu0 %v2924
        %4979 = vmatmul.bf16.gmra.mxu0 %v1349
        %v4980 = vpop.f32.mrf.mxu0
        %v4981 = vpop.f32.mrf.mxu0
        %v4982 = vadd.f32 0.0, %v4981
        %4983 = vmatmul.bf16.gmra.mxu0 %v1351
        %v4984 = vpop.f32.mrf.mxu0
        %v4985 = vpop.f32.mrf.mxu0
        %v4986 = vadd.f32 0.0, %v4985
        %4987 = vdwg.mxu0
        %4988 = vmatpush.bf16.msra.mxu0 %v3404
        %4989 = vmatpush.bf16.msra.mxu0 %v3372
        %4990 = vmatpush.bf16.msra.mxu0 %v3340
        %4991 = vmatpush.bf16.msra.mxu0 %v3308
        %4992 = vmatpush.bf16.msra.mxu0 %v3276
        %4993 = vmatpush.bf16.msra.mxu0 %v3244
        %4994 = vmatpush.bf16.msra.mxu0 %v3212
        %4995 = vmatpush.bf16.msra.mxu0 %v3180
        %4996 = vmatmul.bf16.gmra.mxu0 %v1350
        %v4997 = vpop.f32.mrf.mxu0
        %v4998 = vpop.f32.mrf.mxu0
        %v4999 = vadd.f32 %v4982, %v4998
        %5000 = vmatmul.bf16.gmra.mxu0 %v1352
        %v5001 = vpop.f32.mrf.mxu0
        %v5002 = vpop.f32.mrf.mxu0
        %v5003 = vadd.f32 %v4986, %v5002
        %5004 = vdwg.mxu0
        %v5007 = vrot.slane %v4012, 1
        %v5008 = vrot.slane %v4046, 1
        %v5011 = vadd.f32 %v3944, %v5007
        %v5012 = vadd.f32 %v3978, %v5008
        %v5015 = vrot.slane %v4148, 1
        %v5016 = vrot.slane %v4182, 1
        %v5019 = vadd.f32 %v4080, %v5015
        %v5020 = vadd.f32 %v4114, %v5016
        %v5023 = vrot.slane %v4284, 1
        %v5024 = vrot.slane %v4318, 1
        %v5027 = vadd.f32 %v4216, %v5023
        %v5028 = vadd.f32 %v4250, %v5024
        %v5031 = vrot.slane %v4420, 1
        %v5032 = vrot.slane %v4454, 1
        %v5035 = vadd.f32 %v4352, %v5031
        %v5036 = vadd.f32 %v4386, %v5032
        %v5039 = vrot.slane %v4557, 1
        %v5040 = vrot.slane %v4591, 1
        %v5043 = vadd.f32 %v4489, %v5039
        %v5044 = vadd.f32 %v4523, %v5040
        %v5047 = vrot.slane %v4693, 1
        %v5048 = vrot.slane %v4727, 1
        %v5051 = vadd.f32 %v4625, %v5047
        %v5052 = vadd.f32 %v4659, %v5048
        %v5055 = vrot.slane %v4829, 1
        %v5056 = vrot.slane %v4863, 1
        %v5059 = vadd.f32 %v4761, %v5055
        %v5060 = vadd.f32 %v4795, %v5056
        %v5063 = vrot.slane %v4965, 1
        %v5064 = vrot.slane %v4999, 1
        %v5067 = vadd.f32 %v4897, %v5063
        %v5068 = vadd.f32 %v4931, %v5064
        %v5071 = vrot.slane %v5019, 2
        %v5072 = vrot.slane %v5020, 2
        %v5075 = vadd.f32 %v5011, %v5071
        %v5076 = vadd.f32 %v5012, %v5072
        %v5079 = vrot.slane %v5035, 2
        %v5080 = vrot.slane %v5036, 2
        %v5083 = vadd.f32 %v5027, %v5079
        %v5084 = vadd.f32 %v5028, %v5080
        %v5087 = vrot.slane %v5051, 2
        %v5088 = vrot.slane %v5052, 2
        %v5091 = vadd.f32 %v5043, %v5087
        %v5092 = vadd.f32 %v5044, %v5088
        %v5095 = vrot.slane %v5067, 2
        %v5096 = vrot.slane %v5068, 2
        %v5099 = vadd.f32 %v5059, %v5095
        %v5100 = vadd.f32 %v5060, %v5096
        %v5103 = vrot.slane %v5083, 4
        %v5104 = vrot.slane %v5084, 4
        %v5107 = vadd.f32 %v5075, %v5103
        %v5108 = vadd.f32 %v5076, %v5104
        %v5111 = vrot.slane %v5099, 4
        %v5112 = vrot.slane %v5100, 4
        %v5115 = vadd.f32 %v5091, %v5111
        %v5116 = vadd.f32 %v5092, %v5112
        %v5117 = vadd.f32 %v5107, %v5115
        %v5118 = vadd.f32 %v5108, %v5116
        %v5121 = vrot.slane %v4016, 1
        %v5122 = vrot.slane %v4050, 1
        %v5125 = vadd.f32 %v3948, %v5121
        %v5126 = vadd.f32 %v3982, %v5122
        %v5129 = vrot.slane %v4152, 1
        %v5130 = vrot.slane %v4186, 1
        %v5133 = vadd.f32 %v4084, %v5129
        %v5134 = vadd.f32 %v4118, %v5130
        %v5137 = vrot.slane %v4288, 1
        %v5138 = vrot.slane %v4322, 1
        %v5141 = vadd.f32 %v4220, %v5137
        %v5142 = vadd.f32 %v4254, %v5138
        %v5145 = vrot.slane %v4424, 1
        %v5146 = vrot.slane %v4458, 1
        %v5149 = vadd.f32 %v4356, %v5145
        %v5150 = vadd.f32 %v4390, %v5146
        %v5153 = vrot.slane %v4561, 1
        %v5154 = vrot.slane %v4595, 1
        %v5157 = vadd.f32 %v4493, %v5153
        %v5158 = vadd.f32 %v4527, %v5154
        %v5161 = vrot.slane %v4697, 1
        %v5162 = vrot.slane %v4731, 1
        %v5165 = vadd.f32 %v4629, %v5161
        %v5166 = vadd.f32 %v4663, %v5162
        %v5169 = vrot.slane %v4833, 1
        %v5170 = vrot.slane %v4867, 1
        %v5173 = vadd.f32 %v4765, %v5169
        %v5174 = vadd.f32 %v4799, %v5170
        %v5177 = vrot.slane %v4969, 1
        %v5178 = vrot.slane %v5003, 1
        %v5181 = vadd.f32 %v4901, %v5177
        %v5182 = vadd.f32 %v4935, %v5178
        %v5185 = vrot.slane %v5133, 2
        %v5186 = vrot.slane %v5134, 2
        %v5189 = vadd.f32 %v5125, %v5185
        %v5190 = vadd.f32 %v5126, %v5186
        %v5193 = vrot.slane %v5149, 2
        %v5194 = vrot.slane %v5150, 2
        %v5197 = vadd.f32 %v5141, %v5193
        %v5198 = vadd.f32 %v5142, %v5194
        %v5201 = vrot.slane %v5165, 2
        %v5202 = vrot.slane %v5166, 2
        %v5205 = vadd.f32 %v5157, %v5201
        %v5206 = vadd.f32 %v5158, %v5202
        %v5209 = vrot.slane %v5181, 2
        %v5210 = vrot.slane %v5182, 2
        %v5213 = vadd.f32 %v5173, %v5209
        %v5214 = vadd.f32 %v5174, %v5210
        %v5217 = vrot.slane %v5197, 4
        %v5218 = vrot.slane %v5198, 4
        %v5221 = vadd.f32 %v5189, %v5217
        %v5222 = vadd.f32 %v5190, %v5218
        %v5225 = vrot.slane %v5213, 4
        %v5226 = vrot.slane %v5214, 4
        %v5229 = vadd.f32 %v5205, %v5225
        %v5230 = vadd.f32 %v5206, %v5226
        %v5231 = vadd.f32 %v5221, %v5229
        %v5232 = vadd.f32 %v5222, %v5230
        %v5235 = vrot.slane %v5231, 7
        %v5236 = vrot.slane %v5232, 7
        %vm5239 = vcmask 1040384
        %v5240 = vsel %vm5239, %v5117, %v5235
        %v5241 = vsel %vm5239, %v5118, %v5236
        %v5242 = vld [vmem:[#allocation12] sm:$0xf]
        %v5245 = vrot.slane %v5241, 6
        %vm5246 = vcmask 1041408
        %v5247 = vsel %vm5246, %v5240, %v5245
        %v5249 = vadd.f32 %v5242, %v5247
        %5250 = vst [vmem:[#allocation12] sm:$0xf] %v5249
        // Predicated region
        $region69: #{mixed_precision_forward.1} parent=47 // pred_check
          %p5251 = pneg %p193
        $region70: #{mixed_precision_forward.1} parent=47 // pred_check_branch
          %5253 = sbr.rel (%p5251) target = $region72
        $region71: #{mixed_precision_forward.1} parent=47 // pred_region
          %5255 = vsyncadd [#allocation6], 0
          %s5257 = sshll.u32 [#allocation12], 4
          %s5258 = int_to_ptr.vmem [resolvable:$true] %s5257
          %s5259 = sshll.u32 %s7, 4
          %s5260 = int_to_ptr.hbm [resolvable:$true] %s5259
          %5262 = dma.vmem_to_hbm [thread:$0]  %s5258, 64, %s5260, [#allocation6]
        $region72: #{mixed_precision_forward.1} parent=47 // pred_fallthru
          _
        // Predicated region
        $region73: #{mixed_precision_forward.1} parent=47 // pred_check
          %p5263 = pneg %p214
        $region74: #{mixed_precision_forward.1} parent=47 // pred_check_branch
          %5265 = sbr.rel (%p5263) target = $region76
        $region75: #{mixed_precision_forward.1} parent=47 // pred_region
          _
        $region76: #{mixed_precision_forward.1} parent=47 // pred_fallthru
          _
        // Predicated region
        $region77: #{mixed_precision_forward.1} parent=47 // pred_check
          %p5266 = pneg %p193
        $region78: #{mixed_precision_forward.1} parent=47 // pred_check_branch
          %5268 = sbr.rel (%p5266) target = $region80
        $region79: #{mixed_precision_forward.1} parent=47 // pred_region
          %5270 = dma.done [#allocation6], 64
        $region80: #{mixed_precision_forward.1} parent=47 // pred_fallthru
          _
        // Predicated region
        $region81: #{mixed_precision_forward.1} parent=47 // pred_check
          %p5271 = pneg %p214
        $region82: #{mixed_precision_forward.1} parent=47 // pred_check_branch
          %5273 = sbr.rel (%p5271) target = $region84
        $region83: #{mixed_precision_forward.1} parent=47 // pred_region
          _
        $region84: #{mixed_precision_forward.1} parent=47 // pred_fallthru
          _
      $region48: #{mixed_precision_forward.1} parent=5 // pred_fallthru
        _
      %p5274 = scmp.le.s32.totalorder 2, %s23
      // Predicated region
      $region85: #{mixed_precision_forward.1} parent=5 // pred_check
        %p5275 = pneg %p5274
      $region86: #{mixed_precision_forward.1} parent=5 // pred_check_branch
        %5277 = sbr.rel (%p5275) target = $region88
      $region87: #{mixed_precision_forward.1} parent=5 // pred_region
        %s5278 = ssub.s32 %s23, 2
      $region88: #{mixed_precision_forward.1} parent=5 // pred_fallthru
        _
    $region6: #{mixed_precision_forward.1} parent=1 // loop_footer
      %s27 = sadd.s32 1, %s23
    $region7: #{mixed_precision_forward.1} parent=1 // loop_footer_branch
      %22 = sbr.rel target = $region3
    $region8: #{mixed_precision_forward.1} parent=1 // loop_exit
      _
    %5279 = vsyncpa [#allocation5], 1
    %s5280 = scalar_lea.sflag [#allocation5], 1
    %5281 = vsyncpa %s5280, 1
    %5282 = vsyncpa [#allocation8], 1
    %s5283 = scalar_lea.sflag [#allocation8], 1
    %5284 = vsyncpa %s5283, 1
    %5285 = vsyncpa [#allocation11], 1
    %5286 = vsyncpa [#allocation6], 1
    %s5287 = scalar_lea.sflag [#allocation6], 1
    %5288 = vsyncpa %s5287, 1

</llo_original>
